<compile_context>
chip_gen: v6e
topology: v6e:2x2x1
jax: 0.10.0
libtpu: 0.0.40
codegen_flags: <defaults>
</compile_context>

<pallas_src>
import functools

import jax
import jax.numpy as jnp
from jax.experimental import pallas as pl
from jax.experimental.pallas import tpu as pltpu


def _char_cnn_highway_kernel(idx_ref, wcomb_ref, bconv_ref, wgp_ref, bgp_ref,
                             out_ref, *, K, V1):
    """
    idx_ref   : (tn, Lp)    int32 padded char indices (sentinel V for conv halo / row pad)
    wcomb_ref : (K*V1, E)   folded embed@conv table, row k*V1+v = embed[v] @ conv_w[:, :, k]
    bconv_ref : (1, E)      conv bias
    wgp_ref   : (E, 2E)     [gate | proj] linear weights (pre-transposed: in x out)
    bgp_ref   : (1, 2E)     [gate | proj] biases
    out_ref   : (tn, E)     word embeddings (pre-dropout)
    """
    tn, Lp = idx_ref.shape
    KV, E = wcomb_ref.shape
    L_out = Lp - K + 1

    idx = idx_ref[...]                                           # (tn, Lp) int32 (tiny)
    wcomb = wcomb_ref[...]
    jidx = jax.lax.broadcasted_iota(jnp.int32, (tn, KV), 1)      # hoisted, built once

    # Hoist the Lp column extracts (each reused up to K times below).
    cols = [idx[:, p:p + 1] for p in range(Lp)]                  # each (tn, 1)

    m = None
    for t in range(L_out):                                       # static, unrolled
        # One-hot "im2col" selector row: lane k*V1 + idx[n, t+k] set for each k.
        s = (cols[t] == jidx).astype(wcomb.dtype)
        for k in range(1, K):
            s = s + ((cols[t + k] + k * V1) == jidx).astype(wcomb.dtype)
        # Fused gather + conv at output position t: one matmul.
        z = jnp.dot(s, wcomb, preferred_element_type=jnp.float32)      # (tn, E) f32
        m = z if t == 0 else jnp.maximum(m, z)

    # bias + ReLU after the max-pool (equivalent; avoids the (tn, L_out, E) epilogue).
    h = jnp.maximum(m + bconv_ref[...], 0.0)                     # (tn, E) f32

    # Highway network: single fused [gate | proj] matmul, then split lanes.
    gp = jnp.dot(h.astype(wgp_ref.dtype), wgp_ref[...],
                 preferred_element_type=jnp.float32) + bgp_ref[...]    # (tn, 2E)
    gate = jax.nn.sigmoid(gp[:, :E])
    proj = jnp.maximum(gp[:, E:], 0.0)
    hw = h + gate * (proj - h)

    # TODO(synk): dropout (p=0.3) is identity at inference; training-mode dropout not implemented.
    out_ref[...] = hw.astype(out_ref.dtype)


def model_embeddings_forward(x_padded, params, *, kernel_size=5, padding=1,
                             tile_n=512, mxu_dtype=jnp.float32):
    """
    x_padded: (sent_len, batch, max_word_len) int32 char indices.
    Returns:  (sent_len, batch, word_embed_size) float32 word embeddings.
    """
    S, B, L = x_padded.shape
    embed = params["embed"].astype(jnp.float32)                  # (V, C)
    V, C = embed.shape
    E = params["conv_w"].shape[0]
    K = kernel_size
    Lp = L + 2 * padding
    V1 = V + 1                                                   # + sentinel (zero) row
    KV = K * V1

    # ---- tiny one-time parameter prep (all O(V*K*E)) ----
    embed_ext = jnp.concatenate([embed, jnp.zeros((1, C), jnp.float32)], axis=0)   # (V1, C)
    wconv = jnp.transpose(params["conv_w"], (2, 1, 0)).astype(jnp.float32)         # (K, C, E)
    wcomb = jnp.einsum("vc,kce->kve", embed_ext, wconv,
                       precision=jax.lax.Precision.HIGHEST).reshape(KV, E)
    bconv = params["conv_b"].reshape(1, E).astype(jnp.float32)
    wgp = jnp.concatenate([params["gate_w"].T, params["proj_w"].T], axis=1)        # (E, 2E)
    bgp = jnp.concatenate([params["gate_b"], params["proj_b"]]).reshape(1, 2 * E)
    bgp = bgp.astype(jnp.float32)
    wcomb = wcomb.astype(mxu_dtype)          # bf16 here on v6e/v7x halves weight VMEM bytes
    wgp = wgp.astype(mxu_dtype)

    # ---- index prep: only int32 indices ever hit HBM for this kernel ----
    N = S * B
    idx = x_padded.reshape(N, L).astype(jnp.int32)
    idx = jnp.pad(idx, ((0, 0), (padding, padding)), constant_values=V)  # halo -> zero row

    # Tile over words. tile_n=512 keeps per-block VMEM ~1 MiB: comfortably inside
    # scoped VMEM on v5e/v6e (128 MiB physical) and v7x (64 MiB physical).
    tn = tile_n if N >= tile_n else max(8, ((N + 7) // 8) * 8)
    N_pad = ((N + tn - 1) // tn) * tn
    if N_pad != N:
        idx = jnp.pad(idx, ((0, N_pad - N), (0, 0)), constant_values=V)

    kernel = functools.partial(_char_cnn_highway_kernel, K=K, V1=V1)

    out = pl.pallas_call(
        kernel,
        out_shape=jax.ShapeDtypeStruct((N_pad, E), jnp.float32),
        grid=(N_pad // tn,),
        in_specs=[
            pl.BlockSpec((tn, Lp), lambda i: (i, 0)),            # per-word char indices
            pl.BlockSpec((KV, E), lambda i: (0, 0)),             # weights: resident across grid
            pl.BlockSpec((1, E), lambda i: (0, 0)),
            pl.BlockSpec((E, 2 * E), lambda i: (0, 0)),
            pl.BlockSpec((1, 2 * E), lambda i: (0, 0)),
        ],
        out_specs=pl.BlockSpec((tn, E), lambda i: (i, 0)),
        compiler_params=pltpu.CompilerParams(
            dimension_semantics=("parallel",),
        ),
    )(idx, wcomb, bconv, wgp, bgp)

    return out[:N].reshape(S, B, E)


def reference_forward(x_padded, params, *, kernel_size=5, padding=1):
    """Pure-JAX reference replicating the PyTorch forward (eval mode)."""
    S, B, L = x_padded.shape
    C = params["embed"].shape[1]
    E = params["conv_w"].shape[0]
    hp = jax.lax.Precision.HIGHEST
    x_emb = jnp.take(params["embed"], x_padded, axis=0).reshape(S * B, L, C)
    x_pad = jnp.pad(x_emb, ((0, 0), (padding, padding), (0, 0)))
    L_out = L + 2 * padding - kernel_size + 1
    wconv = jnp.transpose(params["conv_w"], (2, 1, 0))           # (K, C, E)
    conv = jnp.zeros((S * B, L_out, E), jnp.float32)
    for k in range(kernel_size):
        conv = conv + jnp.einsum("nlc,ce->nle", x_pad[:, k:k + L_out, :], wconv[k],
                                 precision=hp)
    conv = jnp.maximum(conv + params["conv_b"][None, None, :], 0.0)
    h = jnp.max(conv, axis=1)
    gate = jax.nn.sigmoid(jnp.dot(h, params["gate_w"].T, precision=hp) + params["gate_b"])
    proj = jnp.maximum(jnp.dot(h, params["proj_w"].T, precision=hp) + params["proj_b"], 0.0)
    highway = gate * proj + (1.0 - gate) * h
    return highway.reshape(S, B, E)


if __name__ == "__main__":
    # Small, deterministic configuration.
    sent_len, batch_size, max_word_len = 8, 2, 16
    char_vocab_size = 30
    char_embed_size = 16
    word_embed_size = 32
    kernel_size, padding = 5, 1

    key = jax.random.PRNGKey(0)
    k_emb, k_cw, k_cb, k_gw, k_gb, k_pw, k_pb, k_x = jax.random.split(key, 8)

    params = {
        "embed":  0.1 * jax.random.normal(k_emb, (char_vocab_size, char_embed_size), jnp.float32),
        "conv_w": 0.1 * jax.random.normal(k_cw, (word_embed_size, char_embed_size, kernel_size), jnp.float32),
        "conv_b": 0.1 * jax.random.normal(k_cb, (word_embed_size,), jnp.float32),
        "gate_w": 0.1 * jax.random.normal(k_gw, (word_embed_size, word_embed_size), jnp.float32),
        "gate_b": 0.1 * jax.random.normal(k_gb, (word_embed_size,), jnp.float32),
        "proj_w": 0.1 * jax.random.normal(k_pw, (word_embed_size, word_embed_size), jnp.float32),
        "proj_b": 0.1 * jax.random.normal(k_pb, (word_embed_size,), jnp.float32),
    }

    x_padded = jax.random.randint(
        k_x, (sent_len, batch_size, max_word_len), 0, char_vocab_size, dtype=jnp.int32)

    out = model_embeddings_forward(x_padded, params,
                                   kernel_size=kernel_size, padding=padding)
    out = jax.block_until_ready(out)

    ref = reference_forward(x_padded, params,
                            kernel_size=kernel_size, padding=padding)

    assert out.shape == (sent_len, batch_size, word_embed_size), out.shape
    max_err = float(jnp.max(jnp.abs(out - ref)))
    assert jnp.allclose(out, ref, atol=1e-3, rtol=1e-3), max_err

    print("KERNEL_OK")
</pallas_src>

<mosaic_0001>
module attributes {stable_mosaic.version = 11 : i64} {
  func.func @_char_cnn_highway_kernel(%arg0: i32, %arg1: memref<16x18xi32, #tpu.memory_space<vmem>>, %arg2: memref<155x32xf32, #tpu.memory_space<vmem>>, %arg3: memref<1x32xf32, #tpu.memory_space<vmem>>, %arg4: memref<32x64xf32, #tpu.memory_space<vmem>>, %arg5: memref<1x64xf32, #tpu.memory_space<vmem>>, %arg6: memref<16x32xf32, #tpu.memory_space<vmem>>) attributes {dimension_semantics = [#tpu.dimension_semantics<parallel>], iteration_bounds = array<i64: 1>, scalar_prefetch = 0 : i64, scratch_operands = 0 : i64, tpu.core_type = #tpu.core_type<tc>, window_params = [{transform_indices = @transform_0, window_bounds = array<i64: 16, 18>}, {pipeline_mode = #tpu.pipeline_mode<synchronous>, transform_indices = @transform_1, window_bounds = array<i64: 155, 32>}, {pipeline_mode = #tpu.pipeline_mode<synchronous>, transform_indices = @transform_2, window_bounds = array<i64: 1, 32>}, {pipeline_mode = #tpu.pipeline_mode<synchronous>, transform_indices = @transform_3, window_bounds = array<i64: 32, 64>}, {pipeline_mode = #tpu.pipeline_mode<synchronous>, transform_indices = @transform_4, window_bounds = array<i64: 1, 64>}, {transform_indices = @transform_5, window_bounds = array<i64: 16, 32>}]} {
    %c0 = arith.constant 0 : index
    %c0_0 = arith.constant 0 : index
    %0 = vector.load %arg1[%c0, %c0_0] : memref<16x18xi32, #tpu.memory_space<vmem>>, vector<16x18xi32>
    %c0_1 = arith.constant 0 : index
    %c0_2 = arith.constant 0 : index
    %1 = vector.load %arg2[%c0_1, %c0_2] : memref<155x32xf32, #tpu.memory_space<vmem>>, vector<155x32xf32>
    %2 = tpu.iota {dimensions = array<i32: 1>} : vector<16x155xi32>
    %3 = vector.extract_strided_slice %0 {offsets = [0, 0], sizes = [16, 1], strides = [1, 1]} : vector<16x18xi32> to vector<16x1xi32>
    %4 = vector.extract_strided_slice %0 {offsets = [0, 1], sizes = [16, 1], strides = [1, 1]} : vector<16x18xi32> to vector<16x1xi32>
    %5 = vector.extract_strided_slice %0 {offsets = [0, 2], sizes = [16, 1], strides = [1, 1]} : vector<16x18xi32> to vector<16x1xi32>
    %6 = vector.extract_strided_slice %0 {offsets = [0, 3], sizes = [16, 1], strides = [1, 1]} : vector<16x18xi32> to vector<16x1xi32>
    %7 = vector.extract_strided_slice %0 {offsets = [0, 4], sizes = [16, 1], strides = [1, 1]} : vector<16x18xi32> to vector<16x1xi32>
    %8 = vector.extract_strided_slice %0 {offsets = [0, 5], sizes = [16, 1], strides = [1, 1]} : vector<16x18xi32> to vector<16x1xi32>
    %9 = vector.extract_strided_slice %0 {offsets = [0, 6], sizes = [16, 1], strides = [1, 1]} : vector<16x18xi32> to vector<16x1xi32>
    %10 = vector.extract_strided_slice %0 {offsets = [0, 7], sizes = [16, 1], strides = [1, 1]} : vector<16x18xi32> to vector<16x1xi32>
    %11 = vector.extract_strided_slice %0 {offsets = [0, 8], sizes = [16, 1], strides = [1, 1]} : vector<16x18xi32> to vector<16x1xi32>
    %12 = vector.extract_strided_slice %0 {offsets = [0, 9], sizes = [16, 1], strides = [1, 1]} : vector<16x18xi32> to vector<16x1xi32>
    %13 = vector.extract_strided_slice %0 {offsets = [0, 10], sizes = [16, 1], strides = [1, 1]} : vector<16x18xi32> to vector<16x1xi32>
    %14 = vector.extract_strided_slice %0 {offsets = [0, 11], sizes = [16, 1], strides = [1, 1]} : vector<16x18xi32> to vector<16x1xi32>
    %15 = vector.extract_strided_slice %0 {offsets = [0, 12], sizes = [16, 1], strides = [1, 1]} : vector<16x18xi32> to vector<16x1xi32>
    %16 = vector.extract_strided_slice %0 {offsets = [0, 13], sizes = [16, 1], strides = [1, 1]} : vector<16x18xi32> to vector<16x1xi32>
    %17 = vector.extract_strided_slice %0 {offsets = [0, 14], sizes = [16, 1], strides = [1, 1]} : vector<16x18xi32> to vector<16x1xi32>
    %18 = vector.extract_strided_slice %0 {offsets = [0, 15], sizes = [16, 1], strides = [1, 1]} : vector<16x18xi32> to vector<16x1xi32>
    %19 = vector.extract_strided_slice %0 {offsets = [0, 16], sizes = [16, 1], strides = [1, 1]} : vector<16x18xi32> to vector<16x1xi32>
    %20 = vector.extract_strided_slice %0 {offsets = [0, 17], sizes = [16, 1], strides = [1, 1]} : vector<16x18xi32> to vector<16x1xi32>
    %21 = vector.broadcast %3 : vector<16x1xi32> to vector<16x155xi32>
    %22 = arith.cmpi eq, %21, %2 : vector<16x155xi32>
    %23 = arith.extui %22 : vector<16x155xi1> to vector<16x155xi32>
    %24 = arith.sitofp %23 : vector<16x155xi32> to vector<16x155xf32>
    %c31_i32 = arith.constant 31 : i32
    %25 = vector.broadcast %c31_i32 : i32 to vector<16x1xi32>
    %26 = arith.addi %4, %25 : vector<16x1xi32>
    %27 = vector.broadcast %26 : vector<16x1xi32> to vector<16x155xi32>
    %28 = arith.cmpi eq, %27, %2 : vector<16x155xi32>
    %29 = arith.extui %28 : vector<16x155xi1> to vector<16x155xi32>
    %30 = arith.sitofp %29 : vector<16x155xi32> to vector<16x155xf32>
    %31 = arith.addf %24, %30 : vector<16x155xf32>
    %c62_i32 = arith.constant 62 : i32
    %32 = vector.broadcast %c62_i32 : i32 to vector<16x1xi32>
    %33 = arith.addi %5, %32 : vector<16x1xi32>
    %34 = vector.broadcast %33 : vector<16x1xi32> to vector<16x155xi32>
    %35 = arith.cmpi eq, %34, %2 : vector<16x155xi32>
    %36 = arith.extui %35 : vector<16x155xi1> to vector<16x155xi32>
    %37 = arith.sitofp %36 : vector<16x155xi32> to vector<16x155xf32>
    %38 = arith.addf %31, %37 : vector<16x155xf32>
    %c93_i32 = arith.constant 93 : i32
    %39 = vector.broadcast %c93_i32 : i32 to vector<16x1xi32>
    %40 = arith.addi %6, %39 : vector<16x1xi32>
    %41 = vector.broadcast %40 : vector<16x1xi32> to vector<16x155xi32>
    %42 = arith.cmpi eq, %41, %2 : vector<16x155xi32>
    %43 = arith.extui %42 : vector<16x155xi1> to vector<16x155xi32>
    %44 = arith.sitofp %43 : vector<16x155xi32> to vector<16x155xf32>
    %45 = arith.addf %38, %44 : vector<16x155xf32>
    %c124_i32 = arith.constant 124 : i32
    %46 = vector.broadcast %c124_i32 : i32 to vector<16x1xi32>
    %47 = arith.addi %7, %46 : vector<16x1xi32>
    %48 = vector.broadcast %47 : vector<16x1xi32> to vector<16x155xi32>
    %49 = arith.cmpi eq, %48, %2 : vector<16x155xi32>
    %50 = arith.extui %49 : vector<16x155xi1> to vector<16x155xi32>
    %51 = arith.sitofp %50 : vector<16x155xi32> to vector<16x155xf32>
    %52 = arith.addf %45, %51 : vector<16x155xf32>
    %cst = arith.constant dense<0.000000e+00> : vector<16x32xf32>
    %53 = tpu.matmul %52, %1, %cst {dimension_numbers = #tpu.dot_dimension_numbers<[1], [0], [0], [1], [0, 0, 1, 1], [], []>} : vector<16x155xf32>, vector<155x32xf32>, vector<16x32xf32> -> vector<16x32xf32>
    %54 = vector.broadcast %4 : vector<16x1xi32> to vector<16x155xi32>
    %55 = arith.cmpi eq, %54, %2 : vector<16x155xi32>
    %56 = arith.extui %55 : vector<16x155xi1> to vector<16x155xi32>
    %57 = arith.sitofp %56 : vector<16x155xi32> to vector<16x155xf32>
    %c31_i32_3 = arith.constant 31 : i32
    %58 = vector.broadcast %c31_i32_3 : i32 to vector<16x1xi32>
    %59 = arith.addi %5, %58 : vector<16x1xi32>
    %60 = vector.broadcast %59 : vector<16x1xi32> to vector<16x155xi32>
    %61 = arith.cmpi eq, %60, %2 : vector<16x155xi32>
    %62 = arith.extui %61 : vector<16x155xi1> to vector<16x155xi32>
    %63 = arith.sitofp %62 : vector<16x155xi32> to vector<16x155xf32>
    %64 = arith.addf %57, %63 : vector<16x155xf32>
    %c62_i32_4 = arith.constant 62 : i32
    %65 = vector.broadcast %c62_i32_4 : i32 to vector<16x1xi32>
    %66 = arith.addi %6, %65 : vector<16x1xi32>
    %67 = vector.broadcast %66 : vector<16x1xi32> to vector<16x155xi32>
    %68 = arith.cmpi eq, %67, %2 : vector<16x155xi32>
    %69 = arith.extui %68 : vector<16x155xi1> to vector<16x155xi32>
    %70 = arith.sitofp %69 : vector<16x155xi32> to vector<16x155xf32>
    %71 = arith.addf %64, %70 : vector<16x155xf32>
    %c93_i32_5 = arith.constant 93 : i32
    %72 = vector.broadcast %c93_i32_5 : i32 to vector<16x1xi32>
    %73 = arith.addi %7, %72 : vector<16x1xi32>
    %74 = vector.broadcast %73 : vector<16x1xi32> to vector<16x155xi32>
    %75 = arith.cmpi eq, %74, %2 : vector<16x155xi32>
    %76 = arith.extui %75 : vector<16x155xi1> to vector<16x155xi32>
    %77 = arith.sitofp %76 : vector<16x155xi32> to vector<16x155xf32>
    %78 = arith.addf %71, %77 : vector<16x155xf32>
    %c124_i32_6 = arith.constant 124 : i32
    %79 = vector.broadcast %c124_i32_6 : i32 to vector<16x1xi32>
    %80 = arith.addi %8, %79 : vector<16x1xi32>
    %81 = vector.broadcast %80 : vector<16x1xi32> to vector<16x155xi32>
    %82 = arith.cmpi eq, %81, %2 : vector<16x155xi32>
    %83 = arith.extui %82 : vector<16x155xi1> to vector<16x155xi32>
    %84 = arith.sitofp %83 : vector<16x155xi32> to vector<16x155xf32>
    %85 = arith.addf %78, %84 : vector<16x155xf32>
    %cst_7 = arith.constant dense<0.000000e+00> : vector<16x32xf32>
    %86 = tpu.matmul %85, %1, %cst_7 {dimension_numbers = #tpu.dot_dimension_numbers<[1], [0], [0], [1], [0, 0, 1, 1], [], []>} : vector<16x155xf32>, vector<155x32xf32>, vector<16x32xf32> -> vector<16x32xf32>
    %87 = arith.maximumf %53, %86 : vector<16x32xf32>
    %88 = vector.broadcast %5 : vector<16x1xi32> to vector<16x155xi32>
    %89 = arith.cmpi eq, %88, %2 : vector<16x155xi32>
    %90 = arith.extui %89 : vector<16x155xi1> to vector<16x155xi32>
    %91 = arith.sitofp %90 : vector<16x155xi32> to vector<16x155xf32>
    %c31_i32_8 = arith.constant 31 : i32
    %92 = vector.broadcast %c31_i32_8 : i32 to vector<16x1xi32>
    %93 = arith.addi %6, %92 : vector<16x1xi32>
    %94 = vector.broadcast %93 : vector<16x1xi32> to vector<16x155xi32>
    %95 = arith.cmpi eq, %94, %2 : vector<16x155xi32>
    %96 = arith.extui %95 : vector<16x155xi1> to vector<16x155xi32>
    %97 = arith.sitofp %96 : vector<16x155xi32> to vector<16x155xf32>
    %98 = arith.addf %91, %97 : vector<16x155xf32>
    %c62_i32_9 = arith.constant 62 : i32
    %99 = vector.broadcast %c62_i32_9 : i32 to vector<16x1xi32>
    %100 = arith.addi %7, %99 : vector<16x1xi32>
    %101 = vector.broadcast %100 : vector<16x1xi32> to vector<16x155xi32>
    %102 = arith.cmpi eq, %101, %2 : vector<16x155xi32>
    %103 = arith.extui %102 : vector<16x155xi1> to vector<16x155xi32>
    %104 = arith.sitofp %103 : vector<16x155xi32> to vector<16x155xf32>
    %105 = arith.addf %98, %104 : vector<16x155xf32>
    %c93_i32_10 = arith.constant 93 : i32
    %106 = vector.broadcast %c93_i32_10 : i32 to vector<16x1xi32>
    %107 = arith.addi %8, %106 : vector<16x1xi32>
    %108 = vector.broadcast %107 : vector<16x1xi32> to vector<16x155xi32>
    %109 = arith.cmpi eq, %108, %2 : vector<16x155xi32>
    %110 = arith.extui %109 : vector<16x155xi1> to vector<16x155xi32>
    %111 = arith.sitofp %110 : vector<16x155xi32> to vector<16x155xf32>
    %112 = arith.addf %105, %111 : vector<16x155xf32>
    %c124_i32_11 = arith.constant 124 : i32
    %113 = vector.broadcast %c124_i32_11 : i32 to vector<16x1xi32>
    %114 = arith.addi %9, %113 : vector<16x1xi32>
    %115 = vector.broadcast %114 : vector<16x1xi32> to vector<16x155xi32>
    %116 = arith.cmpi eq, %115, %2 : vector<16x155xi32>
    %117 = arith.extui %116 : vector<16x155xi1> to vector<16x155xi32>
    %118 = arith.sitofp %117 : vector<16x155xi32> to vector<16x155xf32>
    %119 = arith.addf %112, %118 : vector<16x155xf32>
    %cst_12 = arith.constant dense<0.000000e+00> : vector<16x32xf32>
    %120 = tpu.matmul %119, %1, %cst_12 {dimension_numbers = #tpu.dot_dimension_numbers<[1], [0], [0], [1], [0, 0, 1, 1], [], []>} : vector<16x155xf32>, vector<155x32xf32>, vector<16x32xf32> -> vector<16x32xf32>
    %121 = arith.maximumf %87, %120 : vector<16x32xf32>
    %122 = vector.broadcast %6 : vector<16x1xi32> to vector<16x155xi32>
    %123 = arith.cmpi eq, %122, %2 : vector<16x155xi32>
    %124 = arith.extui %123 : vector<16x155xi1> to vector<16x155xi32>
    %125 = arith.sitofp %124 : vector<16x155xi32> to vector<16x155xf32>
    %c31_i32_13 = arith.constant 31 : i32
    %126 = vector.broadcast %c31_i32_13 : i32 to vector<16x1xi32>
    %127 = arith.addi %7, %126 : vector<16x1xi32>
    %128 = vector.broadcast %127 : vector<16x1xi32> to vector<16x155xi32>
    %129 = arith.cmpi eq, %128, %2 : vector<16x155xi32>
    %130 = arith.extui %129 : vector<16x155xi1> to vector<16x155xi32>
    %131 = arith.sitofp %130 : vector<16x155xi32> to vector<16x155xf32>
    %132 = arith.addf %125, %131 : vector<16x155xf32>
    %c62_i32_14 = arith.constant 62 : i32
    %133 = vector.broadcast %c62_i32_14 : i32 to vector<16x1xi32>
    %134 = arith.addi %8, %133 : vector<16x1xi32>
    %135 = vector.broadcast %134 : vector<16x1xi32> to vector<16x155xi32>
    %136 = arith.cmpi eq, %135, %2 : vector<16x155xi32>
    %137 = arith.extui %136 : vector<16x155xi1> to vector<16x155xi32>
    %138 = arith.sitofp %137 : vector<16x155xi32> to vector<16x155xf32>
    %139 = arith.addf %132, %138 : vector<16x155xf32>
    %c93_i32_15 = arith.constant 93 : i32
    %140 = vector.broadcast %c93_i32_15 : i32 to vector<16x1xi32>
    %141 = arith.addi %9, %140 : vector<16x1xi32>
    %142 = vector.broadcast %141 : vector<16x1xi32> to vector<16x155xi32>
    %143 = arith.cmpi eq, %142, %2 : vector<16x155xi32>
    %144 = arith.extui %143 : vector<16x155xi1> to vector<16x155xi32>
    %145 = arith.sitofp %144 : vector<16x155xi32> to vector<16x155xf32>
    %146 = arith.addf %139, %145 : vector<16x155xf32>
    %c124_i32_16 = arith.constant 124 : i32
    %147 = vector.broadcast %c124_i32_16 : i32 to vector<16x1xi32>
    %148 = arith.addi %10, %147 : vector<16x1xi32>
    %149 = vector.broadcast %148 : vector<16x1xi32> to vector<16x155xi32>
    %150 = arith.cmpi eq, %149, %2 : vector<16x155xi32>
    %151 = arith.extui %150 : vector<16x155xi1> to vector<16x155xi32>
    %152 = arith.sitofp %151 : vector<16x155xi32> to vector<16x155xf32>
    %153 = arith.addf %146, %152 : vector<16x155xf32>
    %cst_17 = arith.constant dense<0.000000e+00> : vector<16x32xf32>
    %154 = tpu.matmul %153, %1, %cst_17 {dimension_numbers = #tpu.dot_dimension_numbers<[1], [0], [0], [1], [0, 0, 1, 1], [], []>} : vector<16x155xf32>, vector<155x32xf32>, vector<16x32xf32> -> vector<16x32xf32>
    %155 = arith.maximumf %121, %154 : vector<16x32xf32>
    %156 = vector.broadcast %7 : vector<16x1xi32> to vector<16x155xi32>
    %157 = arith.cmpi eq, %156, %2 : vector<16x155xi32>
    %158 = arith.extui %157 : vector<16x155xi1> to vector<16x155xi32>
    %159 = arith.sitofp %158 : vector<16x155xi32> to vector<16x155xf32>
    %c31_i32_18 = arith.constant 31 : i32
    %160 = vector.broadcast %c31_i32_18 : i32 to vector<16x1xi32>
    %161 = arith.addi %8, %160 : vector<16x1xi32>
    %162 = vector.broadcast %161 : vector<16x1xi32> to vector<16x155xi32>
    %163 = arith.cmpi eq, %162, %2 : vector<16x155xi32>
    %164 = arith.extui %163 : vector<16x155xi1> to vector<16x155xi32>
    %165 = arith.sitofp %164 : vector<16x155xi32> to vector<16x155xf32>
    %166 = arith.addf %159, %165 : vector<16x155xf32>
    %c62_i32_19 = arith.constant 62 : i32
    %167 = vector.broadcast %c62_i32_19 : i32 to vector<16x1xi32>
    %168 = arith.addi %9, %167 : vector<16x1xi32>
    %169 = vector.broadcast %168 : vector<16x1xi32> to vector<16x155xi32>
    %170 = arith.cmpi eq, %169, %2 : vector<16x155xi32>
    %171 = arith.extui %170 : vector<16x155xi1> to vector<16x155xi32>
    %172 = arith.sitofp %171 : vector<16x155xi32> to vector<16x155xf32>
    %173 = arith.addf %166, %172 : vector<16x155xf32>
    %c93_i32_20 = arith.constant 93 : i32
    %174 = vector.broadcast %c93_i32_20 : i32 to vector<16x1xi32>
    %175 = arith.addi %10, %174 : vector<16x1xi32>
    %176 = vector.broadcast %175 : vector<16x1xi32> to vector<16x155xi32>
    %177 = arith.cmpi eq, %176, %2 : vector<16x155xi32>
    %178 = arith.extui %177 : vector<16x155xi1> to vector<16x155xi32>
    %179 = arith.sitofp %178 : vector<16x155xi32> to vector<16x155xf32>
    %180 = arith.addf %173, %179 : vector<16x155xf32>
    %c124_i32_21 = arith.constant 124 : i32
    %181 = vector.broadcast %c124_i32_21 : i32 to vector<16x1xi32>
    %182 = arith.addi %11, %181 : vector<16x1xi32>
    %183 = vector.broadcast %182 : vector<16x1xi32> to vector<16x155xi32>
    %184 = arith.cmpi eq, %183, %2 : vector<16x155xi32>
    %185 = arith.extui %184 : vector<16x155xi1> to vector<16x155xi32>
    %186 = arith.sitofp %185 : vector<16x155xi32> to vector<16x155xf32>
    %187 = arith.addf %180, %186 : vector<16x155xf32>
    %cst_22 = arith.constant dense<0.000000e+00> : vector<16x32xf32>
    %188 = tpu.matmul %187, %1, %cst_22 {dimension_numbers = #tpu.dot_dimension_numbers<[1], [0], [0], [1], [0, 0, 1, 1], [], []>} : vector<16x155xf32>, vector<155x32xf32>, vector<16x32xf32> -> vector<16x32xf32>
    %189 = arith.maximumf %155, %188 : vector<16x32xf32>
    %190 = vector.broadcast %8 : vector<16x1xi32> to vector<16x155xi32>
    %191 = arith.cmpi eq, %190, %2 : vector<16x155xi32>
    %192 = arith.extui %191 : vector<16x155xi1> to vector<16x155xi32>
    %193 = arith.sitofp %192 : vector<16x155xi32> to vector<16x155xf32>
    %c31_i32_23 = arith.constant 31 : i32
    %194 = vector.broadcast %c31_i32_23 : i32 to vector<16x1xi32>
    %195 = arith.addi %9, %194 : vector<16x1xi32>
    %196 = vector.broadcast %195 : vector<16x1xi32> to vector<16x155xi32>
    %197 = arith.cmpi eq, %196, %2 : vector<16x155xi32>
    %198 = arith.extui %197 : vector<16x155xi1> to vector<16x155xi32>
    %199 = arith.sitofp %198 : vector<16x155xi32> to vector<16x155xf32>
    %200 = arith.addf %193, %199 : vector<16x155xf32>
    %c62_i32_24 = arith.constant 62 : i32
    %201 = vector.broadcast %c62_i32_24 : i32 to vector<16x1xi32>
    %202 = arith.addi %10, %201 : vector<16x1xi32>
    %203 = vector.broadcast %202 : vector<16x1xi32> to vector<16x155xi32>
    %204 = arith.cmpi eq, %203, %2 : vector<16x155xi32>
    %205 = arith.extui %204 : vector<16x155xi1> to vector<16x155xi32>
    %206 = arith.sitofp %205 : vector<16x155xi32> to vector<16x155xf32>
    %207 = arith.addf %200, %206 : vector<16x155xf32>
    %c93_i32_25 = arith.constant 93 : i32
    %208 = vector.broadcast %c93_i32_25 : i32 to vector<16x1xi32>
    %209 = arith.addi %11, %208 : vector<16x1xi32>
    %210 = vector.broadcast %209 : vector<16x1xi32> to vector<16x155xi32>
    %211 = arith.cmpi eq, %210, %2 : vector<16x155xi32>
    %212 = arith.extui %211 : vector<16x155xi1> to vector<16x155xi32>
    %213 = arith.sitofp %212 : vector<16x155xi32> to vector<16x155xf32>
    %214 = arith.addf %207, %213 : vector<16x155xf32>
    %c124_i32_26 = arith.constant 124 : i32
    %215 = vector.broadcast %c124_i32_26 : i32 to vector<16x1xi32>
    %216 = arith.addi %12, %215 : vector<16x1xi32>
    %217 = vector.broadcast %216 : vector<16x1xi32> to vector<16x155xi32>
    %218 = arith.cmpi eq, %217, %2 : vector<16x155xi32>
    %219 = arith.extui %218 : vector<16x155xi1> to vector<16x155xi32>
    %220 = arith.sitofp %219 : vector<16x155xi32> to vector<16x155xf32>
    %221 = arith.addf %214, %220 : vector<16x155xf32>
    %cst_27 = arith.constant dense<0.000000e+00> : vector<16x32xf32>
    %222 = tpu.matmul %221, %1, %cst_27 {dimension_numbers = #tpu.dot_dimension_numbers<[1], [0], [0], [1], [0, 0, 1, 1], [], []>} : vector<16x155xf32>, vector<155x32xf32>, vector<16x32xf32> -> vector<16x32xf32>
    %223 = arith.maximumf %189, %222 : vector<16x32xf32>
    %224 = vector.broadcast %9 : vector<16x1xi32> to vector<16x155xi32>
    %225 = arith.cmpi eq, %224, %2 : vector<16x155xi32>
    %226 = arith.extui %225 : vector<16x155xi1> to vector<16x155xi32>
    %227 = arith.sitofp %226 : vector<16x155xi32> to vector<16x155xf32>
    %c31_i32_28 = arith.constant 31 : i32
    %228 = vector.broadcast %c31_i32_28 : i32 to vector<16x1xi32>
    %229 = arith.addi %10, %228 : vector<16x1xi32>
    %230 = vector.broadcast %229 : vector<16x1xi32> to vector<16x155xi32>
    %231 = arith.cmpi eq, %230, %2 : vector<16x155xi32>
    %232 = arith.extui %231 : vector<16x155xi1> to vector<16x155xi32>
    %233 = arith.sitofp %232 : vector<16x155xi32> to vector<16x155xf32>
    %234 = arith.addf %227, %233 : vector<16x155xf32>
    %c62_i32_29 = arith.constant 62 : i32
    %235 = vector.broadcast %c62_i32_29 : i32 to vector<16x1xi32>
    %236 = arith.addi %11, %235 : vector<16x1xi32>
    %237 = vector.broadcast %236 : vector<16x1xi32> to vector<16x155xi32>
    %238 = arith.cmpi eq, %237, %2 : vector<16x155xi32>
    %239 = arith.extui %238 : vector<16x155xi1> to vector<16x155xi32>
    %240 = arith.sitofp %239 : vector<16x155xi32> to vector<16x155xf32>
    %241 = arith.addf %234, %240 : vector<16x155xf32>
    %c93_i32_30 = arith.constant 93 : i32
    %242 = vector.broadcast %c93_i32_30 : i32 to vector<16x1xi32>
    %243 = arith.addi %12, %242 : vector<16x1xi32>
    %244 = vector.broadcast %243 : vector<16x1xi32> to vector<16x155xi32>
    %245 = arith.cmpi eq, %244, %2 : vector<16x155xi32>
    %246 = arith.extui %245 : vector<16x155xi1> to vector<16x155xi32>
    %247 = arith.sitofp %246 : vector<16x155xi32> to vector<16x155xf32>
    %248 = arith.addf %241, %247 : vector<16x155xf32>
    %c124_i32_31 = arith.constant 124 : i32
    %249 = vector.broadcast %c124_i32_31 : i32 to vector<16x1xi32>
    %250 = arith.addi %13, %249 : vector<16x1xi32>
    %251 = vector.broadcast %250 : vector<16x1xi32> to vector<16x155xi32>
    %252 = arith.cmpi eq, %251, %2 : vector<16x155xi32>
    %253 = arith.extui %252 : vector<16x155xi1> to vector<16x155xi32>
    %254 = arith.sitofp %253 : vector<16x155xi32> to vector<16x155xf32>
    %255 = arith.addf %248, %254 : vector<16x155xf32>
    %cst_32 = arith.constant dense<0.000000e+00> : vector<16x32xf32>
    %256 = tpu.matmul %255, %1, %cst_32 {dimension_numbers = #tpu.dot_dimension_numbers<[1], [0], [0], [1], [0, 0, 1, 1], [], []>} : vector<16x155xf32>, vector<155x32xf32>, vector<16x32xf32> -> vector<16x32xf32>
    %257 = arith.maximumf %223, %256 : vector<16x32xf32>
    %258 = vector.broadcast %10 : vector<16x1xi32> to vector<16x155xi32>
    %259 = arith.cmpi eq, %258, %2 : vector<16x155xi32>
    %260 = arith.extui %259 : vector<16x155xi1> to vector<16x155xi32>
    %261 = arith.sitofp %260 : vector<16x155xi32> to vector<16x155xf32>
    %c31_i32_33 = arith.constant 31 : i32
    %262 = vector.broadcast %c31_i32_33 : i32 to vector<16x1xi32>
    %263 = arith.addi %11, %262 : vector<16x1xi32>
    %264 = vector.broadcast %263 : vector<16x1xi32> to vector<16x155xi32>
    %265 = arith.cmpi eq, %264, %2 : vector<16x155xi32>
    %266 = arith.extui %265 : vector<16x155xi1> to vector<16x155xi32>
    %267 = arith.sitofp %266 : vector<16x155xi32> to vector<16x155xf32>
    %268 = arith.addf %261, %267 : vector<16x155xf32>
    %c62_i32_34 = arith.constant 62 : i32
    %269 = vector.broadcast %c62_i32_34 : i32 to vector<16x1xi32>
    %270 = arith.addi %12, %269 : vector<16x1xi32>
    %271 = vector.broadcast %270 : vector<16x1xi32> to vector<16x155xi32>
    %272 = arith.cmpi eq, %271, %2 : vector<16x155xi32>
    %273 = arith.extui %272 : vector<16x155xi1> to vector<16x155xi32>
    %274 = arith.sitofp %273 : vector<16x155xi32> to vector<16x155xf32>
    %275 = arith.addf %268, %274 : vector<16x155xf32>
    %c93_i32_35 = arith.constant 93 : i32
    %276 = vector.broadcast %c93_i32_35 : i32 to vector<16x1xi32>
    %277 = arith.addi %13, %276 : vector<16x1xi32>
    %278 = vector.broadcast %277 : vector<16x1xi32> to vector<16x155xi32>
    %279 = arith.cmpi eq, %278, %2 : vector<16x155xi32>
    %280 = arith.extui %279 : vector<16x155xi1> to vector<16x155xi32>
    %281 = arith.sitofp %280 : vector<16x155xi32> to vector<16x155xf32>
    %282 = arith.addf %275, %281 : vector<16x155xf32>
    %c124_i32_36 = arith.constant 124 : i32
    %283 = vector.broadcast %c124_i32_36 : i32 to vector<16x1xi32>
    %284 = arith.addi %14, %283 : vector<16x1xi32>
    %285 = vector.broadcast %284 : vector<16x1xi32> to vector<16x155xi32>
    %286 = arith.cmpi eq, %285, %2 : vector<16x155xi32>
    %287 = arith.extui %286 : vector<16x155xi1> to vector<16x155xi32>
    %288 = arith.sitofp %287 : vector<16x155xi32> to vector<16x155xf32>
    %289 = arith.addf %282, %288 : vector<16x155xf32>
    %cst_37 = arith.constant dense<0.000000e+00> : vector<16x32xf32>
    %290 = tpu.matmul %289, %1, %cst_37 {dimension_numbers = #tpu.dot_dimension_numbers<[1], [0], [0], [1], [0, 0, 1, 1], [], []>} : vector<16x155xf32>, vector<155x32xf32>, vector<16x32xf32> -> vector<16x32xf32>
    %291 = arith.maximumf %257, %290 : vector<16x32xf32>
    %292 = vector.broadcast %11 : vector<16x1xi32> to vector<16x155xi32>
    %293 = arith.cmpi eq, %292, %2 : vector<16x155xi32>
    %294 = arith.extui %293 : vector<16x155xi1> to vector<16x155xi32>
    %295 = arith.sitofp %294 : vector<16x155xi32> to vector<16x155xf32>
    %c31_i32_38 = arith.constant 31 : i32
    %296 = vector.broadcast %c31_i32_38 : i32 to vector<16x1xi32>
    %297 = arith.addi %12, %296 : vector<16x1xi32>
    %298 = vector.broadcast %297 : vector<16x1xi32> to vector<16x155xi32>
    %299 = arith.cmpi eq, %298, %2 : vector<16x155xi32>
    %300 = arith.extui %299 : vector<16x155xi1> to vector<16x155xi32>
    %301 = arith.sitofp %300 : vector<16x155xi32> to vector<16x155xf32>
    %302 = arith.addf %295, %301 : vector<16x155xf32>
    %c62_i32_39 = arith.constant 62 : i32
    %303 = vector.broadcast %c62_i32_39 : i32 to vector<16x1xi32>
    %304 = arith.addi %13, %303 : vector<16x1xi32>
    %305 = vector.broadcast %304 : vector<16x1xi32> to vector<16x155xi32>
    %306 = arith.cmpi eq, %305, %2 : vector<16x155xi32>
    %307 = arith.extui %306 : vector<16x155xi1> to vector<16x155xi32>
    %308 = arith.sitofp %307 : vector<16x155xi32> to vector<16x155xf32>
    %309 = arith.addf %302, %308 : vector<16x155xf32>
    %c93_i32_40 = arith.constant 93 : i32
    %310 = vector.broadcast %c93_i32_40 : i32 to vector<16x1xi32>
    %311 = arith.addi %14, %310 : vector<16x1xi32>
    %312 = vector.broadcast %311 : vector<16x1xi32> to vector<16x155xi32>
    %313 = arith.cmpi eq, %312, %2 : vector<16x155xi32>
    %314 = arith.extui %313 : vector<16x155xi1> to vector<16x155xi32>
    %315 = arith.sitofp %314 : vector<16x155xi32> to vector<16x155xf32>
    %316 = arith.addf %309, %315 : vector<16x155xf32>
    %c124_i32_41 = arith.constant 124 : i32
    %317 = vector.broadcast %c124_i32_41 : i32 to vector<16x1xi32>
    %318 = arith.addi %15, %317 : vector<16x1xi32>
    %319 = vector.broadcast %318 : vector<16x1xi32> to vector<16x155xi32>
    %320 = arith.cmpi eq, %319, %2 : vector<16x155xi32>
    %321 = arith.extui %320 : vector<16x155xi1> to vector<16x155xi32>
    %322 = arith.sitofp %321 : vector<16x155xi32> to vector<16x155xf32>
    %323 = arith.addf %316, %322 : vector<16x155xf32>
    %cst_42 = arith.constant dense<0.000000e+00> : vector<16x32xf32>
    %324 = tpu.matmul %323, %1, %cst_42 {dimension_numbers = #tpu.dot_dimension_numbers<[1], [0], [0], [1], [0, 0, 1, 1], [], []>} : vector<16x155xf32>, vector<155x32xf32>, vector<16x32xf32> -> vector<16x32xf32>
    %325 = arith.maximumf %291, %324 : vector<16x32xf32>
    %326 = vector.broadcast %12 : vector<16x1xi32> to vector<16x155xi32>
    %327 = arith.cmpi eq, %326, %2 : vector<16x155xi32>
    %328 = arith.extui %327 : vector<16x155xi1> to vector<16x155xi32>
    %329 = arith.sitofp %328 : vector<16x155xi32> to vector<16x155xf32>
    %c31_i32_43 = arith.constant 31 : i32
    %330 = vector.broadcast %c31_i32_43 : i32 to vector<16x1xi32>
    %331 = arith.addi %13, %330 : vector<16x1xi32>
    %332 = vector.broadcast %331 : vector<16x1xi32> to vector<16x155xi32>
    %333 = arith.cmpi eq, %332, %2 : vector<16x155xi32>
    %334 = arith.extui %333 : vector<16x155xi1> to vector<16x155xi32>
    %335 = arith.sitofp %334 : vector<16x155xi32> to vector<16x155xf32>
    %336 = arith.addf %329, %335 : vector<16x155xf32>
    %c62_i32_44 = arith.constant 62 : i32
    %337 = vector.broadcast %c62_i32_44 : i32 to vector<16x1xi32>
    %338 = arith.addi %14, %337 : vector<16x1xi32>
    %339 = vector.broadcast %338 : vector<16x1xi32> to vector<16x155xi32>
    %340 = arith.cmpi eq, %339, %2 : vector<16x155xi32>
    %341 = arith.extui %340 : vector<16x155xi1> to vector<16x155xi32>
    %342 = arith.sitofp %341 : vector<16x155xi32> to vector<16x155xf32>
    %343 = arith.addf %336, %342 : vector<16x155xf32>
    %c93_i32_45 = arith.constant 93 : i32
    %344 = vector.broadcast %c93_i32_45 : i32 to vector<16x1xi32>
    %345 = arith.addi %15, %344 : vector<16x1xi32>
    %346 = vector.broadcast %345 : vector<16x1xi32> to vector<16x155xi32>
    %347 = arith.cmpi eq, %346, %2 : vector<16x155xi32>
    %348 = arith.extui %347 : vector<16x155xi1> to vector<16x155xi32>
    %349 = arith.sitofp %348 : vector<16x155xi32> to vector<16x155xf32>
    %350 = arith.addf %343, %349 : vector<16x155xf32>
    %c124_i32_46 = arith.constant 124 : i32
    %351 = vector.broadcast %c124_i32_46 : i32 to vector<16x1xi32>
    %352 = arith.addi %16, %351 : vector<16x1xi32>
    %353 = vector.broadcast %352 : vector<16x1xi32> to vector<16x155xi32>
    %354 = arith.cmpi eq, %353, %2 : vector<16x155xi32>
    %355 = arith.extui %354 : vector<16x155xi1> to vector<16x155xi32>
    %356 = arith.sitofp %355 : vector<16x155xi32> to vector<16x155xf32>
    %357 = arith.addf %350, %356 : vector<16x155xf32>
    %cst_47 = arith.constant dense<0.000000e+00> : vector<16x32xf32>
    %358 = tpu.matmul %357, %1, %cst_47 {dimension_numbers = #tpu.dot_dimension_numbers<[1], [0], [0], [1], [0, 0, 1, 1], [], []>} : vector<16x155xf32>, vector<155x32xf32>, vector<16x32xf32> -> vector<16x32xf32>
    %359 = arith.maximumf %325, %358 : vector<16x32xf32>
    %360 = vector.broadcast %13 : vector<16x1xi32> to vector<16x155xi32>
    %361 = arith.cmpi eq, %360, %2 : vector<16x155xi32>
    %362 = arith.extui %361 : vector<16x155xi1> to vector<16x155xi32>
    %363 = arith.sitofp %362 : vector<16x155xi32> to vector<16x155xf32>
    %c31_i32_48 = arith.constant 31 : i32
    %364 = vector.broadcast %c31_i32_48 : i32 to vector<16x1xi32>
    %365 = arith.addi %14, %364 : vector<16x1xi32>
    %366 = vector.broadcast %365 : vector<16x1xi32> to vector<16x155xi32>
    %367 = arith.cmpi eq, %366, %2 : vector<16x155xi32>
    %368 = arith.extui %367 : vector<16x155xi1> to vector<16x155xi32>
    %369 = arith.sitofp %368 : vector<16x155xi32> to vector<16x155xf32>
    %370 = arith.addf %363, %369 : vector<16x155xf32>
    %c62_i32_49 = arith.constant 62 : i32
    %371 = vector.broadcast %c62_i32_49 : i32 to vector<16x1xi32>
    %372 = arith.addi %15, %371 : vector<16x1xi32>
    %373 = vector.broadcast %372 : vector<16x1xi32> to vector<16x155xi32>
    %374 = arith.cmpi eq, %373, %2 : vector<16x155xi32>
    %375 = arith.extui %374 : vector<16x155xi1> to vector<16x155xi32>
    %376 = arith.sitofp %375 : vector<16x155xi32> to vector<16x155xf32>
    %377 = arith.addf %370, %376 : vector<16x155xf32>
    %c93_i32_50 = arith.constant 93 : i32
    %378 = vector.broadcast %c93_i32_50 : i32 to vector<16x1xi32>
    %379 = arith.addi %16, %378 : vector<16x1xi32>
    %380 = vector.broadcast %379 : vector<16x1xi32> to vector<16x155xi32>
    %381 = arith.cmpi eq, %380, %2 : vector<16x155xi32>
    %382 = arith.extui %381 : vector<16x155xi1> to vector<16x155xi32>
    %383 = arith.sitofp %382 : vector<16x155xi32> to vector<16x155xf32>
    %384 = arith.addf %377, %383 : vector<16x155xf32>
    %c124_i32_51 = arith.constant 124 : i32
    %385 = vector.broadcast %c124_i32_51 : i32 to vector<16x1xi32>
    %386 = arith.addi %17, %385 : vector<16x1xi32>
    %387 = vector.broadcast %386 : vector<16x1xi32> to vector<16x155xi32>
    %388 = arith.cmpi eq, %387, %2 : vector<16x155xi32>
    %389 = arith.extui %388 : vector<16x155xi1> to vector<16x155xi32>
    %390 = arith.sitofp %389 : vector<16x155xi32> to vector<16x155xf32>
    %391 = arith.addf %384, %390 : vector<16x155xf32>
    %cst_52 = arith.constant dense<0.000000e+00> : vector<16x32xf32>
    %392 = tpu.matmul %391, %1, %cst_52 {dimension_numbers = #tpu.dot_dimension_numbers<[1], [0], [0], [1], [0, 0, 1, 1], [], []>} : vector<16x155xf32>, vector<155x32xf32>, vector<16x32xf32> -> vector<16x32xf32>
    %393 = arith.maximumf %359, %392 : vector<16x32xf32>
    %394 = vector.broadcast %14 : vector<16x1xi32> to vector<16x155xi32>
    %395 = arith.cmpi eq, %394, %2 : vector<16x155xi32>
    %396 = arith.extui %395 : vector<16x155xi1> to vector<16x155xi32>
    %397 = arith.sitofp %396 : vector<16x155xi32> to vector<16x155xf32>
    %c31_i32_53 = arith.constant 31 : i32
    %398 = vector.broadcast %c31_i32_53 : i32 to vector<16x1xi32>
    %399 = arith.addi %15, %398 : vector<16x1xi32>
    %400 = vector.broadcast %399 : vector<16x1xi32> to vector<16x155xi32>
    %401 = arith.cmpi eq, %400, %2 : vector<16x155xi32>
    %402 = arith.extui %401 : vector<16x155xi1> to vector<16x155xi32>
    %403 = arith.sitofp %402 : vector<16x155xi32> to vector<16x155xf32>
    %404 = arith.addf %397, %403 : vector<16x155xf32>
    %c62_i32_54 = arith.constant 62 : i32
    %405 = vector.broadcast %c62_i32_54 : i32 to vector<16x1xi32>
    %406 = arith.addi %16, %405 : vector<16x1xi32>
    %407 = vector.broadcast %406 : vector<16x1xi32> to vector<16x155xi32>
    %408 = arith.cmpi eq, %407, %2 : vector<16x155xi32>
    %409 = arith.extui %408 : vector<16x155xi1> to vector<16x155xi32>
    %410 = arith.sitofp %409 : vector<16x155xi32> to vector<16x155xf32>
    %411 = arith.addf %404, %410 : vector<16x155xf32>
    %c93_i32_55 = arith.constant 93 : i32
    %412 = vector.broadcast %c93_i32_55 : i32 to vector<16x1xi32>
    %413 = arith.addi %17, %412 : vector<16x1xi32>
    %414 = vector.broadcast %413 : vector<16x1xi32> to vector<16x155xi32>
    %415 = arith.cmpi eq, %414, %2 : vector<16x155xi32>
    %416 = arith.extui %415 : vector<16x155xi1> to vector<16x155xi32>
    %417 = arith.sitofp %416 : vector<16x155xi32> to vector<16x155xf32>
    %418 = arith.addf %411, %417 : vector<16x155xf32>
    %c124_i32_56 = arith.constant 124 : i32
    %419 = vector.broadcast %c124_i32_56 : i32 to vector<16x1xi32>
    %420 = arith.addi %18, %419 : vector<16x1xi32>
    %421 = vector.broadcast %420 : vector<16x1xi32> to vector<16x155xi32>
    %422 = arith.cmpi eq, %421, %2 : vector<16x155xi32>
    %423 = arith.extui %422 : vector<16x155xi1> to vector<16x155xi32>
    %424 = arith.sitofp %423 : vector<16x155xi32> to vector<16x155xf32>
    %425 = arith.addf %418, %424 : vector<16x155xf32>
    %cst_57 = arith.constant dense<0.000000e+00> : vector<16x32xf32>
    %426 = tpu.matmul %425, %1, %cst_57 {dimension_numbers = #tpu.dot_dimension_numbers<[1], [0], [0], [1], [0, 0, 1, 1], [], []>} : vector<16x155xf32>, vector<155x32xf32>, vector<16x32xf32> -> vector<16x32xf32>
    %427 = arith.maximumf %393, %426 : vector<16x32xf32>
    %428 = vector.broadcast %15 : vector<16x1xi32> to vector<16x155xi32>
    %429 = arith.cmpi eq, %428, %2 : vector<16x155xi32>
    %430 = arith.extui %429 : vector<16x155xi1> to vector<16x155xi32>
    %431 = arith.sitofp %430 : vector<16x155xi32> to vector<16x155xf32>
    %c31_i32_58 = arith.constant 31 : i32
    %432 = vector.broadcast %c31_i32_58 : i32 to vector<16x1xi32>
    %433 = arith.addi %16, %432 : vector<16x1xi32>
    %434 = vector.broadcast %433 : vector<16x1xi32> to vector<16x155xi32>
    %435 = arith.cmpi eq, %434, %2 : vector<16x155xi32>
    %436 = arith.extui %435 : vector<16x155xi1> to vector<16x155xi32>
    %437 = arith.sitofp %436 : vector<16x155xi32> to vector<16x155xf32>
    %438 = arith.addf %431, %437 : vector<16x155xf32>
    %c62_i32_59 = arith.constant 62 : i32
    %439 = vector.broadcast %c62_i32_59 : i32 to vector<16x1xi32>
    %440 = arith.addi %17, %439 : vector<16x1xi32>
    %441 = vector.broadcast %440 : vector<16x1xi32> to vector<16x155xi32>
    %442 = arith.cmpi eq, %441, %2 : vector<16x155xi32>
    %443 = arith.extui %442 : vector<16x155xi1> to vector<16x155xi32>
    %444 = arith.sitofp %443 : vector<16x155xi32> to vector<16x155xf32>
    %445 = arith.addf %438, %444 : vector<16x155xf32>
    %c93_i32_60 = arith.constant 93 : i32
    %446 = vector.broadcast %c93_i32_60 : i32 to vector<16x1xi32>
    %447 = arith.addi %18, %446 : vector<16x1xi32>
    %448 = vector.broadcast %447 : vector<16x1xi32> to vector<16x155xi32>
    %449 = arith.cmpi eq, %448, %2 : vector<16x155xi32>
    %450 = arith.extui %449 : vector<16x155xi1> to vector<16x155xi32>
    %451 = arith.sitofp %450 : vector<16x155xi32> to vector<16x155xf32>
    %452 = arith.addf %445, %451 : vector<16x155xf32>
    %c124_i32_61 = arith.constant 124 : i32
    %453 = vector.broadcast %c124_i32_61 : i32 to vector<16x1xi32>
    %454 = arith.addi %19, %453 : vector<16x1xi32>
    %455 = vector.broadcast %454 : vector<16x1xi32> to vector<16x155xi32>
    %456 = arith.cmpi eq, %455, %2 : vector<16x155xi32>
    %457 = arith.extui %456 : vector<16x155xi1> to vector<16x155xi32>
    %458 = arith.sitofp %457 : vector<16x155xi32> to vector<16x155xf32>
    %459 = arith.addf %452, %458 : vector<16x155xf32>
    %cst_62 = arith.constant dense<0.000000e+00> : vector<16x32xf32>
    %460 = tpu.matmul %459, %1, %cst_62 {dimension_numbers = #tpu.dot_dimension_numbers<[1], [0], [0], [1], [0, 0, 1, 1], [], []>} : vector<16x155xf32>, vector<155x32xf32>, vector<16x32xf32> -> vector<16x32xf32>
    %461 = arith.maximumf %427, %460 : vector<16x32xf32>
    %462 = vector.broadcast %16 : vector<16x1xi32> to vector<16x155xi32>
    %463 = arith.cmpi eq, %462, %2 : vector<16x155xi32>
    %464 = arith.extui %463 : vector<16x155xi1> to vector<16x155xi32>
    %465 = arith.sitofp %464 : vector<16x155xi32> to vector<16x155xf32>
    %c31_i32_63 = arith.constant 31 : i32
    %466 = vector.broadcast %c31_i32_63 : i32 to vector<16x1xi32>
    %467 = arith.addi %17, %466 : vector<16x1xi32>
    %468 = vector.broadcast %467 : vector<16x1xi32> to vector<16x155xi32>
    %469 = arith.cmpi eq, %468, %2 : vector<16x155xi32>
    %470 = arith.extui %469 : vector<16x155xi1> to vector<16x155xi32>
    %471 = arith.sitofp %470 : vector<16x155xi32> to vector<16x155xf32>
    %472 = arith.addf %465, %471 : vector<16x155xf32>
    %c62_i32_64 = arith.constant 62 : i32
    %473 = vector.broadcast %c62_i32_64 : i32 to vector<16x1xi32>
    %474 = arith.addi %18, %473 : vector<16x1xi32>
    %475 = vector.broadcast %474 : vector<16x1xi32> to vector<16x155xi32>
    %476 = arith.cmpi eq, %475, %2 : vector<16x155xi32>
    %477 = arith.extui %476 : vector<16x155xi1> to vector<16x155xi32>
    %478 = arith.sitofp %477 : vector<16x155xi32> to vector<16x155xf32>
    %479 = arith.addf %472, %478 : vector<16x155xf32>
    %c93_i32_65 = arith.constant 93 : i32
    %480 = vector.broadcast %c93_i32_65 : i32 to vector<16x1xi32>
    %481 = arith.addi %19, %480 : vector<16x1xi32>
    %482 = vector.broadcast %481 : vector<16x1xi32> to vector<16x155xi32>
    %483 = arith.cmpi eq, %482, %2 : vector<16x155xi32>
    %484 = arith.extui %483 : vector<16x155xi1> to vector<16x155xi32>
    %485 = arith.sitofp %484 : vector<16x155xi32> to vector<16x155xf32>
    %486 = arith.addf %479, %485 : vector<16x155xf32>
    %c124_i32_66 = arith.constant 124 : i32
    %487 = vector.broadcast %c124_i32_66 : i32 to vector<16x1xi32>
    %488 = arith.addi %20, %487 : vector<16x1xi32>
    %489 = vector.broadcast %488 : vector<16x1xi32> to vector<16x155xi32>
    %490 = arith.cmpi eq, %489, %2 : vector<16x155xi32>
    %491 = arith.extui %490 : vector<16x155xi1> to vector<16x155xi32>
    %492 = arith.sitofp %491 : vector<16x155xi32> to vector<16x155xf32>
    %493 = arith.addf %486, %492 : vector<16x155xf32>
    %cst_67 = arith.constant dense<0.000000e+00> : vector<16x32xf32>
    %494 = tpu.matmul %493, %1, %cst_67 {dimension_numbers = #tpu.dot_dimension_numbers<[1], [0], [0], [1], [0, 0, 1, 1], [], []>} : vector<16x155xf32>, vector<155x32xf32>, vector<16x32xf32> -> vector<16x32xf32>
    %495 = arith.maximumf %461, %494 : vector<16x32xf32>
    %c0_68 = arith.constant 0 : index
    %c0_69 = arith.constant 0 : index
    %496 = vector.load %arg3[%c0_68, %c0_69] : memref<1x32xf32, #tpu.memory_space<vmem>>, vector<1x32xf32>
    %497 = vector.broadcast %496 : vector<1x32xf32> to vector<16x32xf32>
    %498 = arith.addf %495, %497 : vector<16x32xf32>
    %cst_70 = arith.constant 0.000000e+00 : f32
    %499 = vector.broadcast %cst_70 : f32 to vector<16x32xf32>
    %500 = arith.maximumf %498, %499 : vector<16x32xf32>
    %c0_71 = arith.constant 0 : index
    %c0_72 = arith.constant 0 : index
    %501 = vector.load %arg4[%c0_71, %c0_72] : memref<32x64xf32, #tpu.memory_space<vmem>>, vector<32x64xf32>
    %cst_73 = arith.constant dense<0.000000e+00> : vector<16x64xf32>
    %502 = tpu.matmul %500, %501, %cst_73 {dimension_numbers = #tpu.dot_dimension_numbers<[1], [0], [0], [1], [0, 0, 1, 1], [], []>} : vector<16x32xf32>, vector<32x64xf32>, vector<16x64xf32> -> vector<16x64xf32>
    %c0_74 = arith.constant 0 : index
    %c0_75 = arith.constant 0 : index
    %503 = vector.load %arg5[%c0_74, %c0_75] : memref<1x64xf32, #tpu.memory_space<vmem>>, vector<1x64xf32>
    %504 = vector.broadcast %503 : vector<1x64xf32> to vector<16x64xf32>
    %505 = arith.addf %502, %504 : vector<16x64xf32>
    %506 = vector.extract_strided_slice %505 {offsets = [0, 0], sizes = [16, 32], strides = [1, 1]} : vector<16x64xf32> to vector<16x32xf32>
    %507 = arith.negf %506 : vector<16x32xf32>
    %508 = math.exp %507 : vector<16x32xf32>
    %cst_76 = arith.constant 1.000000e+00 : f32
    %509 = vector.broadcast %cst_76 : f32 to vector<16x32xf32>
    %510 = arith.addf %509, %508 : vector<16x32xf32>
    %511 = arith.divf %509, %510 : vector<16x32xf32>
    %512 = vector.extract_strided_slice %505 {offsets = [0, 32], sizes = [16, 32], strides = [1, 1]} : vector<16x64xf32> to vector<16x32xf32>
    %cst_77 = arith.constant 0.000000e+00 : f32
    %513 = vector.broadcast %cst_77 : f32 to vector<16x32xf32>
    %514 = arith.maximumf %512, %513 : vector<16x32xf32>
    %515 = arith.subf %514, %500 : vector<16x32xf32>
    %516 = arith.mulf %511, %515 : vector<16x32xf32>
    %517 = arith.addf %500, %516 : vector<16x32xf32>
    %c0_78 = arith.constant 0 : index
    %c0_79 = arith.constant 0 : index
    %518 = vector.load %arg6[%c0_78, %c0_79] : memref<16x32xf32, #tpu.memory_space<vmem>>, vector<16x32xf32>
    tpu.vector_store %arg6[%c0_78, %c0_79], %517 {strides = array<i32>} : memref<16x32xf32, #tpu.memory_space<vmem>>, vector<16x32xf32>,
    return
  }
  func.func @transform_0(%arg0: i32) -> (i32, i32) {
    %c0_i32 = arith.constant 0 : i32
    %c0_i32_0 = arith.constant 0 : i32
    return %arg0, %c0_i32 : i32, i32
  }
  func.func @transform_1(%arg0: i32) -> (i32, i32) {
    %c0_i32 = arith.constant 0 : i32
    %c0_i32_0 = arith.constant 0 : i32
    %c0_i32_1 = arith.constant 0 : i32
    return %c0_i32, %c0_i32_0 : i32, i32
  }
  func.func @transform_2(%arg0: i32) -> (i32, i32) {
    %c0_i32 = arith.constant 0 : i32
    %c0_i32_0 = arith.constant 0 : i32
    %c0_i32_1 = arith.constant 0 : i32
    return %c0_i32, %c0_i32_0 : i32, i32
  }
  func.func @transform_3(%arg0: i32) -> (i32, i32) {
    %c0_i32 = arith.constant 0 : i32
    %c0_i32_0 = arith.constant 0 : i32
    %c0_i32_1 = arith.constant 0 : i32
    return %c0_i32, %c0_i32_0 : i32, i32
  }
  func.func @transform_4(%arg0: i32) -> (i32, i32) {
    %c0_i32 = arith.constant 0 : i32
    %c0_i32_0 = arith.constant 0 : i32
    %c0_i32_1 = arith.constant 0 : i32
    return %c0_i32, %c0_i32_0 : i32, i32
  }
  func.func @transform_5(%arg0: i32) -> (i32, i32) {
    %c0_i32 = arith.constant 0 : i32
    %c0_i32_0 = arith.constant 0 : i32
    return %arg0, %c0_i32 : i32, i32
  }
}

</mosaic_0001>

<llo_original>
// kernel: tpu_custom_call.1
$region0: #{tpu_custom_call.1}
  #allocation0 [shape = 'u32[]', space=smem, size = 0x4, offset = 0x4, fixed_abs, tag = 'smem constant byte address 0x4 - core index']
  #allocation1 [shape = 'u32[144,128]{1,0:T(1,128)}', space=vmem, size = 0x12000, scoped, tag = 'internal scratch']
  %s0 = inlined_call_operand.vmem [shape: s32[16,18], index: 0, kind: input, shape index: {}]
  %s1 = inlined_call_operand.vmem [shape: f32[155,32], index: 1, kind: input, shape index: {}]
  %s2 = inlined_call_operand.vmem [shape: f32[1,32], index: 2, kind: input, shape index: {}]
  %s3 = inlined_call_operand.vmem [shape: f32[32,64], index: 3, kind: input, shape index: {}]
  %s4 = inlined_call_operand.vmem [shape: f32[1,64], index: 4, kind: input, shape index: {}]
  %s5 = inlined_call_operand.hbm [shape: f32[16,32], index: 5, kind: output, shape index: {}]
  %s6 = sld [smem:[#allocation0]]
  $region30: #{tpu_custom_call.1} parent=0
    _
  %s8 = ssub.s32 1, %s6
  %s9 = scalar_select 0, %s8, %s6
  $region1: #{tpu_custom_call.1} parent=0
    #allocation2 [shape = 'u8[8192]{0}', space=vmem, size = 0x2000, scoped, tag = 'output window, operand 0, single buffered']
    #allocation3 [shape = 's32[1]{0}', space=sflag, size = 0x4, scoped, tag = 'scoped memory for tpu_custom_call.1']
    %10 = vsyncpa [#allocation3], 0
    // Predicated region
    $region2: #{tpu_custom_call.1} parent=1 // pred_check
      _
    $region3: #{tpu_custom_call.1} parent=1 // pred_check_branch
      %12 = sbr.rel (0) target = $region5
    $region4: #{tpu_custom_call.1} parent=1 // pred_region
      _
    $region5: #{tpu_custom_call.1} parent=1 // pred_fallthru
      _
    // Predicated region
    $region6: #{tpu_custom_call.1} parent=1 // pred_check
      _
    $region7: #{tpu_custom_call.1} parent=1 // pred_check_branch
      %14 = sbr.rel (0) target = $region9
    $region8: #{tpu_custom_call.1} parent=1 // pred_region
      _
    $region9: #{tpu_custom_call.1} parent=1 // pred_fallthru
      _
    // Predicated region
    $region10: #{tpu_custom_call.1} parent=1 // pred_check
      _
    $region11: #{tpu_custom_call.1} parent=1 // pred_check_branch
      %16 = sbr.rel (0) target = $region13
    $region12: #{tpu_custom_call.1} parent=1 // pred_region
      _
    $region13: #{tpu_custom_call.1} parent=1 // pred_fallthru
      _
    // Predicated region
    $region14: #{tpu_custom_call.1} parent=1 // pred_check
      _
    $region15: #{tpu_custom_call.1} parent=1 // pred_check_branch
      %18 = sbr.rel (0) target = $region17
    $region16: #{tpu_custom_call.1} parent=1 // pred_region
      _
    $region17: #{tpu_custom_call.1} parent=1 // pred_fallthru
      _
    // Predicated region
    $region18: #{tpu_custom_call.1} parent=1 // pred_check
      _
    $region19: #{tpu_custom_call.1} parent=1 // pred_check_branch
      %20 = sbr.rel (0) target = $region21
    $region20: #{tpu_custom_call.1} parent=1 // pred_region
      _
    $region21: #{tpu_custom_call.1} parent=1 // pred_fallthru
      _
    %v21 = vld [vmem:[%s0] sm:$0xff]
    %v22 = vld [vmem:[%s0 + $0x8] sm:$0xff]
    %v23 = vld [vmem:[%s1] sm:$0xff]
    %v24 = vld [vmem:[%s1 + $0x8] sm:$0xff]
    %v25 = vld [vmem:[%s1 + $0x10] sm:$0xff]
    %v26 = vld [vmem:[%s1 + $0x18] sm:$0xff]
    %v27 = vld [vmem:[%s1 + $0x20] sm:$0xff]
    %v28 = vld [vmem:[%s1 + $0x28] sm:$0xff]
    %v29 = vld [vmem:[%s1 + $0x30] sm:$0xff]
    %v30 = vld [vmem:[%s1 + $0x38] sm:$0xff]
    %v31 = vld [vmem:[%s1 + $0x40] sm:$0xff]
    %v32 = vld [vmem:[%s1 + $0x48] sm:$0xff]
    %v33 = vld [vmem:[%s1 + $0x50] sm:$0xff]
    %v34 = vld [vmem:[%s1 + $0x58] sm:$0xff]
    %v35 = vld [vmem:[%s1 + $0x60] sm:$0xff]
    %v36 = vld [vmem:[%s1 + $0x68] sm:$0xff]
    %v37 = vld [vmem:[%s1 + $0x70] sm:$0xff]
    %v38 = vld [vmem:[%s1 + $0x78] sm:$0xff]
    %v39 = vld [vmem:[%s1 + $0x80] sm:$0xff]
    %v40 = vld [vmem:[%s1 + $0x88] sm:$0xff]
    %v41 = vld [vmem:[%s1 + $0x90] sm:$0xff]
    %v42 = vld [vmem:[%s1 + $0x98] sm:$0x7]
    %v43 = vlaneseq
    %v44 = vand.u32 %v43, 127
    %v45 = vadd.s32 %v44, 128
    %46 = vset.pattern.permute.xlu0 0
    %47 = vperm.xlu0 %46, %v21
    %v48 = vpop.permute.xlu0 %47
    %49 = vset.pattern.permute.xlu0 0
    %50 = vperm.xlu0 %49, %v22
    %v51 = vpop.permute.xlu0 %50
    %vm52 = vcmp.eq.s32.totalorder %v48, %v44
    %vm53 = vcmp.eq.s32.totalorder %v48, %v45
    %vm54 = vcmp.eq.s32.totalorder %v51, %v44
    %vm55 = vcmp.eq.s32.totalorder %v51, %v45
    %v56 = vsel %vm52, 1, 0
    %v57 = vsel %vm53, 1, 0
    %v58 = vsel %vm54, 1, 0
    %v59 = vsel %vm55, 1, 0
    %v60 = vcvt.s32.f32 %v56
    %v61 = vcvt.s32.f32 %v57
    %v62 = vcvt.s32.f32 %v58
    %v63 = vcvt.s32.f32 %v59
    %v64 = vadd.s32 %v21, 31
    %v65 = vadd.s32 %v22, 31
    %66 = vset.pattern.permute.xlu0 1
    %67 = vperm.xlu0 %66, %v64
    %v68 = vpop.permute.xlu0 %67
    %69 = vset.pattern.permute.xlu0 1
    %70 = vperm.xlu0 %69, %v65
    %v71 = vpop.permute.xlu0 %70
    %vm72 = vcmp.eq.s32.totalorder %v68, %v44
    %vm73 = vcmp.eq.s32.totalorder %v68, %v45
    %vm74 = vcmp.eq.s32.totalorder %v71, %v44
    %vm75 = vcmp.eq.s32.totalorder %v71, %v45
    %v76 = vsel %vm72, 1, 0
    %v77 = vsel %vm73, 1, 0
    %v78 = vsel %vm74, 1, 0
    %v79 = vsel %vm75, 1, 0
    %v80 = vcvt.s32.f32 %v76
    %v81 = vcvt.s32.f32 %v77
    %v82 = vcvt.s32.f32 %v78
    %v83 = vcvt.s32.f32 %v79
    %v84 = vadd.f32 %v60, %v80
    %v85 = vadd.f32 %v61, %v81
    %v86 = vadd.f32 %v62, %v82
    %v87 = vadd.f32 %v63, %v83
    %v88 = vadd.s32 %v21, 62
    %v89 = vadd.s32 %v22, 62
    %90 = vset.pattern.permute.xlu0 2
    %91 = vperm.xlu0 %90, %v88
    %v92 = vpop.permute.xlu0 %91
    %93 = vset.pattern.permute.xlu0 2
    %94 = vperm.xlu0 %93, %v89
    %v95 = vpop.permute.xlu0 %94
    %vm96 = vcmp.eq.s32.totalorder %v92, %v44
    %vm97 = vcmp.eq.s32.totalorder %v92, %v45
    %vm98 = vcmp.eq.s32.totalorder %v95, %v44
    %vm99 = vcmp.eq.s32.totalorder %v95, %v45
    %v100 = vsel %vm96, 1, 0
    %v101 = vsel %vm97, 1, 0
    %v102 = vsel %vm98, 1, 0
    %v103 = vsel %vm99, 1, 0
    %v104 = vcvt.s32.f32 %v100
    %v105 = vcvt.s32.f32 %v101
    %v106 = vcvt.s32.f32 %v102
    %v107 = vcvt.s32.f32 %v103
    %v108 = vadd.f32 %v84, %v104
    %v109 = vadd.f32 %v85, %v105
    %v110 = vadd.f32 %v86, %v106
    %v111 = vadd.f32 %v87, %v107
    %v112 = vadd.s32 %v21, 93
    %v113 = vadd.s32 %v22, 93
    %114 = vset.pattern.permute.xlu0 3
    %115 = vperm.xlu0 %114, %v112
    %v116 = vpop.permute.xlu0 %115
    %117 = vset.pattern.permute.xlu0 3
    %118 = vperm.xlu0 %117, %v113
    %v119 = vpop.permute.xlu0 %118
    %vm120 = vcmp.eq.s32.totalorder %v116, %v44
    %vm121 = vcmp.eq.s32.totalorder %v116, %v45
    %vm122 = vcmp.eq.s32.totalorder %v119, %v44
    %vm123 = vcmp.eq.s32.totalorder %v119, %v45
    %v124 = vsel %vm120, 1, 0
    %v125 = vsel %vm121, 1, 0
    %v126 = vsel %vm122, 1, 0
    %v127 = vsel %vm123, 1, 0
    %v128 = vcvt.s32.f32 %v124
    %v129 = vcvt.s32.f32 %v125
    %v130 = vcvt.s32.f32 %v126
    %v131 = vcvt.s32.f32 %v127
    %v132 = vadd.f32 %v108, %v128
    %v133 = vadd.f32 %v109, %v129
    %v134 = vadd.f32 %v110, %v130
    %v135 = vadd.f32 %v111, %v131
    %v136 = vadd.s32 %v21, 124
    %v137 = vadd.s32 %v22, 124
    %138 = vset.pattern.permute.xlu0 4
    %139 = vperm.xlu0 %138, %v136
    %v140 = vpop.permute.xlu0 %139
    %141 = vset.pattern.permute.xlu0 4
    %142 = vperm.xlu0 %141, %v137
    %v143 = vpop.permute.xlu0 %142
    %vm144 = vcmp.eq.s32.totalorder %v140, %v44
    %vm145 = vcmp.eq.s32.totalorder %v140, %v45
    %vm146 = vcmp.eq.s32.totalorder %v143, %v44
    %vm147 = vcmp.eq.s32.totalorder %v143, %v45
    %v148 = vsel %vm144, 1, 0
    %v149 = vsel %vm145, 1, 0
    %v150 = vsel %vm146, 1, 0
    %v151 = vsel %vm147, 1, 0
    %v152 = vcvt.s32.f32 %v148
    %v153 = vcvt.s32.f32 %v149
    %v154 = vcvt.s32.f32 %v150
    %v155 = vcvt.s32.f32 %v151
    %v156 = vadd.f32 %v132, %v152
    %v157 = vadd.f32 %v133, %v153
    %v158 = vadd.f32 %v134, %v154
    %v159 = vadd.f32 %v135, %v155
    %vm160 = vcmask 220160
    %v162 = vsel %vm160, %v157, 0
    %v165 = vsel %vm160, %v159, 0
    %vm167 = vcmask 1042432
    %v169 = vsel %vm167, %v42, 0
    %171 = vmatprep.subr.mxu0 0.0
    %172 = vmatpush1.msra.mxu0 %v38
    %173 = vmatprep.subr.mxu0 0.0
    %174 = vmatpush1.msra.mxu0 %v37
    %175 = vmatprep.subr.mxu0 0.0
    %176 = vmatpush1.msra.mxu0 %v36
    %177 = vmatprep.subr.mxu0 0.0
    %178 = vmatpush1.msra.mxu0 %v35
    %179 = vmatprep.subr.mxu0 0.0
    %180 = vmatpush1.msra.mxu0 %v34
    %181 = vmatprep.subr.mxu0 0.0
    %182 = vmatpush1.msra.mxu0 %v33
    %183 = vmatprep.subr.mxu0 0.0
    %184 = vmatpush1.msra.mxu0 %v32
    %185 = vmatprep.subr.mxu0 0.0
    %186 = vmatpush1.msra.mxu0 %v31
    %187 = vmatprep.subr.mxu0 0.0
    %188 = vmatpush1.msra.mxu0 %v30
    %189 = vmatprep.subr.mxu0 0.0
    %190 = vmatpush1.msra.mxu0 %v29
    %191 = vmatprep.subr.mxu0 0.0
    %192 = vmatpush1.msra.mxu0 %v28
    %193 = vmatprep.subr.mxu0 0.0
    %194 = vmatpush1.msra.mxu0 %v27
    %195 = vmatprep.subr.mxu0 0.0
    %196 = vmatpush1.msra.mxu0 %v26
    %197 = vmatprep.subr.mxu0 0.0
    %198 = vmatpush1.msra.mxu0 %v25
    %199 = vmatprep.subr.mxu0 0.0
    %200 = vmatpush1.msra.mxu0 %v24
    %201 = vmatprep.subr.mxu0 0.0
    %202 = vmatpush1.msra.mxu0 %v23
    %203 = vmatprep.subr.mxu0 0.0
    %204 = vmatpush2.msra.mxu0 0.0
    %205 = vmatprep.subr.mxu0 0.0
    %206 = vmatpush2.msra.mxu0 0.0
    %207 = vmatprep.subr.mxu0 0.0
    %208 = vmatpush2.msra.mxu0 0.0
    %209 = vmatprep.subr.mxu0 0.0
    %210 = vmatpush2.msra.mxu0 0.0
    %211 = vmatprep.subr.mxu0 0.0
    %212 = vmatpush2.msra.mxu0 0.0
    %213 = vmatprep.subr.mxu0 0.0
    %214 = vmatpush2.msra.mxu0 0.0
    %215 = vmatprep.subr.mxu0 0.0
    %216 = vmatpush2.msra.mxu0 0.0
    %217 = vmatprep.subr.mxu0 0.0
    %218 = vmatpush2.msra.mxu0 0.0
    %219 = vmatprep.subr.mxu0 0.0
    %220 = vmatpush2.msra.mxu0 0.0
    %221 = vmatprep.subr.mxu0 0.0
    %222 = vmatpush2.msra.mxu0 0.0
    %223 = vmatprep.subr.mxu0 0.0
    %224 = vmatpush2.msra.mxu0 0.0
    %225 = vmatprep.subr.mxu0 0.0
    %226 = vmatpush2.msra.mxu0 0.0
    %227 = vmatprep.subr.mxu0 0.0
    %228 = vmatpush2.msra.mxu0 %v169
    %229 = vmatprep.subr.mxu0 0.0
    %230 = vmatpush2.msra.mxu0 %v41
    %231 = vmatprep.subr.mxu0 0.0
    %232 = vmatpush2.msra.mxu0 %v40
    %233 = vmatprep.subr.mxu0 0.0
    %234 = vmatpush2.msra.mxu0 %v39
    %235 = vmatprep.mubr.f32.mxu0 %v162
    %236 = vmatmul.mubr.f32.gmra.mxu0 %v156
    %v237 = vpop.f32.mrf.mxu0
    %v238 = vadd.f32 0.0, %v237
    %v239 = vpop.f32.mrf.mxu0
    %240 = vmatprep.mubr.f32.mxu0 %v165
    %241 = vmatmul.mubr.f32.gmra.mxu0 %v158
    %v242 = vpop.f32.mrf.mxu0
    %v243 = vadd.f32 0.0, %v242
    %v244 = vpop.f32.mrf.mxu0
    %245 = vdwg.mxu0
    %246 = vset.pattern.permute.xlu0 1
    %247 = vperm.xlu0 %246, %v21
    %v248 = vpop.permute.xlu0 %247
    %249 = vset.pattern.permute.xlu0 1
    %250 = vperm.xlu0 %249, %v22
    %v251 = vpop.permute.xlu0 %250
    %vm252 = vcmp.eq.s32.totalorder %v248, %v44
    %vm253 = vcmp.eq.s32.totalorder %v248, %v45
    %vm254 = vcmp.eq.s32.totalorder %v251, %v44
    %vm255 = vcmp.eq.s32.totalorder %v251, %v45
    %v256 = vsel %vm252, 1, 0
    %v257 = vsel %vm253, 1, 0
    %v258 = vsel %vm254, 1, 0
    %v259 = vsel %vm255, 1, 0
    %v260 = vcvt.s32.f32 %v256
    %v261 = vcvt.s32.f32 %v257
    %v262 = vcvt.s32.f32 %v258
    %v263 = vcvt.s32.f32 %v259
    %264 = vset.pattern.permute.xlu0 2
    %265 = vperm.xlu0 %264, %v64
    %v266 = vpop.permute.xlu0 %265
    %267 = vset.pattern.permute.xlu0 2
    %268 = vperm.xlu0 %267, %v65
    %v269 = vpop.permute.xlu0 %268
    %vm270 = vcmp.eq.s32.totalorder %v266, %v44
    %vm271 = vcmp.eq.s32.totalorder %v266, %v45
    %vm272 = vcmp.eq.s32.totalorder %v269, %v44
    %vm273 = vcmp.eq.s32.totalorder %v269, %v45
    %v274 = vsel %vm270, 1, 0
    %v275 = vsel %vm271, 1, 0
    %v276 = vsel %vm272, 1, 0
    %v277 = vsel %vm273, 1, 0
    %v278 = vcvt.s32.f32 %v274
    %v279 = vcvt.s32.f32 %v275
    %v280 = vcvt.s32.f32 %v276
    %v281 = vcvt.s32.f32 %v277
    %v282 = vadd.f32 %v260, %v278
    %v283 = vadd.f32 %v261, %v279
    %v284 = vadd.f32 %v262, %v280
    %v285 = vadd.f32 %v263, %v281
    %286 = vset.pattern.permute.xlu0 3
    %287 = vperm.xlu0 %286, %v88
    %v288 = vpop.permute.xlu0 %287
    %289 = vset.pattern.permute.xlu0 3
    %290 = vperm.xlu0 %289, %v89
    %v291 = vpop.permute.xlu0 %290
    %vm292 = vcmp.eq.s32.totalorder %v288, %v44
    %vm293 = vcmp.eq.s32.totalorder %v288, %v45
    %vm294 = vcmp.eq.s32.totalorder %v291, %v44
    %vm295 = vcmp.eq.s32.totalorder %v291, %v45
    %v296 = vsel %vm292, 1, 0
    %v297 = vsel %vm293, 1, 0
    %v298 = vsel %vm294, 1, 0
    %v299 = vsel %vm295, 1, 0
    %v300 = vcvt.s32.f32 %v296
    %v301 = vcvt.s32.f32 %v297
    %v302 = vcvt.s32.f32 %v298
    %v303 = vcvt.s32.f32 %v299
    %v304 = vadd.f32 %v282, %v300
    %v305 = vadd.f32 %v283, %v301
    %v306 = vadd.f32 %v284, %v302
    %v307 = vadd.f32 %v285, %v303
    %308 = vset.pattern.permute.xlu0 4
    %309 = vperm.xlu0 %308, %v112
    %v310 = vpop.permute.xlu0 %309
    %311 = vset.pattern.permute.xlu0 4
    %312 = vperm.xlu0 %311, %v113
    %v313 = vpop.permute.xlu0 %312
    %vm314 = vcmp.eq.s32.totalorder %v310, %v44
    %vm315 = vcmp.eq.s32.totalorder %v310, %v45
    %vm316 = vcmp.eq.s32.totalorder %v313, %v44
    %vm317 = vcmp.eq.s32.totalorder %v313, %v45
    %v318 = vsel %vm314, 1, 0
    %v319 = vsel %vm315, 1, 0
    %v320 = vsel %vm316, 1, 0
    %v321 = vsel %vm317, 1, 0
    %v322 = vcvt.s32.f32 %v318
    %v323 = vcvt.s32.f32 %v319
    %v324 = vcvt.s32.f32 %v320
    %v325 = vcvt.s32.f32 %v321
    %v326 = vadd.f32 %v304, %v322
    %v327 = vadd.f32 %v305, %v323
    %v328 = vadd.f32 %v306, %v324
    %v329 = vadd.f32 %v307, %v325
    %330 = vset.pattern.permute.xlu0 5
    %331 = vperm.xlu0 %330, %v136
    %v332 = vpop.permute.xlu0 %331
    %333 = vset.pattern.permute.xlu0 5
    %334 = vperm.xlu0 %333, %v137
    %v335 = vpop.permute.xlu0 %334
    %vm336 = vcmp.eq.s32.totalorder %v332, %v44
    %vm337 = vcmp.eq.s32.totalorder %v332, %v45
    %vm338 = vcmp.eq.s32.totalorder %v335, %v44
    %vm339 = vcmp.eq.s32.totalorder %v335, %v45
    %v340 = vsel %vm336, 1, 0
    %v341 = vsel %vm337, 1, 0
    %v342 = vsel %vm338, 1, 0
    %v343 = vsel %vm339, 1, 0
    %v344 = vcvt.s32.f32 %v340
    %v345 = vcvt.s32.f32 %v341
    %v346 = vcvt.s32.f32 %v342
    %v347 = vcvt.s32.f32 %v343
    %v348 = vadd.f32 %v326, %v344
    %v349 = vadd.f32 %v327, %v345
    %v350 = vadd.f32 %v328, %v346
    %v351 = vadd.f32 %v329, %v347
    %v353 = vsel %vm160, %v349, 0
    %v356 = vsel %vm160, %v351, 0
    %358 = vmatprep.subr.mxu0 0.0
    %359 = vmatpush1.msra.mxu0 %v38
    %360 = vmatprep.subr.mxu0 0.0
    %361 = vmatpush1.msra.mxu0 %v37
    %362 = vmatprep.subr.mxu0 0.0
    %363 = vmatpush1.msra.mxu0 %v36
    %364 = vmatprep.subr.mxu0 0.0
    %365 = vmatpush1.msra.mxu0 %v35
    %366 = vmatprep.subr.mxu0 0.0
    %367 = vmatpush1.msra.mxu0 %v34
    %368 = vmatprep.subr.mxu0 0.0
    %369 = vmatpush1.msra.mxu0 %v33
    %370 = vmatprep.subr.mxu0 0.0
    %371 = vmatpush1.msra.mxu0 %v32
    %372 = vmatprep.subr.mxu0 0.0
    %373 = vmatpush1.msra.mxu0 %v31
    %374 = vmatprep.subr.mxu0 0.0
    %375 = vmatpush1.msra.mxu0 %v30
    %376 = vmatprep.subr.mxu0 0.0
    %377 = vmatpush1.msra.mxu0 %v29
    %378 = vmatprep.subr.mxu0 0.0
    %379 = vmatpush1.msra.mxu0 %v28
    %380 = vmatprep.subr.mxu0 0.0
    %381 = vmatpush1.msra.mxu0 %v27
    %382 = vmatprep.subr.mxu0 0.0
    %383 = vmatpush1.msra.mxu0 %v26
    %384 = vmatprep.subr.mxu0 0.0
    %385 = vmatpush1.msra.mxu0 %v25
    %386 = vmatprep.subr.mxu0 0.0
    %387 = vmatpush1.msra.mxu0 %v24
    %388 = vmatprep.subr.mxu0 0.0
    %389 = vmatpush1.msra.mxu0 %v23
    %390 = vmatprep.subr.mxu0 0.0
    %391 = vmatpush2.msra.mxu0 0.0
    %392 = vmatprep.subr.mxu0 0.0
    %393 = vmatpush2.msra.mxu0 0.0
    %394 = vmatprep.subr.mxu0 0.0
    %395 = vmatpush2.msra.mxu0 0.0
    %396 = vmatprep.subr.mxu0 0.0
    %397 = vmatpush2.msra.mxu0 0.0
    %398 = vmatprep.subr.mxu0 0.0
    %399 = vmatpush2.msra.mxu0 0.0
    %400 = vmatprep.subr.mxu0 0.0
    %401 = vmatpush2.msra.mxu0 0.0
    %402 = vmatprep.subr.mxu0 0.0
    %403 = vmatpush2.msra.mxu0 0.0
    %404 = vmatprep.subr.mxu0 0.0
    %405 = vmatpush2.msra.mxu0 0.0
    %406 = vmatprep.subr.mxu0 0.0
    %407 = vmatpush2.msra.mxu0 0.0
    %408 = vmatprep.subr.mxu0 0.0
    %409 = vmatpush2.msra.mxu0 0.0
    %410 = vmatprep.subr.mxu0 0.0
    %411 = vmatpush2.msra.mxu0 0.0
    %412 = vmatprep.subr.mxu0 0.0
    %413 = vmatpush2.msra.mxu0 0.0
    %414 = vmatprep.subr.mxu0 0.0
    %415 = vmatpush2.msra.mxu0 %v169
    %416 = vmatprep.subr.mxu0 0.0
    %417 = vmatpush2.msra.mxu0 %v41
    %418 = vmatprep.subr.mxu0 0.0
    %419 = vmatpush2.msra.mxu0 %v40
    %420 = vmatprep.subr.mxu0 0.0
    %421 = vmatpush2.msra.mxu0 %v39
    %422 = vmatprep.mubr.f32.mxu0 %v353
    %423 = vmatmul.mubr.f32.gmra.mxu0 %v348
    %v424 = vpop.f32.mrf.mxu0
    %v425 = vadd.f32 0.0, %v424
    %v426 = vpop.f32.mrf.mxu0
    %427 = vmatprep.mubr.f32.mxu0 %v356
    %428 = vmatmul.mubr.f32.gmra.mxu0 %v350
    %v429 = vpop.f32.mrf.mxu0
    %v430 = vadd.f32 0.0, %v429
    %v431 = vpop.f32.mrf.mxu0
    %432 = vdwg.mxu0
    %v433 = vmax.f32 %v238, %v425
    %v434 = vmax.f32 %v243, %v430
    %435 = vset.pattern.permute.xlu0 2
    %436 = vperm.xlu0 %435, %v21
    %v437 = vpop.permute.xlu0 %436
    %438 = vset.pattern.permute.xlu0 2
    %439 = vperm.xlu0 %438, %v22
    %v440 = vpop.permute.xlu0 %439
    %vm441 = vcmp.eq.s32.totalorder %v437, %v44
    %vm442 = vcmp.eq.s32.totalorder %v437, %v45
    %vm443 = vcmp.eq.s32.totalorder %v440, %v44
    %vm444 = vcmp.eq.s32.totalorder %v440, %v45
    %v445 = vsel %vm441, 1, 0
    %v446 = vsel %vm442, 1, 0
    %v447 = vsel %vm443, 1, 0
    %v448 = vsel %vm444, 1, 0
    %v449 = vcvt.s32.f32 %v445
    %v450 = vcvt.s32.f32 %v446
    %v451 = vcvt.s32.f32 %v447
    %v452 = vcvt.s32.f32 %v448
    %453 = vset.pattern.permute.xlu0 3
    %454 = vperm.xlu0 %453, %v64
    %v455 = vpop.permute.xlu0 %454
    %456 = vset.pattern.permute.xlu0 3
    %457 = vperm.xlu0 %456, %v65
    %v458 = vpop.permute.xlu0 %457
    %vm459 = vcmp.eq.s32.totalorder %v455, %v44
    %vm460 = vcmp.eq.s32.totalorder %v455, %v45
    %vm461 = vcmp.eq.s32.totalorder %v458, %v44
    %vm462 = vcmp.eq.s32.totalorder %v458, %v45
    %v463 = vsel %vm459, 1, 0
    %v464 = vsel %vm460, 1, 0
    %v465 = vsel %vm461, 1, 0
    %v466 = vsel %vm462, 1, 0
    %v467 = vcvt.s32.f32 %v463
    %v468 = vcvt.s32.f32 %v464
    %v469 = vcvt.s32.f32 %v465
    %v470 = vcvt.s32.f32 %v466
    %v471 = vadd.f32 %v449, %v467
    %v472 = vadd.f32 %v450, %v468
    %v473 = vadd.f32 %v451, %v469
    %v474 = vadd.f32 %v452, %v470
    %475 = vset.pattern.permute.xlu0 4
    %476 = vperm.xlu0 %475, %v88
    %v477 = vpop.permute.xlu0 %476
    %478 = vset.pattern.permute.xlu0 4
    %479 = vperm.xlu0 %478, %v89
    %v480 = vpop.permute.xlu0 %479
    %vm481 = vcmp.eq.s32.totalorder %v477, %v44
    %vm482 = vcmp.eq.s32.totalorder %v477, %v45
    %vm483 = vcmp.eq.s32.totalorder %v480, %v44
    %vm484 = vcmp.eq.s32.totalorder %v480, %v45
    %v485 = vsel %vm481, 1, 0
    %v486 = vsel %vm482, 1, 0
    %v487 = vsel %vm483, 1, 0
    %v488 = vsel %vm484, 1, 0
    %v489 = vcvt.s32.f32 %v485
    %v490 = vcvt.s32.f32 %v486
    %v491 = vcvt.s32.f32 %v487
    %v492 = vcvt.s32.f32 %v488
    %v493 = vadd.f32 %v471, %v489
    %v494 = vadd.f32 %v472, %v490
    %v495 = vadd.f32 %v473, %v491
    %v496 = vadd.f32 %v474, %v492
    %497 = vset.pattern.permute.xlu0 5
    %498 = vperm.xlu0 %497, %v112
    %v499 = vpop.permute.xlu0 %498
    %500 = vset.pattern.permute.xlu0 5
    %501 = vperm.xlu0 %500, %v113
    %v502 = vpop.permute.xlu0 %501
    %vm503 = vcmp.eq.s32.totalorder %v499, %v44
    %vm504 = vcmp.eq.s32.totalorder %v499, %v45
    %vm505 = vcmp.eq.s32.totalorder %v502, %v44
    %vm506 = vcmp.eq.s32.totalorder %v502, %v45
    %v507 = vsel %vm503, 1, 0
    %v508 = vsel %vm504, 1, 0
    %v509 = vsel %vm505, 1, 0
    %v510 = vsel %vm506, 1, 0
    %v511 = vcvt.s32.f32 %v507
    %v512 = vcvt.s32.f32 %v508
    %v513 = vcvt.s32.f32 %v509
    %v514 = vcvt.s32.f32 %v510
    %v515 = vadd.f32 %v493, %v511
    %v516 = vadd.f32 %v494, %v512
    %v517 = vadd.f32 %v495, %v513
    %v518 = vadd.f32 %v496, %v514
    %519 = vset.pattern.permute.xlu0 6
    %520 = vperm.xlu0 %519, %v136
    %v521 = vpop.permute.xlu0 %520
    %522 = vset.pattern.permute.xlu0 6
    %523 = vperm.xlu0 %522, %v137
    %v524 = vpop.permute.xlu0 %523
    %vm525 = vcmp.eq.s32.totalorder %v521, %v44
    %vm526 = vcmp.eq.s32.totalorder %v521, %v45
    %vm527 = vcmp.eq.s32.totalorder %v524, %v44
    %vm528 = vcmp.eq.s32.totalorder %v524, %v45
    %v529 = vsel %vm525, 1, 0
    %v530 = vsel %vm526, 1, 0
    %v531 = vsel %vm527, 1, 0
    %v532 = vsel %vm528, 1, 0
    %v533 = vcvt.s32.f32 %v529
    %v534 = vcvt.s32.f32 %v530
    %v535 = vcvt.s32.f32 %v531
    %v536 = vcvt.s32.f32 %v532
    %v537 = vadd.f32 %v515, %v533
    %v538 = vadd.f32 %v516, %v534
    %v539 = vadd.f32 %v517, %v535
    %v540 = vadd.f32 %v518, %v536
    %v542 = vsel %vm160, %v538, 0
    %v545 = vsel %vm160, %v540, 0
    %547 = vmatprep.subr.mxu0 0.0
    %548 = vmatpush1.msra.mxu0 %v38
    %549 = vmatprep.subr.mxu0 0.0
    %550 = vmatpush1.msra.mxu0 %v37
    %551 = vmatprep.subr.mxu0 0.0
    %552 = vmatpush1.msra.mxu0 %v36
    %553 = vmatprep.subr.mxu0 0.0
    %554 = vmatpush1.msra.mxu0 %v35
    %555 = vmatprep.subr.mxu0 0.0
    %556 = vmatpush1.msra.mxu0 %v34
    %557 = vmatprep.subr.mxu0 0.0
    %558 = vmatpush1.msra.mxu0 %v33
    %559 = vmatprep.subr.mxu0 0.0
    %560 = vmatpush1.msra.mxu0 %v32
    %561 = vmatprep.subr.mxu0 0.0
    %562 = vmatpush1.msra.mxu0 %v31
    %563 = vmatprep.subr.mxu0 0.0
    %564 = vmatpush1.msra.mxu0 %v30
    %565 = vmatprep.subr.mxu0 0.0
    %566 = vmatpush1.msra.mxu0 %v29
    %567 = vmatprep.subr.mxu0 0.0
    %568 = vmatpush1.msra.mxu0 %v28
    %569 = vmatprep.subr.mxu0 0.0
    %570 = vmatpush1.msra.mxu0 %v27
    %571 = vmatprep.subr.mxu0 0.0
    %572 = vmatpush1.msra.mxu0 %v26
    %573 = vmatprep.subr.mxu0 0.0
    %574 = vmatpush1.msra.mxu0 %v25
    %575 = vmatprep.subr.mxu0 0.0
    %576 = vmatpush1.msra.mxu0 %v24
    %577 = vmatprep.subr.mxu0 0.0
    %578 = vmatpush1.msra.mxu0 %v23
    %579 = vmatprep.subr.mxu0 0.0
    %580 = vmatpush2.msra.mxu0 0.0
    %581 = vmatprep.subr.mxu0 0.0
    %582 = vmatpush2.msra.mxu0 0.0
    %583 = vmatprep.subr.mxu0 0.0
    %584 = vmatpush2.msra.mxu0 0.0
    %585 = vmatprep.subr.mxu0 0.0
    %586 = vmatpush2.msra.mxu0 0.0
    %587 = vmatprep.subr.mxu0 0.0
    %588 = vmatpush2.msra.mxu0 0.0
    %589 = vmatprep.subr.mxu0 0.0
    %590 = vmatpush2.msra.mxu0 0.0
    %591 = vmatprep.subr.mxu0 0.0
    %592 = vmatpush2.msra.mxu0 0.0
    %593 = vmatprep.subr.mxu0 0.0
    %594 = vmatpush2.msra.mxu0 0.0
    %595 = vmatprep.subr.mxu0 0.0
    %596 = vmatpush2.msra.mxu0 0.0
    %597 = vmatprep.subr.mxu0 0.0
    %598 = vmatpush2.msra.mxu0 0.0
    %599 = vmatprep.subr.mxu0 0.0
    %600 = vmatpush2.msra.mxu0 0.0
    %601 = vmatprep.subr.mxu0 0.0
    %602 = vmatpush2.msra.mxu0 0.0
    %603 = vmatprep.subr.mxu0 0.0
    %604 = vmatpush2.msra.mxu0 %v169
    %605 = vmatprep.subr.mxu0 0.0
    %606 = vmatpush2.msra.mxu0 %v41
    %607 = vmatprep.subr.mxu0 0.0
    %608 = vmatpush2.msra.mxu0 %v40
    %609 = vmatprep.subr.mxu0 0.0
    %610 = vmatpush2.msra.mxu0 %v39
    %611 = vmatprep.mubr.f32.mxu0 %v542
    %612 = vmatmul.mubr.f32.gmra.mxu0 %v537
    %v613 = vpop.f32.mrf.mxu0
    %v614 = vadd.f32 0.0, %v613
    %v615 = vpop.f32.mrf.mxu0
    %616 = vmatprep.mubr.f32.mxu0 %v545
    %617 = vmatmul.mubr.f32.gmra.mxu0 %v539
    %v618 = vpop.f32.mrf.mxu0
    %v619 = vadd.f32 0.0, %v618
    %v620 = vpop.f32.mrf.mxu0
    %621 = vdwg.mxu0
    %v622 = vmax.f32 %v433, %v614
    %v623 = vmax.f32 %v434, %v619
    %624 = vset.pattern.permute.xlu0 3
    %625 = vperm.xlu0 %624, %v21
    %v626 = vpop.permute.xlu0 %625
    %627 = vset.pattern.permute.xlu0 3
    %628 = vperm.xlu0 %627, %v22
    %v629 = vpop.permute.xlu0 %628
    %vm630 = vcmp.eq.s32.totalorder %v626, %v44
    %vm631 = vcmp.eq.s32.totalorder %v626, %v45
    %vm632 = vcmp.eq.s32.totalorder %v629, %v44
    %vm633 = vcmp.eq.s32.totalorder %v629, %v45
    %v634 = vsel %vm630, 1, 0
    %v635 = vsel %vm631, 1, 0
    %v636 = vsel %vm632, 1, 0
    %v637 = vsel %vm633, 1, 0
    %v638 = vcvt.s32.f32 %v634
    %v639 = vcvt.s32.f32 %v635
    %v640 = vcvt.s32.f32 %v636
    %v641 = vcvt.s32.f32 %v637
    %642 = vset.pattern.permute.xlu0 4
    %643 = vperm.xlu0 %642, %v64
    %v644 = vpop.permute.xlu0 %643
    %645 = vset.pattern.permute.xlu0 4
    %646 = vperm.xlu0 %645, %v65
    %v647 = vpop.permute.xlu0 %646
    %vm648 = vcmp.eq.s32.totalorder %v644, %v44
    %vm649 = vcmp.eq.s32.totalorder %v644, %v45
    %vm650 = vcmp.eq.s32.totalorder %v647, %v44
    %vm651 = vcmp.eq.s32.totalorder %v647, %v45
    %v652 = vsel %vm648, 1, 0
    %v653 = vsel %vm649, 1, 0
    %v654 = vsel %vm650, 1, 0
    %v655 = vsel %vm651, 1, 0
    %v656 = vcvt.s32.f32 %v652
    %v657 = vcvt.s32.f32 %v653
    %v658 = vcvt.s32.f32 %v654
    %v659 = vcvt.s32.f32 %v655
    %v660 = vadd.f32 %v638, %v656
    %v661 = vadd.f32 %v639, %v657
    %v662 = vadd.f32 %v640, %v658
    %v663 = vadd.f32 %v641, %v659
    %664 = vset.pattern.permute.xlu0 5
    %665 = vperm.xlu0 %664, %v88
    %v666 = vpop.permute.xlu0 %665
    %667 = vset.pattern.permute.xlu0 5
    %668 = vperm.xlu0 %667, %v89
    %v669 = vpop.permute.xlu0 %668
    %vm670 = vcmp.eq.s32.totalorder %v666, %v44
    %vm671 = vcmp.eq.s32.totalorder %v666, %v45
    %vm672 = vcmp.eq.s32.totalorder %v669, %v44
    %vm673 = vcmp.eq.s32.totalorder %v669, %v45
    %v674 = vsel %vm670, 1, 0
    %v675 = vsel %vm671, 1, 0
    %v676 = vsel %vm672, 1, 0
    %v677 = vsel %vm673, 1, 0
    %v678 = vcvt.s32.f32 %v674
    %v679 = vcvt.s32.f32 %v675
    %v680 = vcvt.s32.f32 %v676
    %v681 = vcvt.s32.f32 %v677
    %v682 = vadd.f32 %v660, %v678
    %v683 = vadd.f32 %v661, %v679
    %v684 = vadd.f32 %v662, %v680
    %v685 = vadd.f32 %v663, %v681
    %686 = vset.pattern.permute.xlu0 6
    %687 = vperm.xlu0 %686, %v112
    %v688 = vpop.permute.xlu0 %687
    %689 = vset.pattern.permute.xlu0 6
    %690 = vperm.xlu0 %689, %v113
    %v691 = vpop.permute.xlu0 %690
    %vm692 = vcmp.eq.s32.totalorder %v688, %v44
    %vm693 = vcmp.eq.s32.totalorder %v688, %v45
    %vm694 = vcmp.eq.s32.totalorder %v691, %v44
    %vm695 = vcmp.eq.s32.totalorder %v691, %v45
    %v696 = vsel %vm692, 1, 0
    %v697 = vsel %vm693, 1, 0
    %v698 = vsel %vm694, 1, 0
    %v699 = vsel %vm695, 1, 0
    %v700 = vcvt.s32.f32 %v696
    %v701 = vcvt.s32.f32 %v697
    %v702 = vcvt.s32.f32 %v698
    %v703 = vcvt.s32.f32 %v699
    %v704 = vadd.f32 %v682, %v700
    %v705 = vadd.f32 %v683, %v701
    %v706 = vadd.f32 %v684, %v702
    %v707 = vadd.f32 %v685, %v703
    %708 = vset.pattern.permute.xlu0 7
    %709 = vperm.xlu0 %708, %v136
    %v710 = vpop.permute.xlu0 %709
    %711 = vset.pattern.permute.xlu0 7
    %712 = vperm.xlu0 %711, %v137
    %v713 = vpop.permute.xlu0 %712
    %vm714 = vcmp.eq.s32.totalorder %v710, %v44
    %vm715 = vcmp.eq.s32.totalorder %v710, %v45
    %vm716 = vcmp.eq.s32.totalorder %v713, %v44
    %vm717 = vcmp.eq.s32.totalorder %v713, %v45
    %v718 = vsel %vm714, 1, 0
    %v719 = vsel %vm715, 1, 0
    %v720 = vsel %vm716, 1, 0
    %v721 = vsel %vm717, 1, 0
    %v722 = vcvt.s32.f32 %v718
    %v723 = vcvt.s32.f32 %v719
    %v724 = vcvt.s32.f32 %v720
    %v725 = vcvt.s32.f32 %v721
    %v726 = vadd.f32 %v704, %v722
    %v727 = vadd.f32 %v705, %v723
    %v728 = vadd.f32 %v706, %v724
    %v729 = vadd.f32 %v707, %v725
    %v731 = vsel %vm160, %v727, 0
    %v734 = vsel %vm160, %v729, 0
    %736 = vmatprep.subr.mxu0 0.0
    %737 = vmatpush1.msra.mxu0 %v38
    %738 = vmatprep.subr.mxu0 0.0
    %739 = vmatpush1.msra.mxu0 %v37
    %740 = vmatprep.subr.mxu0 0.0
    %741 = vmatpush1.msra.mxu0 %v36
    %742 = vmatprep.subr.mxu0 0.0
    %743 = vmatpush1.msra.mxu0 %v35
    %744 = vmatprep.subr.mxu0 0.0
    %745 = vmatpush1.msra.mxu0 %v34
    %746 = vmatprep.subr.mxu0 0.0
    %747 = vmatpush1.msra.mxu0 %v33
    %748 = vmatprep.subr.mxu0 0.0
    %749 = vmatpush1.msra.mxu0 %v32
    %750 = vmatprep.subr.mxu0 0.0
    %751 = vmatpush1.msra.mxu0 %v31
    %752 = vmatprep.subr.mxu0 0.0
    %753 = vmatpush1.msra.mxu0 %v30
    %754 = vmatprep.subr.mxu0 0.0
    %755 = vmatpush1.msra.mxu0 %v29
    %756 = vmatprep.subr.mxu0 0.0
    %757 = vmatpush1.msra.mxu0 %v28
    %758 = vmatprep.subr.mxu0 0.0
    %759 = vmatpush1.msra.mxu0 %v27
    %760 = vmatprep.subr.mxu0 0.0
    %761 = vmatpush1.msra.mxu0 %v26
    %762 = vmatprep.subr.mxu0 0.0
    %763 = vmatpush1.msra.mxu0 %v25
    %764 = vmatprep.subr.mxu0 0.0
    %765 = vmatpush1.msra.mxu0 %v24
    %766 = vmatprep.subr.mxu0 0.0
    %767 = vmatpush1.msra.mxu0 %v23
    %768 = vmatprep.subr.mxu0 0.0
    %769 = vmatpush2.msra.mxu0 0.0
    %770 = vmatprep.subr.mxu0 0.0
    %771 = vmatpush2.msra.mxu0 0.0
    %772 = vmatprep.subr.mxu0 0.0
    %773 = vmatpush2.msra.mxu0 0.0
    %774 = vmatprep.subr.mxu0 0.0
    %775 = vmatpush2.msra.mxu0 0.0
    %776 = vmatprep.subr.mxu0 0.0
    %777 = vmatpush2.msra.mxu0 0.0
    %778 = vmatprep.subr.mxu0 0.0
    %779 = vmatpush2.msra.mxu0 0.0
    %780 = vmatprep.subr.mxu0 0.0
    %781 = vmatpush2.msra.mxu0 0.0
    %782 = vmatprep.subr.mxu0 0.0
    %783 = vmatpush2.msra.mxu0 0.0
    %784 = vmatprep.subr.mxu0 0.0
    %785 = vmatpush2.msra.mxu0 0.0
    %786 = vmatprep.subr.mxu0 0.0
    %787 = vmatpush2.msra.mxu0 0.0
    %788 = vmatprep.subr.mxu0 0.0
    %789 = vmatpush2.msra.mxu0 0.0
    %790 = vmatprep.subr.mxu0 0.0
    %791 = vmatpush2.msra.mxu0 0.0
    %792 = vmatprep.subr.mxu0 0.0
    %793 = vmatpush2.msra.mxu0 %v169
    %794 = vmatprep.subr.mxu0 0.0
    %795 = vmatpush2.msra.mxu0 %v41
    %796 = vmatprep.subr.mxu0 0.0
    %797 = vmatpush2.msra.mxu0 %v40
    %798 = vmatprep.subr.mxu0 0.0
    %799 = vmatpush2.msra.mxu0 %v39
    %800 = vmatprep.mubr.f32.mxu0 %v731
    %801 = vmatmul.mubr.f32.gmra.mxu0 %v726
    %v802 = vpop.f32.mrf.mxu0
    %v803 = vadd.f32 0.0, %v802
    %v804 = vpop.f32.mrf.mxu0
    %805 = vmatprep.mubr.f32.mxu0 %v734
    %806 = vmatmul.mubr.f32.gmra.mxu0 %v728
    %v807 = vpop.f32.mrf.mxu0
    %v808 = vadd.f32 0.0, %v807
    %v809 = vpop.f32.mrf.mxu0
    %810 = vdwg.mxu0
    %v811 = vmax.f32 %v622, %v803
    %v812 = vmax.f32 %v623, %v808
    %813 = vset.pattern.permute.xlu0 4
    %814 = vperm.xlu0 %813, %v21
    %v815 = vpop.permute.xlu0 %814
    %816 = vset.pattern.permute.xlu0 4
    %817 = vperm.xlu0 %816, %v22
    %v818 = vpop.permute.xlu0 %817
    %vm819 = vcmp.eq.s32.totalorder %v815, %v44
    %vm820 = vcmp.eq.s32.totalorder %v815, %v45
    %vm821 = vcmp.eq.s32.totalorder %v818, %v44
    %vm822 = vcmp.eq.s32.totalorder %v818, %v45
    %v823 = vsel %vm819, 1, 0
    %v824 = vsel %vm820, 1, 0
    %v825 = vsel %vm821, 1, 0
    %v826 = vsel %vm822, 1, 0
    %v827 = vcvt.s32.f32 %v823
    %v828 = vcvt.s32.f32 %v824
    %v829 = vcvt.s32.f32 %v825
    %v830 = vcvt.s32.f32 %v826
    %831 = vset.pattern.permute.xlu0 5
    %832 = vperm.xlu0 %831, %v64
    %v833 = vpop.permute.xlu0 %832
    %834 = vset.pattern.permute.xlu0 5
    %835 = vperm.xlu0 %834, %v65
    %v836 = vpop.permute.xlu0 %835
    %vm837 = vcmp.eq.s32.totalorder %v833, %v44
    %vm838 = vcmp.eq.s32.totalorder %v833, %v45
    %vm839 = vcmp.eq.s32.totalorder %v836, %v44
    %vm840 = vcmp.eq.s32.totalorder %v836, %v45
    %v841 = vsel %vm837, 1, 0
    %v842 = vsel %vm838, 1, 0
    %v843 = vsel %vm839, 1, 0
    %v844 = vsel %vm840, 1, 0
    %v845 = vcvt.s32.f32 %v841
    %v846 = vcvt.s32.f32 %v842
    %v847 = vcvt.s32.f32 %v843
    %v848 = vcvt.s32.f32 %v844
    %v849 = vadd.f32 %v827, %v845
    %v850 = vadd.f32 %v828, %v846
    %v851 = vadd.f32 %v829, %v847
    %v852 = vadd.f32 %v830, %v848
    %853 = vset.pattern.permute.xlu0 6
    %854 = vperm.xlu0 %853, %v88
    %v855 = vpop.permute.xlu0 %854
    %856 = vset.pattern.permute.xlu0 6
    %857 = vperm.xlu0 %856, %v89
    %v858 = vpop.permute.xlu0 %857
    %vm859 = vcmp.eq.s32.totalorder %v855, %v44
    %vm860 = vcmp.eq.s32.totalorder %v855, %v45
    %vm861 = vcmp.eq.s32.totalorder %v858, %v44
    %vm862 = vcmp.eq.s32.totalorder %v858, %v45
    %v863 = vsel %vm859, 1, 0
    %v864 = vsel %vm860, 1, 0
    %v865 = vsel %vm861, 1, 0
    %v866 = vsel %vm862, 1, 0
    %v867 = vcvt.s32.f32 %v863
    %v868 = vcvt.s32.f32 %v864
    %v869 = vcvt.s32.f32 %v865
    %v870 = vcvt.s32.f32 %v866
    %v871 = vadd.f32 %v849, %v867
    %v872 = vadd.f32 %v850, %v868
    %v873 = vadd.f32 %v851, %v869
    %v874 = vadd.f32 %v852, %v870
    %875 = vset.pattern.permute.xlu0 7
    %876 = vperm.xlu0 %875, %v112
    %v877 = vpop.permute.xlu0 %876
    %878 = vset.pattern.permute.xlu0 7
    %879 = vperm.xlu0 %878, %v113
    %v880 = vpop.permute.xlu0 %879
    %vm881 = vcmp.eq.s32.totalorder %v877, %v44
    %vm882 = vcmp.eq.s32.totalorder %v877, %v45
    %vm883 = vcmp.eq.s32.totalorder %v880, %v44
    %vm884 = vcmp.eq.s32.totalorder %v880, %v45
    %v885 = vsel %vm881, 1, 0
    %v886 = vsel %vm882, 1, 0
    %v887 = vsel %vm883, 1, 0
    %v888 = vsel %vm884, 1, 0
    %v889 = vcvt.s32.f32 %v885
    %v890 = vcvt.s32.f32 %v886
    %v891 = vcvt.s32.f32 %v887
    %v892 = vcvt.s32.f32 %v888
    %v893 = vadd.f32 %v871, %v889
    %v894 = vadd.f32 %v872, %v890
    %v895 = vadd.f32 %v873, %v891
    %v896 = vadd.f32 %v874, %v892
    %897 = vset.pattern.permute.xlu0 8
    %898 = vperm.xlu0 %897, %v136
    %v899 = vpop.permute.xlu0 %898
    %900 = vset.pattern.permute.xlu0 8
    %901 = vperm.xlu0 %900, %v137
    %v902 = vpop.permute.xlu0 %901
    %vm903 = vcmp.eq.s32.totalorder %v899, %v44
    %vm904 = vcmp.eq.s32.totalorder %v899, %v45
    %vm905 = vcmp.eq.s32.totalorder %v902, %v44
    %vm906 = vcmp.eq.s32.totalorder %v902, %v45
    %v907 = vsel %vm903, 1, 0
    %v908 = vsel %vm904, 1, 0
    %v909 = vsel %vm905, 1, 0
    %v910 = vsel %vm906, 1, 0
    %v911 = vcvt.s32.f32 %v907
    %v912 = vcvt.s32.f32 %v908
    %v913 = vcvt.s32.f32 %v909
    %v914 = vcvt.s32.f32 %v910
    %v915 = vadd.f32 %v893, %v911
    %v916 = vadd.f32 %v894, %v912
    %v917 = vadd.f32 %v895, %v913
    %v918 = vadd.f32 %v896, %v914
    %v920 = vsel %vm160, %v916, 0
    %v923 = vsel %vm160, %v918, 0
    %925 = vmatprep.subr.mxu0 0.0
    %926 = vmatpush1.msra.mxu0 %v38
    %927 = vmatprep.subr.mxu0 0.0
    %928 = vmatpush1.msra.mxu0 %v37
    %929 = vmatprep.subr.mxu0 0.0
    %930 = vmatpush1.msra.mxu0 %v36
    %931 = vmatprep.subr.mxu0 0.0
    %932 = vmatpush1.msra.mxu0 %v35
    %933 = vmatprep.subr.mxu0 0.0
    %934 = vmatpush1.msra.mxu0 %v34
    %935 = vmatprep.subr.mxu0 0.0
    %936 = vmatpush1.msra.mxu0 %v33
    %937 = vmatprep.subr.mxu0 0.0
    %938 = vmatpush1.msra.mxu0 %v32
    %939 = vmatprep.subr.mxu0 0.0
    %940 = vmatpush1.msra.mxu0 %v31
    %941 = vmatprep.subr.mxu0 0.0
    %942 = vmatpush1.msra.mxu0 %v30
    %943 = vmatprep.subr.mxu0 0.0
    %944 = vmatpush1.msra.mxu0 %v29
    %945 = vmatprep.subr.mxu0 0.0
    %946 = vmatpush1.msra.mxu0 %v28
    %947 = vmatprep.subr.mxu0 0.0
    %948 = vmatpush1.msra.mxu0 %v27
    %949 = vmatprep.subr.mxu0 0.0
    %950 = vmatpush1.msra.mxu0 %v26
    %951 = vmatprep.subr.mxu0 0.0
    %952 = vmatpush1.msra.mxu0 %v25
    %953 = vmatprep.subr.mxu0 0.0
    %954 = vmatpush1.msra.mxu0 %v24
    %955 = vmatprep.subr.mxu0 0.0
    %956 = vmatpush1.msra.mxu0 %v23
    %957 = vmatprep.subr.mxu0 0.0
    %958 = vmatpush2.msra.mxu0 0.0
    %959 = vmatprep.subr.mxu0 0.0
    %960 = vmatpush2.msra.mxu0 0.0
    %961 = vmatprep.subr.mxu0 0.0
    %962 = vmatpush2.msra.mxu0 0.0
    %963 = vmatprep.subr.mxu0 0.0
    %964 = vmatpush2.msra.mxu0 0.0
    %965 = vmatprep.subr.mxu0 0.0
    %966 = vmatpush2.msra.mxu0 0.0
    %967 = vmatprep.subr.mxu0 0.0
    %968 = vmatpush2.msra.mxu0 0.0
    %969 = vmatprep.subr.mxu0 0.0
    %970 = vmatpush2.msra.mxu0 0.0
    %971 = vmatprep.subr.mxu0 0.0
    %972 = vmatpush2.msra.mxu0 0.0
    %973 = vmatprep.subr.mxu0 0.0
    %974 = vmatpush2.msra.mxu0 0.0
    %975 = vmatprep.subr.mxu0 0.0
    %976 = vmatpush2.msra.mxu0 0.0
    %977 = vmatprep.subr.mxu0 0.0
    %978 = vmatpush2.msra.mxu0 0.0
    %979 = vmatprep.subr.mxu0 0.0
    %980 = vmatpush2.msra.mxu0 0.0
    %981 = vmatprep.subr.mxu0 0.0
    %982 = vmatpush2.msra.mxu0 %v169
    %983 = vmatprep.subr.mxu0 0.0
    %984 = vmatpush2.msra.mxu0 %v41
    %985 = vmatprep.subr.mxu0 0.0
    %986 = vmatpush2.msra.mxu0 %v40
    %987 = vmatprep.subr.mxu0 0.0
    %988 = vmatpush2.msra.mxu0 %v39
    %989 = vmatprep.mubr.f32.mxu0 %v920
    %990 = vmatmul.mubr.f32.gmra.mxu0 %v915
    %v991 = vpop.f32.mrf.mxu0
    %v992 = vadd.f32 0.0, %v991
    %v993 = vpop.f32.mrf.mxu0
    %994 = vmatprep.mubr.f32.mxu0 %v923
    %995 = vmatmul.mubr.f32.gmra.mxu0 %v917
    %v996 = vpop.f32.mrf.mxu0
    %v997 = vadd.f32 0.0, %v996
    %v998 = vpop.f32.mrf.mxu0
    %999 = vdwg.mxu0
    %v1000 = vmax.f32 %v811, %v992
    %v1001 = vmax.f32 %v812, %v997
    %1002 = vset.pattern.permute.xlu0 5
    %1003 = vperm.xlu0 %1002, %v21
    %v1004 = vpop.permute.xlu0 %1003
    %1005 = vset.pattern.permute.xlu0 5
    %1006 = vperm.xlu0 %1005, %v22
    %v1007 = vpop.permute.xlu0 %1006
    %vm1008 = vcmp.eq.s32.totalorder %v1004, %v44
    %vm1009 = vcmp.eq.s32.totalorder %v1004, %v45
    %vm1010 = vcmp.eq.s32.totalorder %v1007, %v44
    %vm1011 = vcmp.eq.s32.totalorder %v1007, %v45
    %v1012 = vsel %vm1008, 1, 0
    %v1013 = vsel %vm1009, 1, 0
    %v1014 = vsel %vm1010, 1, 0
    %v1015 = vsel %vm1011, 1, 0
    %v1016 = vcvt.s32.f32 %v1012
    %v1017 = vcvt.s32.f32 %v1013
    %v1018 = vcvt.s32.f32 %v1014
    %v1019 = vcvt.s32.f32 %v1015
    %1020 = vset.pattern.permute.xlu0 6
    %1021 = vperm.xlu0 %1020, %v64
    %v1022 = vpop.permute.xlu0 %1021
    %1023 = vset.pattern.permute.xlu0 6
    %1024 = vperm.xlu0 %1023, %v65
    %v1025 = vpop.permute.xlu0 %1024
    %vm1026 = vcmp.eq.s32.totalorder %v1022, %v44
    %vm1027 = vcmp.eq.s32.totalorder %v1022, %v45
    %vm1028 = vcmp.eq.s32.totalorder %v1025, %v44
    %vm1029 = vcmp.eq.s32.totalorder %v1025, %v45
    %v1030 = vsel %vm1026, 1, 0
    %v1031 = vsel %vm1027, 1, 0
    %v1032 = vsel %vm1028, 1, 0
    %v1033 = vsel %vm1029, 1, 0
    %v1034 = vcvt.s32.f32 %v1030
    %v1035 = vcvt.s32.f32 %v1031
    %v1036 = vcvt.s32.f32 %v1032
    %v1037 = vcvt.s32.f32 %v1033
    %v1038 = vadd.f32 %v1016, %v1034
    %v1039 = vadd.f32 %v1017, %v1035
    %v1040 = vadd.f32 %v1018, %v1036
    %v1041 = vadd.f32 %v1019, %v1037
    %1042 = vset.pattern.permute.xlu0 7
    %1043 = vperm.xlu0 %1042, %v88
    %v1044 = vpop.permute.xlu0 %1043
    %1045 = vset.pattern.permute.xlu0 7
    %1046 = vperm.xlu0 %1045, %v89
    %v1047 = vpop.permute.xlu0 %1046
    %vm1048 = vcmp.eq.s32.totalorder %v1044, %v44
    %vm1049 = vcmp.eq.s32.totalorder %v1044, %v45
    %vm1050 = vcmp.eq.s32.totalorder %v1047, %v44
    %vm1051 = vcmp.eq.s32.totalorder %v1047, %v45
    %v1052 = vsel %vm1048, 1, 0
    %v1053 = vsel %vm1049, 1, 0
    %v1054 = vsel %vm1050, 1, 0
    %v1055 = vsel %vm1051, 1, 0
    %v1056 = vcvt.s32.f32 %v1052
    %v1057 = vcvt.s32.f32 %v1053
    %v1058 = vcvt.s32.f32 %v1054
    %v1059 = vcvt.s32.f32 %v1055
    %v1060 = vadd.f32 %v1038, %v1056
    %v1061 = vadd.f32 %v1039, %v1057
    %v1062 = vadd.f32 %v1040, %v1058
    %v1063 = vadd.f32 %v1041, %v1059
    %1064 = vset.pattern.permute.xlu0 8
    %1065 = vperm.xlu0 %1064, %v112
    %v1066 = vpop.permute.xlu0 %1065
    %1067 = vset.pattern.permute.xlu0 8
    %1068 = vperm.xlu0 %1067, %v113
    %v1069 = vpop.permute.xlu0 %1068
    %vm1070 = vcmp.eq.s32.totalorder %v1066, %v44
    %vm1071 = vcmp.eq.s32.totalorder %v1066, %v45
    %vm1072 = vcmp.eq.s32.totalorder %v1069, %v44
    %vm1073 = vcmp.eq.s32.totalorder %v1069, %v45
    %v1074 = vsel %vm1070, 1, 0
    %v1075 = vsel %vm1071, 1, 0
    %v1076 = vsel %vm1072, 1, 0
    %v1077 = vsel %vm1073, 1, 0
    %v1078 = vcvt.s32.f32 %v1074
    %v1079 = vcvt.s32.f32 %v1075
    %v1080 = vcvt.s32.f32 %v1076
    %v1081 = vcvt.s32.f32 %v1077
    %v1082 = vadd.f32 %v1060, %v1078
    %v1083 = vadd.f32 %v1061, %v1079
    %v1084 = vadd.f32 %v1062, %v1080
    %v1085 = vadd.f32 %v1063, %v1081
    %1086 = vset.pattern.permute.xlu0 9
    %1087 = vperm.xlu0 %1086, %v136
    %v1088 = vpop.permute.xlu0 %1087
    %1089 = vset.pattern.permute.xlu0 9
    %1090 = vperm.xlu0 %1089, %v137
    %v1091 = vpop.permute.xlu0 %1090
    %vm1092 = vcmp.eq.s32.totalorder %v1088, %v44
    %vm1093 = vcmp.eq.s32.totalorder %v1088, %v45
    %vm1094 = vcmp.eq.s32.totalorder %v1091, %v44
    %vm1095 = vcmp.eq.s32.totalorder %v1091, %v45
    %v1096 = vsel %vm1092, 1, 0
    %v1097 = vsel %vm1093, 1, 0
    %v1098 = vsel %vm1094, 1, 0
    %v1099 = vsel %vm1095, 1, 0
    %v1100 = vcvt.s32.f32 %v1096
    %v1101 = vcvt.s32.f32 %v1097
    %v1102 = vcvt.s32.f32 %v1098
    %v1103 = vcvt.s32.f32 %v1099
    %v1104 = vadd.f32 %v1082, %v1100
    %v1105 = vadd.f32 %v1083, %v1101
    %v1106 = vadd.f32 %v1084, %v1102
    %v1107 = vadd.f32 %v1085, %v1103
    %v1109 = vsel %vm160, %v1105, 0
    %v1112 = vsel %vm160, %v1107, 0
    %1114 = vmatprep.subr.mxu0 0.0
    %1115 = vmatpush1.msra.mxu0 %v38
    %1116 = vmatprep.subr.mxu0 0.0
    %1117 = vmatpush1.msra.mxu0 %v37
    %1118 = vmatprep.subr.mxu0 0.0
    %1119 = vmatpush1.msra.mxu0 %v36
    %1120 = vmatprep.subr.mxu0 0.0
    %1121 = vmatpush1.msra.mxu0 %v35
    %1122 = vmatprep.subr.mxu0 0.0
    %1123 = vmatpush1.msra.mxu0 %v34
    %1124 = vmatprep.subr.mxu0 0.0
    %1125 = vmatpush1.msra.mxu0 %v33
    %1126 = vmatprep.subr.mxu0 0.0
    %1127 = vmatpush1.msra.mxu0 %v32
    %1128 = vmatprep.subr.mxu0 0.0
    %1129 = vmatpush1.msra.mxu0 %v31
    %1130 = vmatprep.subr.mxu0 0.0
    %1131 = vmatpush1.msra.mxu0 %v30
    %1132 = vmatprep.subr.mxu0 0.0
    %1133 = vmatpush1.msra.mxu0 %v29
    %1134 = vmatprep.subr.mxu0 0.0
    %1135 = vmatpush1.msra.mxu0 %v28
    %1136 = vmatprep.subr.mxu0 0.0
    %1137 = vmatpush1.msra.mxu0 %v27
    %1138 = vmatprep.subr.mxu0 0.0
    %1139 = vmatpush1.msra.mxu0 %v26
    %1140 = vmatprep.subr.mxu0 0.0
    %1141 = vmatpush1.msra.mxu0 %v25
    %1142 = vmatprep.subr.mxu0 0.0
    %1143 = vmatpush1.msra.mxu0 %v24
    %1144 = vmatprep.subr.mxu0 0.0
    %1145 = vmatpush1.msra.mxu0 %v23
    %1146 = vmatprep.subr.mxu0 0.0
    %1147 = vmatpush2.msra.mxu0 0.0
    %1148 = vmatprep.subr.mxu0 0.0
    %1149 = vmatpush2.msra.mxu0 0.0
    %1150 = vmatprep.subr.mxu0 0.0
    %1151 = vmatpush2.msra.mxu0 0.0
    %1152 = vmatprep.subr.mxu0 0.0
    %1153 = vmatpush2.msra.mxu0 0.0
    %1154 = vmatprep.subr.mxu0 0.0
    %1155 = vmatpush2.msra.mxu0 0.0
    %1156 = vmatprep.subr.mxu0 0.0
    %1157 = vmatpush2.msra.mxu0 0.0
    %1158 = vmatprep.subr.mxu0 0.0
    %1159 = vmatpush2.msra.mxu0 0.0
    %1160 = vmatprep.subr.mxu0 0.0
    %1161 = vmatpush2.msra.mxu0 0.0
    %1162 = vmatprep.subr.mxu0 0.0
    %1163 = vmatpush2.msra.mxu0 0.0
    %1164 = vmatprep.subr.mxu0 0.0
    %1165 = vmatpush2.msra.mxu0 0.0
    %1166 = vmatprep.subr.mxu0 0.0
    %1167 = vmatpush2.msra.mxu0 0.0
    %1168 = vmatprep.subr.mxu0 0.0
    %1169 = vmatpush2.msra.mxu0 0.0
    %1170 = vmatprep.subr.mxu0 0.0
    %1171 = vmatpush2.msra.mxu0 %v169
    %1172 = vmatprep.subr.mxu0 0.0
    %1173 = vmatpush2.msra.mxu0 %v41
    %1174 = vmatprep.subr.mxu0 0.0
    %1175 = vmatpush2.msra.mxu0 %v40
    %1176 = vmatprep.subr.mxu0 0.0
    %1177 = vmatpush2.msra.mxu0 %v39
    %1178 = vmatprep.mubr.f32.mxu0 %v1109
    %1179 = vmatmul.mubr.f32.gmra.mxu0 %v1104
    %v1180 = vpop.f32.mrf.mxu0
    %v1181 = vadd.f32 0.0, %v1180
    %v1182 = vpop.f32.mrf.mxu0
    %1183 = vmatprep.mubr.f32.mxu0 %v1112
    %1184 = vmatmul.mubr.f32.gmra.mxu0 %v1106
    %v1185 = vpop.f32.mrf.mxu0
    %v1186 = vadd.f32 0.0, %v1185
    %v1187 = vpop.f32.mrf.mxu0
    %1188 = vdwg.mxu0
    %v1189 = vmax.f32 %v1000, %v1181
    %v1190 = vmax.f32 %v1001, %v1186
    %1191 = vset.pattern.permute.xlu0 6
    %1192 = vperm.xlu0 %1191, %v21
    %v1193 = vpop.permute.xlu0 %1192
    %1194 = vset.pattern.permute.xlu0 6
    %1195 = vperm.xlu0 %1194, %v22
    %v1196 = vpop.permute.xlu0 %1195
    %vm1197 = vcmp.eq.s32.totalorder %v1193, %v44
    %vm1198 = vcmp.eq.s32.totalorder %v1193, %v45
    %vm1199 = vcmp.eq.s32.totalorder %v1196, %v44
    %vm1200 = vcmp.eq.s32.totalorder %v1196, %v45
    %v1201 = vsel %vm1197, 1, 0
    %v1202 = vsel %vm1198, 1, 0
    %v1203 = vsel %vm1199, 1, 0
    %v1204 = vsel %vm1200, 1, 0
    %v1205 = vcvt.s32.f32 %v1201
    %v1206 = vcvt.s32.f32 %v1202
    %v1207 = vcvt.s32.f32 %v1203
    %v1208 = vcvt.s32.f32 %v1204
    %1209 = vset.pattern.permute.xlu0 7
    %1210 = vperm.xlu0 %1209, %v64
    %v1211 = vpop.permute.xlu0 %1210
    %1212 = vset.pattern.permute.xlu0 7
    %1213 = vperm.xlu0 %1212, %v65
    %v1214 = vpop.permute.xlu0 %1213
    %vm1215 = vcmp.eq.s32.totalorder %v1211, %v44
    %vm1216 = vcmp.eq.s32.totalorder %v1211, %v45
    %vm1217 = vcmp.eq.s32.totalorder %v1214, %v44
    %vm1218 = vcmp.eq.s32.totalorder %v1214, %v45
    %v1219 = vsel %vm1215, 1, 0
    %v1220 = vsel %vm1216, 1, 0
    %v1221 = vsel %vm1217, 1, 0
    %v1222 = vsel %vm1218, 1, 0
    %v1223 = vcvt.s32.f32 %v1219
    %v1224 = vcvt.s32.f32 %v1220
    %v1225 = vcvt.s32.f32 %v1221
    %v1226 = vcvt.s32.f32 %v1222
    %v1227 = vadd.f32 %v1205, %v1223
    %v1228 = vadd.f32 %v1206, %v1224
    %v1229 = vadd.f32 %v1207, %v1225
    %v1230 = vadd.f32 %v1208, %v1226
    %1231 = vset.pattern.permute.xlu0 8
    %1232 = vperm.xlu0 %1231, %v88
    %v1233 = vpop.permute.xlu0 %1232
    %1234 = vset.pattern.permute.xlu0 8
    %1235 = vperm.xlu0 %1234, %v89
    %v1236 = vpop.permute.xlu0 %1235
    %vm1237 = vcmp.eq.s32.totalorder %v1233, %v44
    %vm1238 = vcmp.eq.s32.totalorder %v1233, %v45
    %vm1239 = vcmp.eq.s32.totalorder %v1236, %v44
    %vm1240 = vcmp.eq.s32.totalorder %v1236, %v45
    %v1241 = vsel %vm1237, 1, 0
    %v1242 = vsel %vm1238, 1, 0
    %v1243 = vsel %vm1239, 1, 0
    %v1244 = vsel %vm1240, 1, 0
    %v1245 = vcvt.s32.f32 %v1241
    %v1246 = vcvt.s32.f32 %v1242
    %v1247 = vcvt.s32.f32 %v1243
    %v1248 = vcvt.s32.f32 %v1244
    %v1249 = vadd.f32 %v1227, %v1245
    %v1250 = vadd.f32 %v1228, %v1246
    %v1251 = vadd.f32 %v1229, %v1247
    %v1252 = vadd.f32 %v1230, %v1248
    %1253 = vset.pattern.permute.xlu0 9
    %1254 = vperm.xlu0 %1253, %v112
    %v1255 = vpop.permute.xlu0 %1254
    %1256 = vset.pattern.permute.xlu0 9
    %1257 = vperm.xlu0 %1256, %v113
    %v1258 = vpop.permute.xlu0 %1257
    %vm1259 = vcmp.eq.s32.totalorder %v1255, %v44
    %vm1260 = vcmp.eq.s32.totalorder %v1255, %v45
    %vm1261 = vcmp.eq.s32.totalorder %v1258, %v44
    %vm1262 = vcmp.eq.s32.totalorder %v1258, %v45
    %v1263 = vsel %vm1259, 1, 0
    %v1264 = vsel %vm1260, 1, 0
    %v1265 = vsel %vm1261, 1, 0
    %v1266 = vsel %vm1262, 1, 0
    %v1267 = vcvt.s32.f32 %v1263
    %v1268 = vcvt.s32.f32 %v1264
    %v1269 = vcvt.s32.f32 %v1265
    %v1270 = vcvt.s32.f32 %v1266
    %v1271 = vadd.f32 %v1249, %v1267
    %v1272 = vadd.f32 %v1250, %v1268
    %v1273 = vadd.f32 %v1251, %v1269
    %v1274 = vadd.f32 %v1252, %v1270
    %1275 = vset.pattern.permute.xlu0 10
    %1276 = vperm.xlu0 %1275, %v136
    %v1277 = vpop.permute.xlu0 %1276
    %1278 = vset.pattern.permute.xlu0 10
    %1279 = vperm.xlu0 %1278, %v137
    %v1280 = vpop.permute.xlu0 %1279
    %vm1281 = vcmp.eq.s32.totalorder %v1277, %v44
    %vm1282 = vcmp.eq.s32.totalorder %v1277, %v45
    %vm1283 = vcmp.eq.s32.totalorder %v1280, %v44
    %vm1284 = vcmp.eq.s32.totalorder %v1280, %v45
    %v1285 = vsel %vm1281, 1, 0
    %v1286 = vsel %vm1282, 1, 0
    %v1287 = vsel %vm1283, 1, 0
    %v1288 = vsel %vm1284, 1, 0
    %v1289 = vcvt.s32.f32 %v1285
    %v1290 = vcvt.s32.f32 %v1286
    %v1291 = vcvt.s32.f32 %v1287
    %v1292 = vcvt.s32.f32 %v1288
    %v1293 = vadd.f32 %v1271, %v1289
    %v1294 = vadd.f32 %v1272, %v1290
    %v1295 = vadd.f32 %v1273, %v1291
    %v1296 = vadd.f32 %v1274, %v1292
    %v1298 = vsel %vm160, %v1294, 0
    %v1301 = vsel %vm160, %v1296, 0
    %1303 = vmatprep.subr.mxu0 0.0
    %1304 = vmatpush1.msra.mxu0 %v38
    %1305 = vmatprep.subr.mxu0 0.0
    %1306 = vmatpush1.msra.mxu0 %v37
    %1307 = vmatprep.subr.mxu0 0.0
    %1308 = vmatpush1.msra.mxu0 %v36
    %1309 = vmatprep.subr.mxu0 0.0
    %1310 = vmatpush1.msra.mxu0 %v35
    %1311 = vmatprep.subr.mxu0 0.0
    %1312 = vmatpush1.msra.mxu0 %v34
    %1313 = vmatprep.subr.mxu0 0.0
    %1314 = vmatpush1.msra.mxu0 %v33
    %1315 = vmatprep.subr.mxu0 0.0
    %1316 = vmatpush1.msra.mxu0 %v32
    %1317 = vmatprep.subr.mxu0 0.0
    %1318 = vmatpush1.msra.mxu0 %v31
    %1319 = vmatprep.subr.mxu0 0.0
    %1320 = vmatpush1.msra.mxu0 %v30
    %1321 = vmatprep.subr.mxu0 0.0
    %1322 = vmatpush1.msra.mxu0 %v29
    %1323 = vmatprep.subr.mxu0 0.0
    %1324 = vmatpush1.msra.mxu0 %v28
    %1325 = vmatprep.subr.mxu0 0.0
    %1326 = vmatpush1.msra.mxu0 %v27
    %1327 = vmatprep.subr.mxu0 0.0
    %1328 = vmatpush1.msra.mxu0 %v26
    %1329 = vmatprep.subr.mxu0 0.0
    %1330 = vmatpush1.msra.mxu0 %v25
    %1331 = vmatprep.subr.mxu0 0.0
    %1332 = vmatpush1.msra.mxu0 %v24
    %1333 = vmatprep.subr.mxu0 0.0
    %1334 = vmatpush1.msra.mxu0 %v23
    %1335 = vmatprep.subr.mxu0 0.0
    %1336 = vmatpush2.msra.mxu0 0.0
    %1337 = vmatprep.subr.mxu0 0.0
    %1338 = vmatpush2.msra.mxu0 0.0
    %1339 = vmatprep.subr.mxu0 0.0
    %1340 = vmatpush2.msra.mxu0 0.0
    %1341 = vmatprep.subr.mxu0 0.0
    %1342 = vmatpush2.msra.mxu0 0.0
    %1343 = vmatprep.subr.mxu0 0.0
    %1344 = vmatpush2.msra.mxu0 0.0
    %1345 = vmatprep.subr.mxu0 0.0
    %1346 = vmatpush2.msra.mxu0 0.0
    %1347 = vmatprep.subr.mxu0 0.0
    %1348 = vmatpush2.msra.mxu0 0.0
    %1349 = vmatprep.subr.mxu0 0.0
    %1350 = vmatpush2.msra.mxu0 0.0
    %1351 = vmatprep.subr.mxu0 0.0
    %1352 = vmatpush2.msra.mxu0 0.0
    %1353 = vmatprep.subr.mxu0 0.0
    %1354 = vmatpush2.msra.mxu0 0.0
    %1355 = vmatprep.subr.mxu0 0.0
    %1356 = vmatpush2.msra.mxu0 0.0
    %1357 = vmatprep.subr.mxu0 0.0
    %1358 = vmatpush2.msra.mxu0 0.0
    %1359 = vmatprep.subr.mxu0 0.0
    %1360 = vmatpush2.msra.mxu0 %v169
    %1361 = vmatprep.subr.mxu0 0.0
    %1362 = vmatpush2.msra.mxu0 %v41
    %1363 = vmatprep.subr.mxu0 0.0
    %1364 = vmatpush2.msra.mxu0 %v40
    %1365 = vmatprep.subr.mxu0 0.0
    %1366 = vmatpush2.msra.mxu0 %v39
    %1367 = vmatprep.mubr.f32.mxu0 %v1298
    %1368 = vmatmul.mubr.f32.gmra.mxu0 %v1293
    %v1369 = vpop.f32.mrf.mxu0
    %v1370 = vadd.f32 0.0, %v1369
    %v1371 = vpop.f32.mrf.mxu0
    %1372 = vmatprep.mubr.f32.mxu0 %v1301
    %1373 = vmatmul.mubr.f32.gmra.mxu0 %v1295
    %v1374 = vpop.f32.mrf.mxu0
    %v1375 = vadd.f32 0.0, %v1374
    %v1376 = vpop.f32.mrf.mxu0
    %1377 = vdwg.mxu0
    %v1378 = vmax.f32 %v1189, %v1370
    %v1379 = vmax.f32 %v1190, %v1375
    %1380 = vset.pattern.permute.xlu0 7
    %1381 = vperm.xlu0 %1380, %v21
    %v1382 = vpop.permute.xlu0 %1381
    %1383 = vset.pattern.permute.xlu0 7
    %1384 = vperm.xlu0 %1383, %v22
    %v1385 = vpop.permute.xlu0 %1384
    %vm1386 = vcmp.eq.s32.totalorder %v1382, %v44
    %vm1387 = vcmp.eq.s32.totalorder %v1382, %v45
    %vm1388 = vcmp.eq.s32.totalorder %v1385, %v44
    %vm1389 = vcmp.eq.s32.totalorder %v1385, %v45
    %v1390 = vsel %vm1386, 1, 0
    %v1391 = vsel %vm1387, 1, 0
    %v1392 = vsel %vm1388, 1, 0
    %v1393 = vsel %vm1389, 1, 0
    %v1394 = vcvt.s32.f32 %v1390
    %v1395 = vcvt.s32.f32 %v1391
    %v1396 = vcvt.s32.f32 %v1392
    %v1397 = vcvt.s32.f32 %v1393
    %1398 = vset.pattern.permute.xlu0 8
    %1399 = vperm.xlu0 %1398, %v64
    %v1400 = vpop.permute.xlu0 %1399
    %1401 = vset.pattern.permute.xlu0 8
    %1402 = vperm.xlu0 %1401, %v65
    %v1403 = vpop.permute.xlu0 %1402
    %vm1404 = vcmp.eq.s32.totalorder %v1400, %v44
    %vm1405 = vcmp.eq.s32.totalorder %v1400, %v45
    %vm1406 = vcmp.eq.s32.totalorder %v1403, %v44
    %vm1407 = vcmp.eq.s32.totalorder %v1403, %v45
    %v1408 = vsel %vm1404, 1, 0
    %v1409 = vsel %vm1405, 1, 0
    %v1410 = vsel %vm1406, 1, 0
    %v1411 = vsel %vm1407, 1, 0
    %v1412 = vcvt.s32.f32 %v1408
    %v1413 = vcvt.s32.f32 %v1409
    %v1414 = vcvt.s32.f32 %v1410
    %v1415 = vcvt.s32.f32 %v1411
    %v1416 = vadd.f32 %v1394, %v1412
    %v1417 = vadd.f32 %v1395, %v1413
    %v1418 = vadd.f32 %v1396, %v1414
    %v1419 = vadd.f32 %v1397, %v1415
    %1420 = vset.pattern.permute.xlu0 9
    %1421 = vperm.xlu0 %1420, %v88
    %v1422 = vpop.permute.xlu0 %1421
    %1423 = vset.pattern.permute.xlu0 9
    %1424 = vperm.xlu0 %1423, %v89
    %v1425 = vpop.permute.xlu0 %1424
    %vm1426 = vcmp.eq.s32.totalorder %v1422, %v44
    %vm1427 = vcmp.eq.s32.totalorder %v1422, %v45
    %vm1428 = vcmp.eq.s32.totalorder %v1425, %v44
    %vm1429 = vcmp.eq.s32.totalorder %v1425, %v45
    %v1430 = vsel %vm1426, 1, 0
    %v1431 = vsel %vm1427, 1, 0
    %v1432 = vsel %vm1428, 1, 0
    %v1433 = vsel %vm1429, 1, 0
    %v1434 = vcvt.s32.f32 %v1430
    %v1435 = vcvt.s32.f32 %v1431
    %v1436 = vcvt.s32.f32 %v1432
    %v1437 = vcvt.s32.f32 %v1433
    %v1438 = vadd.f32 %v1416, %v1434
    %v1439 = vadd.f32 %v1417, %v1435
    %v1440 = vadd.f32 %v1418, %v1436
    %v1441 = vadd.f32 %v1419, %v1437
    %1442 = vset.pattern.permute.xlu0 10
    %1443 = vperm.xlu0 %1442, %v112
    %v1444 = vpop.permute.xlu0 %1443
    %1445 = vset.pattern.permute.xlu0 10
    %1446 = vperm.xlu0 %1445, %v113
    %v1447 = vpop.permute.xlu0 %1446
    %vm1448 = vcmp.eq.s32.totalorder %v1444, %v44
    %vm1449 = vcmp.eq.s32.totalorder %v1444, %v45
    %vm1450 = vcmp.eq.s32.totalorder %v1447, %v44
    %vm1451 = vcmp.eq.s32.totalorder %v1447, %v45
    %v1452 = vsel %vm1448, 1, 0
    %v1453 = vsel %vm1449, 1, 0
    %v1454 = vsel %vm1450, 1, 0
    %v1455 = vsel %vm1451, 1, 0
    %v1456 = vcvt.s32.f32 %v1452
    %v1457 = vcvt.s32.f32 %v1453
    %v1458 = vcvt.s32.f32 %v1454
    %v1459 = vcvt.s32.f32 %v1455
    %v1460 = vadd.f32 %v1438, %v1456
    %v1461 = vadd.f32 %v1439, %v1457
    %v1462 = vadd.f32 %v1440, %v1458
    %v1463 = vadd.f32 %v1441, %v1459
    %1464 = vset.pattern.permute.xlu0 11
    %1465 = vperm.xlu0 %1464, %v136
    %v1466 = vpop.permute.xlu0 %1465
    %1467 = vset.pattern.permute.xlu0 11
    %1468 = vperm.xlu0 %1467, %v137
    %v1469 = vpop.permute.xlu0 %1468
    %vm1470 = vcmp.eq.s32.totalorder %v1466, %v44
    %vm1471 = vcmp.eq.s32.totalorder %v1466, %v45
    %vm1472 = vcmp.eq.s32.totalorder %v1469, %v44
    %vm1473 = vcmp.eq.s32.totalorder %v1469, %v45
    %v1474 = vsel %vm1470, 1, 0
    %v1475 = vsel %vm1471, 1, 0
    %v1476 = vsel %vm1472, 1, 0
    %v1477 = vsel %vm1473, 1, 0
    %v1478 = vcvt.s32.f32 %v1474
    %v1479 = vcvt.s32.f32 %v1475
    %v1480 = vcvt.s32.f32 %v1476
    %v1481 = vcvt.s32.f32 %v1477
    %v1482 = vadd.f32 %v1460, %v1478
    %v1483 = vadd.f32 %v1461, %v1479
    %v1484 = vadd.f32 %v1462, %v1480
    %v1485 = vadd.f32 %v1463, %v1481
    %v1487 = vsel %vm160, %v1483, 0
    %v1490 = vsel %vm160, %v1485, 0
    %1492 = vmatprep.subr.mxu0 0.0
    %1493 = vmatpush1.msra.mxu0 %v38
    %1494 = vmatprep.subr.mxu0 0.0
    %1495 = vmatpush1.msra.mxu0 %v37
    %1496 = vmatprep.subr.mxu0 0.0
    %1497 = vmatpush1.msra.mxu0 %v36
    %1498 = vmatprep.subr.mxu0 0.0
    %1499 = vmatpush1.msra.mxu0 %v35
    %1500 = vmatprep.subr.mxu0 0.0
    %1501 = vmatpush1.msra.mxu0 %v34
    %1502 = vmatprep.subr.mxu0 0.0
    %1503 = vmatpush1.msra.mxu0 %v33
    %1504 = vmatprep.subr.mxu0 0.0
    %1505 = vmatpush1.msra.mxu0 %v32
    %1506 = vmatprep.subr.mxu0 0.0
    %1507 = vmatpush1.msra.mxu0 %v31
    %1508 = vmatprep.subr.mxu0 0.0
    %1509 = vmatpush1.msra.mxu0 %v30
    %1510 = vmatprep.subr.mxu0 0.0
    %1511 = vmatpush1.msra.mxu0 %v29
    %1512 = vmatprep.subr.mxu0 0.0
    %1513 = vmatpush1.msra.mxu0 %v28
    %1514 = vmatprep.subr.mxu0 0.0
    %1515 = vmatpush1.msra.mxu0 %v27
    %1516 = vmatprep.subr.mxu0 0.0
    %1517 = vmatpush1.msra.mxu0 %v26
    %1518 = vmatprep.subr.mxu0 0.0
    %1519 = vmatpush1.msra.mxu0 %v25
    %1520 = vmatprep.subr.mxu0 0.0
    %1521 = vmatpush1.msra.mxu0 %v24
    %1522 = vmatprep.subr.mxu0 0.0
    %1523 = vmatpush1.msra.mxu0 %v23
    %1524 = vmatprep.subr.mxu0 0.0
    %1525 = vmatpush2.msra.mxu0 0.0
    %1526 = vmatprep.subr.mxu0 0.0
    %1527 = vmatpush2.msra.mxu0 0.0
    %1528 = vmatprep.subr.mxu0 0.0
    %1529 = vmatpush2.msra.mxu0 0.0
    %1530 = vmatprep.subr.mxu0 0.0
    %1531 = vmatpush2.msra.mxu0 0.0
    %1532 = vmatprep.subr.mxu0 0.0
    %1533 = vmatpush2.msra.mxu0 0.0
    %1534 = vmatprep.subr.mxu0 0.0
    %1535 = vmatpush2.msra.mxu0 0.0
    %1536 = vmatprep.subr.mxu0 0.0
    %1537 = vmatpush2.msra.mxu0 0.0
    %1538 = vmatprep.subr.mxu0 0.0
    %1539 = vmatpush2.msra.mxu0 0.0
    %1540 = vmatprep.subr.mxu0 0.0
    %1541 = vmatpush2.msra.mxu0 0.0
    %1542 = vmatprep.subr.mxu0 0.0
    %1543 = vmatpush2.msra.mxu0 0.0
    %1544 = vmatprep.subr.mxu0 0.0
    %1545 = vmatpush2.msra.mxu0 0.0
    %1546 = vmatprep.subr.mxu0 0.0
    %1547 = vmatpush2.msra.mxu0 0.0
    %1548 = vmatprep.subr.mxu0 0.0
    %1549 = vmatpush2.msra.mxu0 %v169
    %1550 = vmatprep.subr.mxu0 0.0
    %1551 = vmatpush2.msra.mxu0 %v41
    %1552 = vmatprep.subr.mxu0 0.0
    %1553 = vmatpush2.msra.mxu0 %v40
    %1554 = vmatprep.subr.mxu0 0.0
    %1555 = vmatpush2.msra.mxu0 %v39
    %1556 = vmatprep.mubr.f32.mxu0 %v1487
    %1557 = vmatmul.mubr.f32.gmra.mxu0 %v1482
    %v1558 = vpop.f32.mrf.mxu0
    %v1559 = vadd.f32 0.0, %v1558
    %v1560 = vpop.f32.mrf.mxu0
    %1561 = vmatprep.mubr.f32.mxu0 %v1490
    %1562 = vmatmul.mubr.f32.gmra.mxu0 %v1484
    %v1563 = vpop.f32.mrf.mxu0
    %v1564 = vadd.f32 0.0, %v1563
    %v1565 = vpop.f32.mrf.mxu0
    %1566 = vdwg.mxu0
    %v1567 = vmax.f32 %v1378, %v1559
    %v1568 = vmax.f32 %v1379, %v1564
    %1569 = vset.pattern.permute.xlu0 8
    %1570 = vperm.xlu0 %1569, %v21
    %v1571 = vpop.permute.xlu0 %1570
    %1572 = vset.pattern.permute.xlu0 8
    %1573 = vperm.xlu0 %1572, %v22
    %v1574 = vpop.permute.xlu0 %1573
    %vm1575 = vcmp.eq.s32.totalorder %v1571, %v44
    %vm1576 = vcmp.eq.s32.totalorder %v1571, %v45
    %vm1577 = vcmp.eq.s32.totalorder %v1574, %v44
    %vm1578 = vcmp.eq.s32.totalorder %v1574, %v45
    %v1579 = vsel %vm1575, 1, 0
    %v1580 = vsel %vm1576, 1, 0
    %v1581 = vsel %vm1577, 1, 0
    %v1582 = vsel %vm1578, 1, 0
    %v1583 = vcvt.s32.f32 %v1579
    %v1584 = vcvt.s32.f32 %v1580
    %v1585 = vcvt.s32.f32 %v1581
    %v1586 = vcvt.s32.f32 %v1582
    %1587 = vset.pattern.permute.xlu0 9
    %1588 = vperm.xlu0 %1587, %v64
    %v1589 = vpop.permute.xlu0 %1588
    %1590 = vset.pattern.permute.xlu0 9
    %1591 = vperm.xlu0 %1590, %v65
    %v1592 = vpop.permute.xlu0 %1591
    %vm1593 = vcmp.eq.s32.totalorder %v1589, %v44
    %vm1594 = vcmp.eq.s32.totalorder %v1589, %v45
    %vm1595 = vcmp.eq.s32.totalorder %v1592, %v44
    %vm1596 = vcmp.eq.s32.totalorder %v1592, %v45
    %v1597 = vsel %vm1593, 1, 0
    %v1598 = vsel %vm1594, 1, 0
    %v1599 = vsel %vm1595, 1, 0
    %v1600 = vsel %vm1596, 1, 0
    %v1601 = vcvt.s32.f32 %v1597
    %v1602 = vcvt.s32.f32 %v1598
    %v1603 = vcvt.s32.f32 %v1599
    %v1604 = vcvt.s32.f32 %v1600
    %v1605 = vadd.f32 %v1583, %v1601
    %v1606 = vadd.f32 %v1584, %v1602
    %v1607 = vadd.f32 %v1585, %v1603
    %v1608 = vadd.f32 %v1586, %v1604
    %1609 = vset.pattern.permute.xlu0 10
    %1610 = vperm.xlu0 %1609, %v88
    %v1611 = vpop.permute.xlu0 %1610
    %1612 = vset.pattern.permute.xlu0 10
    %1613 = vperm.xlu0 %1612, %v89
    %v1614 = vpop.permute.xlu0 %1613
    %vm1615 = vcmp.eq.s32.totalorder %v1611, %v44
    %vm1616 = vcmp.eq.s32.totalorder %v1611, %v45
    %vm1617 = vcmp.eq.s32.totalorder %v1614, %v44
    %vm1618 = vcmp.eq.s32.totalorder %v1614, %v45
    %v1619 = vsel %vm1615, 1, 0
    %v1620 = vsel %vm1616, 1, 0
    %v1621 = vsel %vm1617, 1, 0
    %v1622 = vsel %vm1618, 1, 0
    %v1623 = vcvt.s32.f32 %v1619
    %v1624 = vcvt.s32.f32 %v1620
    %v1625 = vcvt.s32.f32 %v1621
    %v1626 = vcvt.s32.f32 %v1622
    %v1627 = vadd.f32 %v1605, %v1623
    %v1628 = vadd.f32 %v1606, %v1624
    %v1629 = vadd.f32 %v1607, %v1625
    %v1630 = vadd.f32 %v1608, %v1626
    %1631 = vset.pattern.permute.xlu0 11
    %1632 = vperm.xlu0 %1631, %v112
    %v1633 = vpop.permute.xlu0 %1632
    %1634 = vset.pattern.permute.xlu0 11
    %1635 = vperm.xlu0 %1634, %v113
    %v1636 = vpop.permute.xlu0 %1635
    %vm1637 = vcmp.eq.s32.totalorder %v1633, %v44
    %vm1638 = vcmp.eq.s32.totalorder %v1633, %v45
    %vm1639 = vcmp.eq.s32.totalorder %v1636, %v44
    %vm1640 = vcmp.eq.s32.totalorder %v1636, %v45
    %v1641 = vsel %vm1637, 1, 0
    %v1642 = vsel %vm1638, 1, 0
    %v1643 = vsel %vm1639, 1, 0
    %v1644 = vsel %vm1640, 1, 0
    %v1645 = vcvt.s32.f32 %v1641
    %v1646 = vcvt.s32.f32 %v1642
    %v1647 = vcvt.s32.f32 %v1643
    %v1648 = vcvt.s32.f32 %v1644
    %v1649 = vadd.f32 %v1627, %v1645
    %v1650 = vadd.f32 %v1628, %v1646
    %v1651 = vadd.f32 %v1629, %v1647
    %v1652 = vadd.f32 %v1630, %v1648
    %1653 = vset.pattern.permute.xlu0 12
    %1654 = vperm.xlu0 %1653, %v136
    %v1655 = vpop.permute.xlu0 %1654
    %1656 = vset.pattern.permute.xlu0 12
    %1657 = vperm.xlu0 %1656, %v137
    %v1658 = vpop.permute.xlu0 %1657
    %vm1659 = vcmp.eq.s32.totalorder %v1655, %v44
    %vm1660 = vcmp.eq.s32.totalorder %v1655, %v45
    %vm1661 = vcmp.eq.s32.totalorder %v1658, %v44
    %vm1662 = vcmp.eq.s32.totalorder %v1658, %v45
    %v1663 = vsel %vm1659, 1, 0
    %v1664 = vsel %vm1660, 1, 0
    %v1665 = vsel %vm1661, 1, 0
    %v1666 = vsel %vm1662, 1, 0
    %v1667 = vcvt.s32.f32 %v1663
    %v1668 = vcvt.s32.f32 %v1664
    %v1669 = vcvt.s32.f32 %v1665
    %v1670 = vcvt.s32.f32 %v1666
    %v1671 = vadd.f32 %v1649, %v1667
    %v1672 = vadd.f32 %v1650, %v1668
    %v1673 = vadd.f32 %v1651, %v1669
    %v1674 = vadd.f32 %v1652, %v1670
    %v1676 = vsel %vm160, %v1672, 0
    %v1679 = vsel %vm160, %v1674, 0
    %1681 = vmatprep.subr.mxu0 0.0
    %1682 = vmatpush1.msra.mxu0 %v38
    %1683 = vmatprep.subr.mxu0 0.0
    %1684 = vmatpush1.msra.mxu0 %v37
    %1685 = vmatprep.subr.mxu0 0.0
    %1686 = vmatpush1.msra.mxu0 %v36
    %1687 = vmatprep.subr.mxu0 0.0
    %1688 = vmatpush1.msra.mxu0 %v35
    %1689 = vmatprep.subr.mxu0 0.0
    %1690 = vmatpush1.msra.mxu0 %v34
    %1691 = vmatprep.subr.mxu0 0.0
    %1692 = vmatpush1.msra.mxu0 %v33
    %1693 = vmatprep.subr.mxu0 0.0
    %1694 = vmatpush1.msra.mxu0 %v32
    %1695 = vmatprep.subr.mxu0 0.0
    %1696 = vmatpush1.msra.mxu0 %v31
    %1697 = vmatprep.subr.mxu0 0.0
    %1698 = vmatpush1.msra.mxu0 %v30
    %1699 = vmatprep.subr.mxu0 0.0
    %1700 = vmatpush1.msra.mxu0 %v29
    %1701 = vmatprep.subr.mxu0 0.0
    %1702 = vmatpush1.msra.mxu0 %v28
    %1703 = vmatprep.subr.mxu0 0.0
    %1704 = vmatpush1.msra.mxu0 %v27
    %1705 = vmatprep.subr.mxu0 0.0
    %1706 = vmatpush1.msra.mxu0 %v26
    %1707 = vmatprep.subr.mxu0 0.0
    %1708 = vmatpush1.msra.mxu0 %v25
    %1709 = vmatprep.subr.mxu0 0.0
    %1710 = vmatpush1.msra.mxu0 %v24
    %1711 = vmatprep.subr.mxu0 0.0
    %1712 = vmatpush1.msra.mxu0 %v23
    %1713 = vmatprep.subr.mxu0 0.0
    %1714 = vmatpush2.msra.mxu0 0.0
    %1715 = vmatprep.subr.mxu0 0.0
    %1716 = vmatpush2.msra.mxu0 0.0
    %1717 = vmatprep.subr.mxu0 0.0
    %1718 = vmatpush2.msra.mxu0 0.0
    %1719 = vmatprep.subr.mxu0 0.0
    %1720 = vmatpush2.msra.mxu0 0.0
    %1721 = vmatprep.subr.mxu0 0.0
    %1722 = vmatpush2.msra.mxu0 0.0
    %1723 = vmatprep.subr.mxu0 0.0
    %1724 = vmatpush2.msra.mxu0 0.0
    %1725 = vmatprep.subr.mxu0 0.0
    %1726 = vmatpush2.msra.mxu0 0.0
    %1727 = vmatprep.subr.mxu0 0.0
    %1728 = vmatpush2.msra.mxu0 0.0
    %1729 = vmatprep.subr.mxu0 0.0
    %1730 = vmatpush2.msra.mxu0 0.0
    %1731 = vmatprep.subr.mxu0 0.0
    %1732 = vmatpush2.msra.mxu0 0.0
    %1733 = vmatprep.subr.mxu0 0.0
    %1734 = vmatpush2.msra.mxu0 0.0
    %1735 = vmatprep.subr.mxu0 0.0
    %1736 = vmatpush2.msra.mxu0 0.0
    %1737 = vmatprep.subr.mxu0 0.0
    %1738 = vmatpush2.msra.mxu0 %v169
    %1739 = vmatprep.subr.mxu0 0.0
    %1740 = vmatpush2.msra.mxu0 %v41
    %1741 = vmatprep.subr.mxu0 0.0
    %1742 = vmatpush2.msra.mxu0 %v40
    %1743 = vmatprep.subr.mxu0 0.0
    %1744 = vmatpush2.msra.mxu0 %v39
    %1745 = vmatprep.mubr.f32.mxu0 %v1676
    %1746 = vmatmul.mubr.f32.gmra.mxu0 %v1671
    %v1747 = vpop.f32.mrf.mxu0
    %v1748 = vadd.f32 0.0, %v1747
    %v1749 = vpop.f32.mrf.mxu0
    %1750 = vmatprep.mubr.f32.mxu0 %v1679
    %1751 = vmatmul.mubr.f32.gmra.mxu0 %v1673
    %v1752 = vpop.f32.mrf.mxu0
    %v1753 = vadd.f32 0.0, %v1752
    %v1754 = vpop.f32.mrf.mxu0
    %1755 = vdwg.mxu0
    %v1756 = vmax.f32 %v1567, %v1748
    %v1757 = vmax.f32 %v1568, %v1753
    %1758 = vset.pattern.permute.xlu0 9
    %1759 = vperm.xlu0 %1758, %v21
    %v1760 = vpop.permute.xlu0 %1759
    %1761 = vset.pattern.permute.xlu0 9
    %1762 = vperm.xlu0 %1761, %v22
    %v1763 = vpop.permute.xlu0 %1762
    %vm1764 = vcmp.eq.s32.totalorder %v1760, %v44
    %vm1765 = vcmp.eq.s32.totalorder %v1760, %v45
    %vm1766 = vcmp.eq.s32.totalorder %v1763, %v44
    %vm1767 = vcmp.eq.s32.totalorder %v1763, %v45
    %v1768 = vsel %vm1764, 1, 0
    %v1769 = vsel %vm1765, 1, 0
    %v1770 = vsel %vm1766, 1, 0
    %v1771 = vsel %vm1767, 1, 0
    %v1772 = vcvt.s32.f32 %v1768
    %v1773 = vcvt.s32.f32 %v1769
    %v1774 = vcvt.s32.f32 %v1770
    %v1775 = vcvt.s32.f32 %v1771
    %1776 = vset.pattern.permute.xlu0 10
    %1777 = vperm.xlu0 %1776, %v64
    %v1778 = vpop.permute.xlu0 %1777
    %1779 = vset.pattern.permute.xlu0 10
    %1780 = vperm.xlu0 %1779, %v65
    %v1781 = vpop.permute.xlu0 %1780
    %vm1782 = vcmp.eq.s32.totalorder %v1778, %v44
    %vm1783 = vcmp.eq.s32.totalorder %v1778, %v45
    %vm1784 = vcmp.eq.s32.totalorder %v1781, %v44
    %vm1785 = vcmp.eq.s32.totalorder %v1781, %v45
    %v1786 = vsel %vm1782, 1, 0
    %v1787 = vsel %vm1783, 1, 0
    %v1788 = vsel %vm1784, 1, 0
    %v1789 = vsel %vm1785, 1, 0
    %v1790 = vcvt.s32.f32 %v1786
    %v1791 = vcvt.s32.f32 %v1787
    %v1792 = vcvt.s32.f32 %v1788
    %v1793 = vcvt.s32.f32 %v1789
    %v1794 = vadd.f32 %v1772, %v1790
    %v1795 = vadd.f32 %v1773, %v1791
    %v1796 = vadd.f32 %v1774, %v1792
    %v1797 = vadd.f32 %v1775, %v1793
    %1798 = vset.pattern.permute.xlu0 11
    %1799 = vperm.xlu0 %1798, %v88
    %v1800 = vpop.permute.xlu0 %1799
    %1801 = vset.pattern.permute.xlu0 11
    %1802 = vperm.xlu0 %1801, %v89
    %v1803 = vpop.permute.xlu0 %1802
    %vm1804 = vcmp.eq.s32.totalorder %v1800, %v44
    %vm1805 = vcmp.eq.s32.totalorder %v1800, %v45
    %vm1806 = vcmp.eq.s32.totalorder %v1803, %v44
    %vm1807 = vcmp.eq.s32.totalorder %v1803, %v45
    %v1808 = vsel %vm1804, 1, 0
    %v1809 = vsel %vm1805, 1, 0
    %v1810 = vsel %vm1806, 1, 0
    %v1811 = vsel %vm1807, 1, 0
    %v1812 = vcvt.s32.f32 %v1808
    %v1813 = vcvt.s32.f32 %v1809
    %v1814 = vcvt.s32.f32 %v1810
    %v1815 = vcvt.s32.f32 %v1811
    %v1816 = vadd.f32 %v1794, %v1812
    %v1817 = vadd.f32 %v1795, %v1813
    %v1818 = vadd.f32 %v1796, %v1814
    %v1819 = vadd.f32 %v1797, %v1815
    %1820 = vset.pattern.permute.xlu0 12
    %1821 = vperm.xlu0 %1820, %v112
    %v1822 = vpop.permute.xlu0 %1821
    %1823 = vset.pattern.permute.xlu0 12
    %1824 = vperm.xlu0 %1823, %v113
    %v1825 = vpop.permute.xlu0 %1824
    %vm1826 = vcmp.eq.s32.totalorder %v1822, %v44
    %vm1827 = vcmp.eq.s32.totalorder %v1822, %v45
    %vm1828 = vcmp.eq.s32.totalorder %v1825, %v44
    %vm1829 = vcmp.eq.s32.totalorder %v1825, %v45
    %v1830 = vsel %vm1826, 1, 0
    %v1831 = vsel %vm1827, 1, 0
    %v1832 = vsel %vm1828, 1, 0
    %v1833 = vsel %vm1829, 1, 0
    %v1834 = vcvt.s32.f32 %v1830
    %v1835 = vcvt.s32.f32 %v1831
    %v1836 = vcvt.s32.f32 %v1832
    %v1837 = vcvt.s32.f32 %v1833
    %v1838 = vadd.f32 %v1816, %v1834
    %v1839 = vadd.f32 %v1817, %v1835
    %v1840 = vadd.f32 %v1818, %v1836
    %v1841 = vadd.f32 %v1819, %v1837
    %1842 = vset.pattern.permute.xlu0 13
    %1843 = vperm.xlu0 %1842, %v136
    %v1844 = vpop.permute.xlu0 %1843
    %1845 = vset.pattern.permute.xlu0 13
    %1846 = vperm.xlu0 %1845, %v137
    %v1847 = vpop.permute.xlu0 %1846
    %vm1848 = vcmp.eq.s32.totalorder %v1844, %v44
    %vm1849 = vcmp.eq.s32.totalorder %v1844, %v45
    %vm1850 = vcmp.eq.s32.totalorder %v1847, %v44
    %vm1851 = vcmp.eq.s32.totalorder %v1847, %v45
    %v1852 = vsel %vm1848, 1, 0
    %v1853 = vsel %vm1849, 1, 0
    %v1854 = vsel %vm1850, 1, 0
    %v1855 = vsel %vm1851, 1, 0
    %v1856 = vcvt.s32.f32 %v1852
    %v1857 = vcvt.s32.f32 %v1853
    %v1858 = vcvt.s32.f32 %v1854
    %v1859 = vcvt.s32.f32 %v1855
    %v1860 = vadd.f32 %v1838, %v1856
    %v1861 = vadd.f32 %v1839, %v1857
    %v1862 = vadd.f32 %v1840, %v1858
    %v1863 = vadd.f32 %v1841, %v1859
    %v1865 = vsel %vm160, %v1861, 0
    %v1868 = vsel %vm160, %v1863, 0
    %1870 = vmatprep.subr.mxu0 0.0
    %1871 = vmatpush1.msra.mxu0 %v38
    %1872 = vmatprep.subr.mxu0 0.0
    %1873 = vmatpush1.msra.mxu0 %v37
    %1874 = vmatprep.subr.mxu0 0.0
    %1875 = vmatpush1.msra.mxu0 %v36
    %1876 = vmatprep.subr.mxu0 0.0
    %1877 = vmatpush1.msra.mxu0 %v35
    %1878 = vmatprep.subr.mxu0 0.0
    %1879 = vmatpush1.msra.mxu0 %v34
    %1880 = vmatprep.subr.mxu0 0.0
    %1881 = vmatpush1.msra.mxu0 %v33
    %1882 = vmatprep.subr.mxu0 0.0
    %1883 = vmatpush1.msra.mxu0 %v32
    %1884 = vmatprep.subr.mxu0 0.0
    %1885 = vmatpush1.msra.mxu0 %v31
    %1886 = vmatprep.subr.mxu0 0.0
    %1887 = vmatpush1.msra.mxu0 %v30
    %1888 = vmatprep.subr.mxu0 0.0
    %1889 = vmatpush1.msra.mxu0 %v29
    %1890 = vmatprep.subr.mxu0 0.0
    %1891 = vmatpush1.msra.mxu0 %v28
    %1892 = vmatprep.subr.mxu0 0.0
    %1893 = vmatpush1.msra.mxu0 %v27
    %1894 = vmatprep.subr.mxu0 0.0
    %1895 = vmatpush1.msra.mxu0 %v26
    %1896 = vmatprep.subr.mxu0 0.0
    %1897 = vmatpush1.msra.mxu0 %v25
    %1898 = vmatprep.subr.mxu0 0.0
    %1899 = vmatpush1.msra.mxu0 %v24
    %1900 = vmatprep.subr.mxu0 0.0
    %1901 = vmatpush1.msra.mxu0 %v23
    %1902 = vmatprep.subr.mxu0 0.0
    %1903 = vmatpush2.msra.mxu0 0.0
    %1904 = vmatprep.subr.mxu0 0.0
    %1905 = vmatpush2.msra.mxu0 0.0
    %1906 = vmatprep.subr.mxu0 0.0
    %1907 = vmatpush2.msra.mxu0 0.0
    %1908 = vmatprep.subr.mxu0 0.0
    %1909 = vmatpush2.msra.mxu0 0.0
    %1910 = vmatprep.subr.mxu0 0.0
    %1911 = vmatpush2.msra.mxu0 0.0
    %1912 = vmatprep.subr.mxu0 0.0
    %1913 = vmatpush2.msra.mxu0 0.0
    %1914 = vmatprep.subr.mxu0 0.0
    %1915 = vmatpush2.msra.mxu0 0.0
    %1916 = vmatprep.subr.mxu0 0.0
    %1917 = vmatpush2.msra.mxu0 0.0
    %1918 = vmatprep.subr.mxu0 0.0
    %1919 = vmatpush2.msra.mxu0 0.0
    %1920 = vmatprep.subr.mxu0 0.0
    %1921 = vmatpush2.msra.mxu0 0.0
    %1922 = vmatprep.subr.mxu0 0.0
    %1923 = vmatpush2.msra.mxu0 0.0
    %1924 = vmatprep.subr.mxu0 0.0
    %1925 = vmatpush2.msra.mxu0 0.0
    %1926 = vmatprep.subr.mxu0 0.0
    %1927 = vmatpush2.msra.mxu0 %v169
    %1928 = vmatprep.subr.mxu0 0.0
    %1929 = vmatpush2.msra.mxu0 %v41
    %1930 = vmatprep.subr.mxu0 0.0
    %1931 = vmatpush2.msra.mxu0 %v40
    %1932 = vmatprep.subr.mxu0 0.0
    %1933 = vmatpush2.msra.mxu0 %v39
    %1934 = vmatprep.mubr.f32.mxu0 %v1865
    %1935 = vmatmul.mubr.f32.gmra.mxu0 %v1860
    %v1936 = vpop.f32.mrf.mxu0
    %v1937 = vadd.f32 0.0, %v1936
    %v1938 = vpop.f32.mrf.mxu0
    %1939 = vmatprep.mubr.f32.mxu0 %v1868
    %1940 = vmatmul.mubr.f32.gmra.mxu0 %v1862
    %v1941 = vpop.f32.mrf.mxu0
    %v1942 = vadd.f32 0.0, %v1941
    %v1943 = vpop.f32.mrf.mxu0
    %1944 = vdwg.mxu0
    %v1945 = vmax.f32 %v1756, %v1937
    %v1946 = vmax.f32 %v1757, %v1942
    %1947 = vset.pattern.permute.xlu0 10
    %1948 = vperm.xlu0 %1947, %v21
    %v1949 = vpop.permute.xlu0 %1948
    %1950 = vset.pattern.permute.xlu0 10
    %1951 = vperm.xlu0 %1950, %v22
    %v1952 = vpop.permute.xlu0 %1951
    %vm1953 = vcmp.eq.s32.totalorder %v1949, %v44
    %vm1954 = vcmp.eq.s32.totalorder %v1949, %v45
    %vm1955 = vcmp.eq.s32.totalorder %v1952, %v44
    %vm1956 = vcmp.eq.s32.totalorder %v1952, %v45
    %v1957 = vsel %vm1953, 1, 0
    %v1958 = vsel %vm1954, 1, 0
    %v1959 = vsel %vm1955, 1, 0
    %v1960 = vsel %vm1956, 1, 0
    %v1961 = vcvt.s32.f32 %v1957
    %v1962 = vcvt.s32.f32 %v1958
    %v1963 = vcvt.s32.f32 %v1959
    %v1964 = vcvt.s32.f32 %v1960
    %1965 = vset.pattern.permute.xlu0 11
    %1966 = vperm.xlu0 %1965, %v64
    %v1967 = vpop.permute.xlu0 %1966
    %1968 = vset.pattern.permute.xlu0 11
    %1969 = vperm.xlu0 %1968, %v65
    %v1970 = vpop.permute.xlu0 %1969
    %vm1971 = vcmp.eq.s32.totalorder %v1967, %v44
    %vm1972 = vcmp.eq.s32.totalorder %v1967, %v45
    %vm1973 = vcmp.eq.s32.totalorder %v1970, %v44
    %vm1974 = vcmp.eq.s32.totalorder %v1970, %v45
    %v1975 = vsel %vm1971, 1, 0
    %v1976 = vsel %vm1972, 1, 0
    %v1977 = vsel %vm1973, 1, 0
    %v1978 = vsel %vm1974, 1, 0
    %v1979 = vcvt.s32.f32 %v1975
    %v1980 = vcvt.s32.f32 %v1976
    %v1981 = vcvt.s32.f32 %v1977
    %v1982 = vcvt.s32.f32 %v1978
    %v1983 = vadd.f32 %v1961, %v1979
    %v1984 = vadd.f32 %v1962, %v1980
    %v1985 = vadd.f32 %v1963, %v1981
    %v1986 = vadd.f32 %v1964, %v1982
    %1987 = vset.pattern.permute.xlu0 12
    %1988 = vperm.xlu0 %1987, %v88
    %v1989 = vpop.permute.xlu0 %1988
    %1990 = vset.pattern.permute.xlu0 12
    %1991 = vperm.xlu0 %1990, %v89
    %v1992 = vpop.permute.xlu0 %1991
    %vm1993 = vcmp.eq.s32.totalorder %v1989, %v44
    %vm1994 = vcmp.eq.s32.totalorder %v1989, %v45
    %vm1995 = vcmp.eq.s32.totalorder %v1992, %v44
    %vm1996 = vcmp.eq.s32.totalorder %v1992, %v45
    %v1997 = vsel %vm1993, 1, 0
    %v1998 = vsel %vm1994, 1, 0
    %v1999 = vsel %vm1995, 1, 0
    %v2000 = vsel %vm1996, 1, 0
    %v2001 = vcvt.s32.f32 %v1997
    %v2002 = vcvt.s32.f32 %v1998
    %v2003 = vcvt.s32.f32 %v1999
    %v2004 = vcvt.s32.f32 %v2000
    %v2005 = vadd.f32 %v1983, %v2001
    %v2006 = vadd.f32 %v1984, %v2002
    %v2007 = vadd.f32 %v1985, %v2003
    %v2008 = vadd.f32 %v1986, %v2004
    %2009 = vset.pattern.permute.xlu0 13
    %2010 = vperm.xlu0 %2009, %v112
    %v2011 = vpop.permute.xlu0 %2010
    %2012 = vset.pattern.permute.xlu0 13
    %2013 = vperm.xlu0 %2012, %v113
    %v2014 = vpop.permute.xlu0 %2013
    %vm2015 = vcmp.eq.s32.totalorder %v2011, %v44
    %vm2016 = vcmp.eq.s32.totalorder %v2011, %v45
    %vm2017 = vcmp.eq.s32.totalorder %v2014, %v44
    %vm2018 = vcmp.eq.s32.totalorder %v2014, %v45
    %v2019 = vsel %vm2015, 1, 0
    %v2020 = vsel %vm2016, 1, 0
    %v2021 = vsel %vm2017, 1, 0
    %v2022 = vsel %vm2018, 1, 0
    %v2023 = vcvt.s32.f32 %v2019
    %v2024 = vcvt.s32.f32 %v2020
    %v2025 = vcvt.s32.f32 %v2021
    %v2026 = vcvt.s32.f32 %v2022
    %v2027 = vadd.f32 %v2005, %v2023
    %v2028 = vadd.f32 %v2006, %v2024
    %v2029 = vadd.f32 %v2007, %v2025
    %v2030 = vadd.f32 %v2008, %v2026
    %2031 = vset.pattern.permute.xlu0 14
    %2032 = vperm.xlu0 %2031, %v136
    %v2033 = vpop.permute.xlu0 %2032
    %2034 = vset.pattern.permute.xlu0 14
    %2035 = vperm.xlu0 %2034, %v137
    %v2036 = vpop.permute.xlu0 %2035
    %vm2037 = vcmp.eq.s32.totalorder %v2033, %v44
    %vm2038 = vcmp.eq.s32.totalorder %v2033, %v45
    %vm2039 = vcmp.eq.s32.totalorder %v2036, %v44
    %vm2040 = vcmp.eq.s32.totalorder %v2036, %v45
    %v2041 = vsel %vm2037, 1, 0
    %v2042 = vsel %vm2038, 1, 0
    %v2043 = vsel %vm2039, 1, 0
    %v2044 = vsel %vm2040, 1, 0
    %v2045 = vcvt.s32.f32 %v2041
    %v2046 = vcvt.s32.f32 %v2042
    %v2047 = vcvt.s32.f32 %v2043
    %v2048 = vcvt.s32.f32 %v2044
    %v2049 = vadd.f32 %v2027, %v2045
    %v2050 = vadd.f32 %v2028, %v2046
    %v2051 = vadd.f32 %v2029, %v2047
    %v2052 = vadd.f32 %v2030, %v2048
    %v2054 = vsel %vm160, %v2050, 0
    %v2057 = vsel %vm160, %v2052, 0
    %2059 = vmatprep.subr.mxu0 0.0
    %2060 = vmatpush1.msra.mxu0 %v38
    %2061 = vmatprep.subr.mxu0 0.0
    %2062 = vmatpush1.msra.mxu0 %v37
    %2063 = vmatprep.subr.mxu0 0.0
    %2064 = vmatpush1.msra.mxu0 %v36
    %2065 = vmatprep.subr.mxu0 0.0
    %2066 = vmatpush1.msra.mxu0 %v35
    %2067 = vmatprep.subr.mxu0 0.0
    %2068 = vmatpush1.msra.mxu0 %v34
    %2069 = vmatprep.subr.mxu0 0.0
    %2070 = vmatpush1.msra.mxu0 %v33
    %2071 = vmatprep.subr.mxu0 0.0
    %2072 = vmatpush1.msra.mxu0 %v32
    %2073 = vmatprep.subr.mxu0 0.0
    %2074 = vmatpush1.msra.mxu0 %v31
    %2075 = vmatprep.subr.mxu0 0.0
    %2076 = vmatpush1.msra.mxu0 %v30
    %2077 = vmatprep.subr.mxu0 0.0
    %2078 = vmatpush1.msra.mxu0 %v29
    %2079 = vmatprep.subr.mxu0 0.0
    %2080 = vmatpush1.msra.mxu0 %v28
    %2081 = vmatprep.subr.mxu0 0.0
    %2082 = vmatpush1.msra.mxu0 %v27
    %2083 = vmatprep.subr.mxu0 0.0
    %2084 = vmatpush1.msra.mxu0 %v26
    %2085 = vmatprep.subr.mxu0 0.0
    %2086 = vmatpush1.msra.mxu0 %v25
    %2087 = vmatprep.subr.mxu0 0.0
    %2088 = vmatpush1.msra.mxu0 %v24
    %2089 = vmatprep.subr.mxu0 0.0
    %2090 = vmatpush1.msra.mxu0 %v23
    %2091 = vmatprep.subr.mxu0 0.0
    %2092 = vmatpush2.msra.mxu0 0.0
    %2093 = vmatprep.subr.mxu0 0.0
    %2094 = vmatpush2.msra.mxu0 0.0
    %2095 = vmatprep.subr.mxu0 0.0
    %2096 = vmatpush2.msra.mxu0 0.0
    %2097 = vmatprep.subr.mxu0 0.0
    %2098 = vmatpush2.msra.mxu0 0.0
    %2099 = vmatprep.subr.mxu0 0.0
    %2100 = vmatpush2.msra.mxu0 0.0
    %2101 = vmatprep.subr.mxu0 0.0
    %2102 = vmatpush2.msra.mxu0 0.0
    %2103 = vmatprep.subr.mxu0 0.0
    %2104 = vmatpush2.msra.mxu0 0.0
    %2105 = vmatprep.subr.mxu0 0.0
    %2106 = vmatpush2.msra.mxu0 0.0
    %2107 = vmatprep.subr.mxu0 0.0
    %2108 = vmatpush2.msra.mxu0 0.0
    %2109 = vmatprep.subr.mxu0 0.0
    %2110 = vmatpush2.msra.mxu0 0.0
    %2111 = vmatprep.subr.mxu0 0.0
    %2112 = vmatpush2.msra.mxu0 0.0
    %2113 = vmatprep.subr.mxu0 0.0
    %2114 = vmatpush2.msra.mxu0 0.0
    %2115 = vmatprep.subr.mxu0 0.0
    %2116 = vmatpush2.msra.mxu0 %v169
    %2117 = vmatprep.subr.mxu0 0.0
    %2118 = vmatpush2.msra.mxu0 %v41
    %2119 = vmatprep.subr.mxu0 0.0
    %2120 = vmatpush2.msra.mxu0 %v40
    %2121 = vmatprep.subr.mxu0 0.0
    %2122 = vmatpush2.msra.mxu0 %v39
    %2123 = vmatprep.mubr.f32.mxu0 %v2054
    %2124 = vmatmul.mubr.f32.gmra.mxu0 %v2049
    %v2125 = vpop.f32.mrf.mxu0
    %v2126 = vadd.f32 0.0, %v2125
    %v2127 = vpop.f32.mrf.mxu0
    %2128 = vmatprep.mubr.f32.mxu0 %v2057
    %2129 = vmatmul.mubr.f32.gmra.mxu0 %v2051
    %v2130 = vpop.f32.mrf.mxu0
    %v2131 = vadd.f32 0.0, %v2130
    %v2132 = vpop.f32.mrf.mxu0
    %2133 = vdwg.mxu0
    %v2134 = vmax.f32 %v1945, %v2126
    %v2135 = vmax.f32 %v1946, %v2131
    %2136 = vset.pattern.permute.xlu0 11
    %2137 = vperm.xlu0 %2136, %v21
    %v2138 = vpop.permute.xlu0 %2137
    %2139 = vset.pattern.permute.xlu0 11
    %2140 = vperm.xlu0 %2139, %v22
    %v2141 = vpop.permute.xlu0 %2140
    %vm2142 = vcmp.eq.s32.totalorder %v2138, %v44
    %vm2143 = vcmp.eq.s32.totalorder %v2138, %v45
    %vm2144 = vcmp.eq.s32.totalorder %v2141, %v44
    %vm2145 = vcmp.eq.s32.totalorder %v2141, %v45
    %v2146 = vsel %vm2142, 1, 0
    %v2147 = vsel %vm2143, 1, 0
    %v2148 = vsel %vm2144, 1, 0
    %v2149 = vsel %vm2145, 1, 0
    %v2150 = vcvt.s32.f32 %v2146
    %v2151 = vcvt.s32.f32 %v2147
    %v2152 = vcvt.s32.f32 %v2148
    %v2153 = vcvt.s32.f32 %v2149
    %2154 = vset.pattern.permute.xlu0 12
    %2155 = vperm.xlu0 %2154, %v64
    %v2156 = vpop.permute.xlu0 %2155
    %2157 = vset.pattern.permute.xlu0 12
    %2158 = vperm.xlu0 %2157, %v65
    %v2159 = vpop.permute.xlu0 %2158
    %vm2160 = vcmp.eq.s32.totalorder %v2156, %v44
    %vm2161 = vcmp.eq.s32.totalorder %v2156, %v45
    %vm2162 = vcmp.eq.s32.totalorder %v2159, %v44
    %vm2163 = vcmp.eq.s32.totalorder %v2159, %v45
    %v2164 = vsel %vm2160, 1, 0
    %v2165 = vsel %vm2161, 1, 0
    %v2166 = vsel %vm2162, 1, 0
    %v2167 = vsel %vm2163, 1, 0
    %v2168 = vcvt.s32.f32 %v2164
    %v2169 = vcvt.s32.f32 %v2165
    %v2170 = vcvt.s32.f32 %v2166
    %v2171 = vcvt.s32.f32 %v2167
    %v2172 = vadd.f32 %v2150, %v2168
    %v2173 = vadd.f32 %v2151, %v2169
    %v2174 = vadd.f32 %v2152, %v2170
    %v2175 = vadd.f32 %v2153, %v2171
    %2176 = vset.pattern.permute.xlu0 13
    %2177 = vperm.xlu0 %2176, %v88
    %v2178 = vpop.permute.xlu0 %2177
    %2179 = vset.pattern.permute.xlu0 13
    %2180 = vperm.xlu0 %2179, %v89
    %v2181 = vpop.permute.xlu0 %2180
    %vm2182 = vcmp.eq.s32.totalorder %v2178, %v44
    %vm2183 = vcmp.eq.s32.totalorder %v2178, %v45
    %vm2184 = vcmp.eq.s32.totalorder %v2181, %v44
    %vm2185 = vcmp.eq.s32.totalorder %v2181, %v45
    %v2186 = vsel %vm2182, 1, 0
    %v2187 = vsel %vm2183, 1, 0
    %v2188 = vsel %vm2184, 1, 0
    %v2189 = vsel %vm2185, 1, 0
    %v2190 = vcvt.s32.f32 %v2186
    %v2191 = vcvt.s32.f32 %v2187
    %v2192 = vcvt.s32.f32 %v2188
    %v2193 = vcvt.s32.f32 %v2189
    %v2194 = vadd.f32 %v2172, %v2190
    %v2195 = vadd.f32 %v2173, %v2191
    %v2196 = vadd.f32 %v2174, %v2192
    %v2197 = vadd.f32 %v2175, %v2193
    %2198 = vset.pattern.permute.xlu0 14
    %2199 = vperm.xlu0 %2198, %v112
    %v2200 = vpop.permute.xlu0 %2199
    %2201 = vset.pattern.permute.xlu0 14
    %2202 = vperm.xlu0 %2201, %v113
    %v2203 = vpop.permute.xlu0 %2202
    %vm2204 = vcmp.eq.s32.totalorder %v2200, %v44
    %vm2205 = vcmp.eq.s32.totalorder %v2200, %v45
    %vm2206 = vcmp.eq.s32.totalorder %v2203, %v44
    %vm2207 = vcmp.eq.s32.totalorder %v2203, %v45
    %v2208 = vsel %vm2204, 1, 0
    %v2209 = vsel %vm2205, 1, 0
    %v2210 = vsel %vm2206, 1, 0
    %v2211 = vsel %vm2207, 1, 0
    %v2212 = vcvt.s32.f32 %v2208
    %v2213 = vcvt.s32.f32 %v2209
    %v2214 = vcvt.s32.f32 %v2210
    %v2215 = vcvt.s32.f32 %v2211
    %v2216 = vadd.f32 %v2194, %v2212
    %v2217 = vadd.f32 %v2195, %v2213
    %v2218 = vadd.f32 %v2196, %v2214
    %v2219 = vadd.f32 %v2197, %v2215
    %2220 = vset.pattern.permute.xlu0 15
    %2221 = vperm.xlu0 %2220, %v136
    %v2222 = vpop.permute.xlu0 %2221
    %2223 = vset.pattern.permute.xlu0 15
    %2224 = vperm.xlu0 %2223, %v137
    %v2225 = vpop.permute.xlu0 %2224
    %vm2226 = vcmp.eq.s32.totalorder %v2222, %v44
    %vm2227 = vcmp.eq.s32.totalorder %v2222, %v45
    %vm2228 = vcmp.eq.s32.totalorder %v2225, %v44
    %vm2229 = vcmp.eq.s32.totalorder %v2225, %v45
    %v2230 = vsel %vm2226, 1, 0
    %v2231 = vsel %vm2227, 1, 0
    %v2232 = vsel %vm2228, 1, 0
    %v2233 = vsel %vm2229, 1, 0
    %v2234 = vcvt.s32.f32 %v2230
    %v2235 = vcvt.s32.f32 %v2231
    %v2236 = vcvt.s32.f32 %v2232
    %v2237 = vcvt.s32.f32 %v2233
    %v2238 = vadd.f32 %v2216, %v2234
    %v2239 = vadd.f32 %v2217, %v2235
    %v2240 = vadd.f32 %v2218, %v2236
    %v2241 = vadd.f32 %v2219, %v2237
    %v2243 = vsel %vm160, %v2239, 0
    %v2246 = vsel %vm160, %v2241, 0
    %2248 = vmatprep.subr.mxu0 0.0
    %2249 = vmatpush1.msra.mxu0 %v38
    %2250 = vmatprep.subr.mxu0 0.0
    %2251 = vmatpush1.msra.mxu0 %v37
    %2252 = vmatprep.subr.mxu0 0.0
    %2253 = vmatpush1.msra.mxu0 %v36
    %2254 = vmatprep.subr.mxu0 0.0
    %2255 = vmatpush1.msra.mxu0 %v35
    %2256 = vmatprep.subr.mxu0 0.0
    %2257 = vmatpush1.msra.mxu0 %v34
    %2258 = vmatprep.subr.mxu0 0.0
    %2259 = vmatpush1.msra.mxu0 %v33
    %2260 = vmatprep.subr.mxu0 0.0
    %2261 = vmatpush1.msra.mxu0 %v32
    %2262 = vmatprep.subr.mxu0 0.0
    %2263 = vmatpush1.msra.mxu0 %v31
    %2264 = vmatprep.subr.mxu0 0.0
    %2265 = vmatpush1.msra.mxu0 %v30
    %2266 = vmatprep.subr.mxu0 0.0
    %2267 = vmatpush1.msra.mxu0 %v29
    %2268 = vmatprep.subr.mxu0 0.0
    %2269 = vmatpush1.msra.mxu0 %v28
    %2270 = vmatprep.subr.mxu0 0.0
    %2271 = vmatpush1.msra.mxu0 %v27
    %2272 = vmatprep.subr.mxu0 0.0
    %2273 = vmatpush1.msra.mxu0 %v26
    %2274 = vmatprep.subr.mxu0 0.0
    %2275 = vmatpush1.msra.mxu0 %v25
    %2276 = vmatprep.subr.mxu0 0.0
    %2277 = vmatpush1.msra.mxu0 %v24
    %2278 = vmatprep.subr.mxu0 0.0
    %2279 = vmatpush1.msra.mxu0 %v23
    %2280 = vmatprep.subr.mxu0 0.0
    %2281 = vmatpush2.msra.mxu0 0.0
    %2282 = vmatprep.subr.mxu0 0.0
    %2283 = vmatpush2.msra.mxu0 0.0
    %2284 = vmatprep.subr.mxu0 0.0
    %2285 = vmatpush2.msra.mxu0 0.0
    %2286 = vmatprep.subr.mxu0 0.0
    %2287 = vmatpush2.msra.mxu0 0.0
    %2288 = vmatprep.subr.mxu0 0.0
    %2289 = vmatpush2.msra.mxu0 0.0
    %2290 = vmatprep.subr.mxu0 0.0
    %2291 = vmatpush2.msra.mxu0 0.0
    %2292 = vmatprep.subr.mxu0 0.0
    %2293 = vmatpush2.msra.mxu0 0.0
    %2294 = vmatprep.subr.mxu0 0.0
    %2295 = vmatpush2.msra.mxu0 0.0
    %2296 = vmatprep.subr.mxu0 0.0
    %2297 = vmatpush2.msra.mxu0 0.0
    %2298 = vmatprep.subr.mxu0 0.0
    %2299 = vmatpush2.msra.mxu0 0.0
    %2300 = vmatprep.subr.mxu0 0.0
    %2301 = vmatpush2.msra.mxu0 0.0
    %2302 = vmatprep.subr.mxu0 0.0
    %2303 = vmatpush2.msra.mxu0 0.0
    %2304 = vmatprep.subr.mxu0 0.0
    %2305 = vmatpush2.msra.mxu0 %v169
    %2306 = vmatprep.subr.mxu0 0.0
    %2307 = vmatpush2.msra.mxu0 %v41
    %2308 = vmatprep.subr.mxu0 0.0
    %2309 = vmatpush2.msra.mxu0 %v40
    %2310 = vmatprep.subr.mxu0 0.0
    %2311 = vmatpush2.msra.mxu0 %v39
    %2312 = vmatprep.mubr.f32.mxu0 %v2243
    %2313 = vmatmul.mubr.f32.gmra.mxu0 %v2238
    %v2314 = vpop.f32.mrf.mxu0
    %v2315 = vadd.f32 0.0, %v2314
    %v2316 = vpop.f32.mrf.mxu0
    %2317 = vmatprep.mubr.f32.mxu0 %v2246
    %2318 = vmatmul.mubr.f32.gmra.mxu0 %v2240
    %v2319 = vpop.f32.mrf.mxu0
    %v2320 = vadd.f32 0.0, %v2319
    %v2321 = vpop.f32.mrf.mxu0
    %2322 = vdwg.mxu0
    %v2323 = vmax.f32 %v2134, %v2315
    %v2324 = vmax.f32 %v2135, %v2320
    %2325 = vset.pattern.permute.xlu0 12
    %2326 = vperm.xlu0 %2325, %v21
    %v2327 = vpop.permute.xlu0 %2326
    %2328 = vset.pattern.permute.xlu0 12
    %2329 = vperm.xlu0 %2328, %v22
    %v2330 = vpop.permute.xlu0 %2329
    %vm2331 = vcmp.eq.s32.totalorder %v2327, %v44
    %vm2332 = vcmp.eq.s32.totalorder %v2327, %v45
    %vm2333 = vcmp.eq.s32.totalorder %v2330, %v44
    %vm2334 = vcmp.eq.s32.totalorder %v2330, %v45
    %v2335 = vsel %vm2331, 1, 0
    %v2336 = vsel %vm2332, 1, 0
    %v2337 = vsel %vm2333, 1, 0
    %v2338 = vsel %vm2334, 1, 0
    %v2339 = vcvt.s32.f32 %v2335
    %v2340 = vcvt.s32.f32 %v2336
    %v2341 = vcvt.s32.f32 %v2337
    %v2342 = vcvt.s32.f32 %v2338
    %2343 = vset.pattern.permute.xlu0 13
    %2344 = vperm.xlu0 %2343, %v64
    %v2345 = vpop.permute.xlu0 %2344
    %2346 = vset.pattern.permute.xlu0 13
    %2347 = vperm.xlu0 %2346, %v65
    %v2348 = vpop.permute.xlu0 %2347
    %vm2349 = vcmp.eq.s32.totalorder %v2345, %v44
    %vm2350 = vcmp.eq.s32.totalorder %v2345, %v45
    %vm2351 = vcmp.eq.s32.totalorder %v2348, %v44
    %vm2352 = vcmp.eq.s32.totalorder %v2348, %v45
    %v2353 = vsel %vm2349, 1, 0
    %v2354 = vsel %vm2350, 1, 0
    %v2355 = vsel %vm2351, 1, 0
    %v2356 = vsel %vm2352, 1, 0
    %v2357 = vcvt.s32.f32 %v2353
    %v2358 = vcvt.s32.f32 %v2354
    %v2359 = vcvt.s32.f32 %v2355
    %v2360 = vcvt.s32.f32 %v2356
    %v2361 = vadd.f32 %v2339, %v2357
    %v2362 = vadd.f32 %v2340, %v2358
    %v2363 = vadd.f32 %v2341, %v2359
    %v2364 = vadd.f32 %v2342, %v2360
    %2365 = vset.pattern.permute.xlu0 14
    %2366 = vperm.xlu0 %2365, %v88
    %v2367 = vpop.permute.xlu0 %2366
    %2368 = vset.pattern.permute.xlu0 14
    %2369 = vperm.xlu0 %2368, %v89
    %v2370 = vpop.permute.xlu0 %2369
    %vm2371 = vcmp.eq.s32.totalorder %v2367, %v44
    %vm2372 = vcmp.eq.s32.totalorder %v2367, %v45
    %vm2373 = vcmp.eq.s32.totalorder %v2370, %v44
    %vm2374 = vcmp.eq.s32.totalorder %v2370, %v45
    %v2375 = vsel %vm2371, 1, 0
    %v2376 = vsel %vm2372, 1, 0
    %v2377 = vsel %vm2373, 1, 0
    %v2378 = vsel %vm2374, 1, 0
    %v2379 = vcvt.s32.f32 %v2375
    %v2380 = vcvt.s32.f32 %v2376
    %v2381 = vcvt.s32.f32 %v2377
    %v2382 = vcvt.s32.f32 %v2378
    %v2383 = vadd.f32 %v2361, %v2379
    %v2384 = vadd.f32 %v2362, %v2380
    %v2385 = vadd.f32 %v2363, %v2381
    %v2386 = vadd.f32 %v2364, %v2382
    %2387 = vset.pattern.permute.xlu0 15
    %2388 = vperm.xlu0 %2387, %v112
    %v2389 = vpop.permute.xlu0 %2388
    %2390 = vset.pattern.permute.xlu0 15
    %2391 = vperm.xlu0 %2390, %v113
    %v2392 = vpop.permute.xlu0 %2391
    %vm2393 = vcmp.eq.s32.totalorder %v2389, %v44
    %vm2394 = vcmp.eq.s32.totalorder %v2389, %v45
    %vm2395 = vcmp.eq.s32.totalorder %v2392, %v44
    %vm2396 = vcmp.eq.s32.totalorder %v2392, %v45
    %v2397 = vsel %vm2393, 1, 0
    %v2398 = vsel %vm2394, 1, 0
    %v2399 = vsel %vm2395, 1, 0
    %v2400 = vsel %vm2396, 1, 0
    %v2401 = vcvt.s32.f32 %v2397
    %v2402 = vcvt.s32.f32 %v2398
    %v2403 = vcvt.s32.f32 %v2399
    %v2404 = vcvt.s32.f32 %v2400
    %v2405 = vadd.f32 %v2383, %v2401
    %v2406 = vadd.f32 %v2384, %v2402
    %v2407 = vadd.f32 %v2385, %v2403
    %v2408 = vadd.f32 %v2386, %v2404
    %2409 = vset.pattern.permute.xlu0 16
    %2410 = vperm.xlu0 %2409, %v136
    %v2411 = vpop.permute.xlu0 %2410
    %2412 = vset.pattern.permute.xlu0 16
    %2413 = vperm.xlu0 %2412, %v137
    %v2414 = vpop.permute.xlu0 %2413
    %vm2415 = vcmp.eq.s32.totalorder %v2411, %v44
    %vm2416 = vcmp.eq.s32.totalorder %v2411, %v45
    %vm2417 = vcmp.eq.s32.totalorder %v2414, %v44
    %vm2418 = vcmp.eq.s32.totalorder %v2414, %v45
    %v2419 = vsel %vm2415, 1, 0
    %v2420 = vsel %vm2416, 1, 0
    %v2421 = vsel %vm2417, 1, 0
    %v2422 = vsel %vm2418, 1, 0
    %v2423 = vcvt.s32.f32 %v2419
    %v2424 = vcvt.s32.f32 %v2420
    %v2425 = vcvt.s32.f32 %v2421
    %v2426 = vcvt.s32.f32 %v2422
    %v2427 = vadd.f32 %v2405, %v2423
    %v2428 = vadd.f32 %v2406, %v2424
    %v2429 = vadd.f32 %v2407, %v2425
    %v2430 = vadd.f32 %v2408, %v2426
    %v2432 = vsel %vm160, %v2428, 0
    %v2435 = vsel %vm160, %v2430, 0
    %2437 = vmatprep.subr.mxu0 0.0
    %2438 = vmatpush1.msra.mxu0 %v38
    %2439 = vmatprep.subr.mxu0 0.0
    %2440 = vmatpush1.msra.mxu0 %v37
    %2441 = vmatprep.subr.mxu0 0.0
    %2442 = vmatpush1.msra.mxu0 %v36
    %2443 = vmatprep.subr.mxu0 0.0
    %2444 = vmatpush1.msra.mxu0 %v35
    %2445 = vmatprep.subr.mxu0 0.0
    %2446 = vmatpush1.msra.mxu0 %v34
    %2447 = vmatprep.subr.mxu0 0.0
    %2448 = vmatpush1.msra.mxu0 %v33
    %2449 = vmatprep.subr.mxu0 0.0
    %2450 = vmatpush1.msra.mxu0 %v32
    %2451 = vmatprep.subr.mxu0 0.0
    %2452 = vmatpush1.msra.mxu0 %v31
    %2453 = vmatprep.subr.mxu0 0.0
    %2454 = vmatpush1.msra.mxu0 %v30
    %2455 = vmatprep.subr.mxu0 0.0
    %2456 = vmatpush1.msra.mxu0 %v29
    %2457 = vmatprep.subr.mxu0 0.0
    %2458 = vmatpush1.msra.mxu0 %v28
    %2459 = vmatprep.subr.mxu0 0.0
    %2460 = vmatpush1.msra.mxu0 %v27
    %2461 = vmatprep.subr.mxu0 0.0
    %2462 = vmatpush1.msra.mxu0 %v26
    %2463 = vmatprep.subr.mxu0 0.0
    %2464 = vmatpush1.msra.mxu0 %v25
    %2465 = vmatprep.subr.mxu0 0.0
    %2466 = vmatpush1.msra.mxu0 %v24
    %2467 = vmatprep.subr.mxu0 0.0
    %2468 = vmatpush1.msra.mxu0 %v23
    %2469 = vmatprep.subr.mxu0 0.0
    %2470 = vmatpush2.msra.mxu0 0.0
    %2471 = vmatprep.subr.mxu0 0.0
    %2472 = vmatpush2.msra.mxu0 0.0
    %2473 = vmatprep.subr.mxu0 0.0
    %2474 = vmatpush2.msra.mxu0 0.0
    %2475 = vmatprep.subr.mxu0 0.0
    %2476 = vmatpush2.msra.mxu0 0.0
    %2477 = vmatprep.subr.mxu0 0.0
    %2478 = vmatpush2.msra.mxu0 0.0
    %2479 = vmatprep.subr.mxu0 0.0
    %2480 = vmatpush2.msra.mxu0 0.0
    %2481 = vmatprep.subr.mxu0 0.0
    %2482 = vmatpush2.msra.mxu0 0.0
    %2483 = vmatprep.subr.mxu0 0.0
    %2484 = vmatpush2.msra.mxu0 0.0
    %2485 = vmatprep.subr.mxu0 0.0
    %2486 = vmatpush2.msra.mxu0 0.0
    %2487 = vmatprep.subr.mxu0 0.0
    %2488 = vmatpush2.msra.mxu0 0.0
    %2489 = vmatprep.subr.mxu0 0.0
    %2490 = vmatpush2.msra.mxu0 0.0
    %2491 = vmatprep.subr.mxu0 0.0
    %2492 = vmatpush2.msra.mxu0 0.0
    %2493 = vmatprep.subr.mxu0 0.0
    %2494 = vmatpush2.msra.mxu0 %v169
    %2495 = vmatprep.subr.mxu0 0.0
    %2496 = vmatpush2.msra.mxu0 %v41
    %2497 = vmatprep.subr.mxu0 0.0
    %2498 = vmatpush2.msra.mxu0 %v40
    %2499 = vmatprep.subr.mxu0 0.0
    %2500 = vmatpush2.msra.mxu0 %v39
    %2501 = vmatprep.mubr.f32.mxu0 %v2432
    %2502 = vmatmul.mubr.f32.gmra.mxu0 %v2427
    %v2503 = vpop.f32.mrf.mxu0
    %v2504 = vadd.f32 0.0, %v2503
    %v2505 = vpop.f32.mrf.mxu0
    %2506 = vmatprep.mubr.f32.mxu0 %v2435
    %2507 = vmatmul.mubr.f32.gmra.mxu0 %v2429
    %v2508 = vpop.f32.mrf.mxu0
    %v2509 = vadd.f32 0.0, %v2508
    %v2510 = vpop.f32.mrf.mxu0
    %2511 = vdwg.mxu0
    %v2512 = vmax.f32 %v2323, %v2504
    %v2513 = vmax.f32 %v2324, %v2509
    %2514 = vset.pattern.permute.xlu0 13
    %2515 = vperm.xlu0 %2514, %v21
    %v2516 = vpop.permute.xlu0 %2515
    %2517 = vset.pattern.permute.xlu0 13
    %2518 = vperm.xlu0 %2517, %v22
    %v2519 = vpop.permute.xlu0 %2518
    %vm2520 = vcmp.eq.s32.totalorder %v2516, %v44
    %vm2521 = vcmp.eq.s32.totalorder %v2516, %v45
    %vm2522 = vcmp.eq.s32.totalorder %v2519, %v44
    %vm2523 = vcmp.eq.s32.totalorder %v2519, %v45
    %v2524 = vsel %vm2520, 1, 0
    %v2525 = vsel %vm2521, 1, 0
    %v2526 = vsel %vm2522, 1, 0
    %v2527 = vsel %vm2523, 1, 0
    %v2528 = vcvt.s32.f32 %v2524
    %v2529 = vcvt.s32.f32 %v2525
    %v2530 = vcvt.s32.f32 %v2526
    %v2531 = vcvt.s32.f32 %v2527
    %2532 = vset.pattern.permute.xlu0 14
    %2533 = vperm.xlu0 %2532, %v64
    %v2534 = vpop.permute.xlu0 %2533
    %2535 = vset.pattern.permute.xlu0 14
    %2536 = vperm.xlu0 %2535, %v65
    %v2537 = vpop.permute.xlu0 %2536
    %vm2538 = vcmp.eq.s32.totalorder %v2534, %v44
    %vm2539 = vcmp.eq.s32.totalorder %v2534, %v45
    %vm2540 = vcmp.eq.s32.totalorder %v2537, %v44
    %vm2541 = vcmp.eq.s32.totalorder %v2537, %v45
    %v2542 = vsel %vm2538, 1, 0
    %v2543 = vsel %vm2539, 1, 0
    %v2544 = vsel %vm2540, 1, 0
    %v2545 = vsel %vm2541, 1, 0
    %v2546 = vcvt.s32.f32 %v2542
    %v2547 = vcvt.s32.f32 %v2543
    %v2548 = vcvt.s32.f32 %v2544
    %v2549 = vcvt.s32.f32 %v2545
    %v2550 = vadd.f32 %v2528, %v2546
    %v2551 = vadd.f32 %v2529, %v2547
    %v2552 = vadd.f32 %v2530, %v2548
    %v2553 = vadd.f32 %v2531, %v2549
    %2554 = vset.pattern.permute.xlu0 15
    %2555 = vperm.xlu0 %2554, %v88
    %v2556 = vpop.permute.xlu0 %2555
    %2557 = vset.pattern.permute.xlu0 15
    %2558 = vperm.xlu0 %2557, %v89
    %v2559 = vpop.permute.xlu0 %2558
    %vm2560 = vcmp.eq.s32.totalorder %v2556, %v44
    %vm2561 = vcmp.eq.s32.totalorder %v2556, %v45
    %vm2562 = vcmp.eq.s32.totalorder %v2559, %v44
    %vm2563 = vcmp.eq.s32.totalorder %v2559, %v45
    %v2564 = vsel %vm2560, 1, 0
    %v2565 = vsel %vm2561, 1, 0
    %v2566 = vsel %vm2562, 1, 0
    %v2567 = vsel %vm2563, 1, 0
    %v2568 = vcvt.s32.f32 %v2564
    %v2569 = vcvt.s32.f32 %v2565
    %v2570 = vcvt.s32.f32 %v2566
    %v2571 = vcvt.s32.f32 %v2567
    %v2572 = vadd.f32 %v2550, %v2568
    %v2573 = vadd.f32 %v2551, %v2569
    %v2574 = vadd.f32 %v2552, %v2570
    %v2575 = vadd.f32 %v2553, %v2571
    %2576 = vset.pattern.permute.xlu0 16
    %2577 = vperm.xlu0 %2576, %v112
    %v2578 = vpop.permute.xlu0 %2577
    %2579 = vset.pattern.permute.xlu0 16
    %2580 = vperm.xlu0 %2579, %v113
    %v2581 = vpop.permute.xlu0 %2580
    %vm2582 = vcmp.eq.s32.totalorder %v2578, %v44
    %vm2583 = vcmp.eq.s32.totalorder %v2578, %v45
    %vm2584 = vcmp.eq.s32.totalorder %v2581, %v44
    %vm2585 = vcmp.eq.s32.totalorder %v2581, %v45
    %v2586 = vsel %vm2582, 1, 0
    %v2587 = vsel %vm2583, 1, 0
    %v2588 = vsel %vm2584, 1, 0
    %v2589 = vsel %vm2585, 1, 0
    %v2590 = vcvt.s32.f32 %v2586
    %v2591 = vcvt.s32.f32 %v2587
    %v2592 = vcvt.s32.f32 %v2588
    %v2593 = vcvt.s32.f32 %v2589
    %v2594 = vadd.f32 %v2572, %v2590
    %v2595 = vadd.f32 %v2573, %v2591
    %v2596 = vadd.f32 %v2574, %v2592
    %v2597 = vadd.f32 %v2575, %v2593
    %2598 = vset.pattern.permute.xlu0 17
    %2599 = vperm.xlu0 %2598, %v136
    %v2600 = vpop.permute.xlu0 %2599
    %2601 = vset.pattern.permute.xlu0 17
    %2602 = vperm.xlu0 %2601, %v137
    %v2603 = vpop.permute.xlu0 %2602
    %vm2604 = vcmp.eq.s32.totalorder %v2600, %v44
    %vm2605 = vcmp.eq.s32.totalorder %v2600, %v45
    %vm2606 = vcmp.eq.s32.totalorder %v2603, %v44
    %vm2607 = vcmp.eq.s32.totalorder %v2603, %v45
    %v2608 = vsel %vm2604, 1, 0
    %v2609 = vsel %vm2605, 1, 0
    %v2610 = vsel %vm2606, 1, 0
    %v2611 = vsel %vm2607, 1, 0
    %v2612 = vcvt.s32.f32 %v2608
    %v2613 = vcvt.s32.f32 %v2609
    %v2614 = vcvt.s32.f32 %v2610
    %v2615 = vcvt.s32.f32 %v2611
    %v2616 = vadd.f32 %v2594, %v2612
    %v2617 = vadd.f32 %v2595, %v2613
    %v2618 = vadd.f32 %v2596, %v2614
    %v2619 = vadd.f32 %v2597, %v2615
    %v2621 = vsel %vm160, %v2617, 0
    %v2624 = vsel %vm160, %v2619, 0
    %2626 = vmatprep.subr.mxu0 0.0
    %2627 = vmatpush1.msra.mxu0 %v38
    %2628 = vmatprep.subr.mxu0 0.0
    %2629 = vmatpush1.msra.mxu0 %v37
    %2630 = vmatprep.subr.mxu0 0.0
    %2631 = vmatpush1.msra.mxu0 %v36
    %2632 = vmatprep.subr.mxu0 0.0
    %2633 = vmatpush1.msra.mxu0 %v35
    %2634 = vmatprep.subr.mxu0 0.0
    %2635 = vmatpush1.msra.mxu0 %v34
    %2636 = vmatprep.subr.mxu0 0.0
    %2637 = vmatpush1.msra.mxu0 %v33
    %2638 = vmatprep.subr.mxu0 0.0
    %2639 = vmatpush1.msra.mxu0 %v32
    %2640 = vmatprep.subr.mxu0 0.0
    %2641 = vmatpush1.msra.mxu0 %v31
    %2642 = vmatprep.subr.mxu0 0.0
    %2643 = vmatpush1.msra.mxu0 %v30
    %2644 = vmatprep.subr.mxu0 0.0
    %2645 = vmatpush1.msra.mxu0 %v29
    %2646 = vmatprep.subr.mxu0 0.0
    %2647 = vmatpush1.msra.mxu0 %v28
    %2648 = vmatprep.subr.mxu0 0.0
    %2649 = vmatpush1.msra.mxu0 %v27
    %2650 = vmatprep.subr.mxu0 0.0
    %2651 = vmatpush1.msra.mxu0 %v26
    %2652 = vmatprep.subr.mxu0 0.0
    %2653 = vmatpush1.msra.mxu0 %v25
    %2654 = vmatprep.subr.mxu0 0.0
    %2655 = vmatpush1.msra.mxu0 %v24
    %2656 = vmatprep.subr.mxu0 0.0
    %2657 = vmatpush1.msra.mxu0 %v23
    %2658 = vmatprep.subr.mxu0 0.0
    %2659 = vmatpush2.msra.mxu0 0.0
    %2660 = vmatprep.subr.mxu0 0.0
    %2661 = vmatpush2.msra.mxu0 0.0
    %2662 = vmatprep.subr.mxu0 0.0
    %2663 = vmatpush2.msra.mxu0 0.0
    %2664 = vmatprep.subr.mxu0 0.0
    %2665 = vmatpush2.msra.mxu0 0.0
    %2666 = vmatprep.subr.mxu0 0.0
    %2667 = vmatpush2.msra.mxu0 0.0
    %2668 = vmatprep.subr.mxu0 0.0
    %2669 = vmatpush2.msra.mxu0 0.0
    %2670 = vmatprep.subr.mxu0 0.0
    %2671 = vmatpush2.msra.mxu0 0.0
    %2672 = vmatprep.subr.mxu0 0.0
    %2673 = vmatpush2.msra.mxu0 0.0
    %2674 = vmatprep.subr.mxu0 0.0
    %2675 = vmatpush2.msra.mxu0 0.0
    %2676 = vmatprep.subr.mxu0 0.0
    %2677 = vmatpush2.msra.mxu0 0.0
    %2678 = vmatprep.subr.mxu0 0.0
    %2679 = vmatpush2.msra.mxu0 0.0
    %2680 = vmatprep.subr.mxu0 0.0
    %2681 = vmatpush2.msra.mxu0 0.0
    %2682 = vmatprep.subr.mxu0 0.0
    %2683 = vmatpush2.msra.mxu0 %v169
    %2684 = vmatprep.subr.mxu0 0.0
    %2685 = vmatpush2.msra.mxu0 %v41
    %2686 = vmatprep.subr.mxu0 0.0
    %2687 = vmatpush2.msra.mxu0 %v40
    %2688 = vmatprep.subr.mxu0 0.0
    %2689 = vmatpush2.msra.mxu0 %v39
    %2690 = vmatprep.mubr.f32.mxu0 %v2621
    %2691 = vmatmul.mubr.f32.gmra.mxu0 %v2616
    %v2692 = vpop.f32.mrf.mxu0
    %v2693 = vadd.f32 0.0, %v2692
    %v2694 = vpop.f32.mrf.mxu0
    %2695 = vmatprep.mubr.f32.mxu0 %v2624
    %2696 = vmatmul.mubr.f32.gmra.mxu0 %v2618
    %v2697 = vpop.f32.mrf.mxu0
    %v2698 = vadd.f32 0.0, %v2697
    %v2699 = vpop.f32.mrf.mxu0
    %2700 = vdwg.mxu0
    %v2701 = vmax.f32 %v2512, %v2693
    %v2702 = vmax.f32 %v2513, %v2698
    %v2703 = vld [vmem:[%s2] sm:$0x1]
    %v2705 = vlaneseq
    %v2706 = vshrl.u32 %v2705, 7
    %v2707 = vsub.s32 0, %v2706
    %v2708 = vrot.slane %v2703, %v2707
    %v2710 = vadd.f32 %v2701, %v2708
    %v2711 = vadd.f32 %v2702, %v2708
    %v2712 = vmax.f32 %v2710, 0.0
    %v2713 = vmax.f32 %v2711, 0.0
    %v2714 = vld [vmem:[%s3] sm:$0xff]
    %v2715 = vld [vmem:[%s3 + $0x8] sm:$0xff]
    %v2716 = vld [vmem:[%s3 + $0x10] sm:$0xff]
    %v2717 = vld [vmem:[%s3 + $0x18] sm:$0xff]
    %v2718 = vld [vmem:[%s4] sm:$0x1]
    %v2720 = vlaneseq
    %v2721 = vshrl.u32 %v2720, 7
    %v2722 = vsub.s32 0, %v2721
    %v2723 = vrot.slane %v2718, %v2722
    %vm2725 = vcmask 261120
    %v2727 = vsel %vm2725, %v2712, 0
    %v2730 = vsel %vm2725, %v2713, 0
    %2732 = vmatprep.subr.mxu0 0.0
    %2733 = vmatpush1.msra.mxu0 0.0
    %2734 = vmatprep.subr.mxu0 0.0
    %2735 = vmatpush1.msra.mxu0 0.0
    %2736 = vmatprep.subr.mxu0 0.0
    %2737 = vmatpush1.msra.mxu0 0.0
    %2738 = vmatprep.subr.mxu0 0.0
    %2739 = vmatpush1.msra.mxu0 0.0
    %2740 = vmatprep.subr.mxu0 0.0
    %2741 = vmatpush1.msra.mxu0 0.0
    %2742 = vmatprep.subr.mxu0 0.0
    %2743 = vmatpush1.msra.mxu0 0.0
    %2744 = vmatprep.subr.mxu0 0.0
    %2745 = vmatpush1.msra.mxu0 0.0
    %2746 = vmatprep.subr.mxu0 0.0
    %2747 = vmatpush1.msra.mxu0 0.0
    %2748 = vmatprep.subr.mxu0 0.0
    %2749 = vmatpush1.msra.mxu0 0.0
    %2750 = vmatprep.subr.mxu0 0.0
    %2751 = vmatpush1.msra.mxu0 0.0
    %2752 = vmatprep.subr.mxu0 0.0
    %2753 = vmatpush1.msra.mxu0 0.0
    %2754 = vmatprep.subr.mxu0 0.0
    %2755 = vmatpush1.msra.mxu0 0.0
    %2756 = vmatprep.subr.mxu0 0.0
    %2757 = vmatpush1.msra.mxu0 %v2717
    %2758 = vmatprep.subr.mxu0 0.0
    %2759 = vmatpush1.msra.mxu0 %v2716
    %2760 = vmatprep.subr.mxu0 0.0
    %2761 = vmatpush1.msra.mxu0 %v2715
    %2762 = vmatprep.subr.mxu0 0.0
    %2763 = vmatpush1.msra.mxu0 %v2714
    %2764 = vmatprep.subr.mxu0 0.0
    %2765 = vmatpush2.msra.mxu0 0.0
    %2766 = vmatprep.subr.mxu0 0.0
    %2767 = vmatpush2.msra.mxu0 0.0
    %2768 = vmatprep.subr.mxu0 0.0
    %2769 = vmatpush2.msra.mxu0 0.0
    %2770 = vmatprep.subr.mxu0 0.0
    %2771 = vmatpush2.msra.mxu0 0.0
    %2772 = vmatprep.subr.mxu0 0.0
    %2773 = vmatpush2.msra.mxu0 0.0
    %2774 = vmatprep.subr.mxu0 0.0
    %2775 = vmatpush2.msra.mxu0 0.0
    %2776 = vmatprep.subr.mxu0 0.0
    %2777 = vmatpush2.msra.mxu0 0.0
    %2778 = vmatprep.subr.mxu0 0.0
    %2779 = vmatpush2.msra.mxu0 0.0
    %2780 = vmatprep.subr.mxu0 0.0
    %2781 = vmatpush2.msra.mxu0 0.0
    %2782 = vmatprep.subr.mxu0 0.0
    %2783 = vmatpush2.msra.mxu0 0.0
    %2784 = vmatprep.subr.mxu0 0.0
    %2785 = vmatpush2.msra.mxu0 0.0
    %2786 = vmatprep.subr.mxu0 0.0
    %2787 = vmatpush2.msra.mxu0 0.0
    %2788 = vmatprep.subr.mxu0 0.0
    %2789 = vmatpush2.msra.mxu0 0.0
    %2790 = vmatprep.subr.mxu0 0.0
    %2791 = vmatpush2.msra.mxu0 0.0
    %2792 = vmatprep.subr.mxu0 0.0
    %2793 = vmatpush2.msra.mxu0 0.0
    %2794 = vmatprep.subr.mxu0 0.0
    %2795 = vmatpush2.msra.mxu0 0.0
    %2796 = vmatprep.mubr.f32.mxu0 0.0
    %2797 = vmatmul.mubr.f32.gmra.mxu0 %v2727
    %v2798 = vpop.f32.mrf.mxu0
    %v2799 = vadd.f32 %v2723, %v2798
    %v2800 = vpop.f32.mrf.mxu0
    %2801 = vmatprep.mubr.f32.mxu0 0.0
    %2802 = vmatmul.mubr.f32.gmra.mxu0 %v2730
    %v2803 = vpop.f32.mrf.mxu0
    %v2804 = vadd.f32 %v2723, %v2803
    %v2805 = vpop.f32.mrf.mxu0
    %2806 = vdwg.mxu0
    %v2807 = vxor.u32 %v2799, 2147483648
    %v2808 = vxor.u32 %v2804, 2147483648
    %v2809 = vmul.f32 %v2807, 1.442695
    %v2810 = vpow.pop %v2809
    %v2811 = vmul.f32 %v2808, 1.442695
    %v2812 = vpow.pop %v2811
    %v2813 = vadd.f32 %v2810, 1.0
    %v2814 = vadd.f32 %v2812, 1.0
    %v2815 = vrcp.pop %v2813
    %v2816 = vmul.f32 1.0, %v2815
    %v2817 = vrcp.pop %v2814
    %v2818 = vmul.f32 1.0, %v2817
    %v2819 = vmax.f32 %v2799, 0.0
    %v2820 = vmax.f32 %v2804, 0.0
    %2821 = vrot.lane.b32.xlu0 %v2712, 32
    %v2822 = vpop.permute.xlu0 %2821
    %2823 = vrot.lane.b32.xlu0 %v2713, 32
    %v2824 = vpop.permute.xlu0 %2823
    %v2827 = vsub.f32 %v2819, %v2822
    %v2828 = vsub.f32 %v2820, %v2824
    %2831 = vrot.lane.b32.xlu0 %v2827, 96
    %v2832 = vpop.permute.xlu0 %2831
    %2833 = vrot.lane.b32.xlu0 %v2828, 96
    %v2834 = vpop.permute.xlu0 %2833
    %v2837 = vmul.f32 %v2816, %v2832
    %v2838 = vmul.f32 %v2818, %v2834
    %v2839 = vadd.f32 %v2712, %v2837
    %v2840 = vadd.f32 %v2713, %v2838
    %2841 = vst.msk [vmem:[#allocation2] sm:$0xff] %vm2725, %v2839
    %2842 = vst.msk [vmem:[#allocation2 + $0x8] sm:$0xff] %vm2725, %v2840
    // Predicated region
    $region22: #{tpu_custom_call.1} parent=1 // pred_check
      _
    $region23: #{tpu_custom_call.1} parent=1 // pred_check_branch
      %2844 = sbr.rel (0) target = $region25
    $region24: #{tpu_custom_call.1} parent=1 // pred_region
      %s2846 = ssub.s32 256, 256
      %2847 = vsyncadd [#allocation3], %s2846
      %s2848 = sshll.u32 [#allocation2], 4
      %s2849 = int_to_ptr.vmem [resolvable:$true] %s2848
      %2854 = dma.vmem_to_hbm [thread:$0]  %s2849, 256, %s5, [#allocation3], 128, 128, 8
    $region25: #{tpu_custom_call.1} parent=1 // pred_fallthru
      _
    // Predicated region
    $region26: #{tpu_custom_call.1} parent=1 // pred_check
      _
    $region27: #{tpu_custom_call.1} parent=1 // pred_check_branch
      %2856 = sbr.rel (0) target = $region29
    $region28: #{tpu_custom_call.1} parent=1 // pred_region
      %2857 = dma.done [#allocation3], 256
    $region29: #{tpu_custom_call.1} parent=1 // pred_fallthru
      _
    %2858 = vsyncpa [#allocation3], 1

</llo_original>
